<compile_context>
chip_gen: v7x
topology: tpu7x:2x2x1
jax: 0.10.0
libtpu: 0.0.40
codegen_flags: <defaults>
</compile_context>

<pallas_src>
import math

import jax
import jax.numpy as jnp
from jax.experimental import pallas as pl

# ----------------------------- config ---------------------------------------
HIDDEN = 32          # config.hidden_size
HEADS = 4            # config.transformer['num_heads']
DH = HIDDEN // HEADS
MLP_DIM = 64         # config.transformer['mlp_dim']
LAYERS = 2           # config.transformer['decoder_num_layers']
B = 2
N_Q = 8              # img_features sequence length (queries)
N_KV = 16            # hidden_states sequence length (keys / values)
EPS = 1e-6

ATTN_SCALE = 1.0 / math.sqrt(DH)

# Packed bias / LayerNorm-parameter blob layout: one 64-lane row per vector.
VEC_W = 64
VROWS_PER_LAYER = 8          # bq, bkv, b1, b2, ln1g, ln1b, ln2g, ln2b
(VROW_BQ, VROW_BKV, VROW_B1, VROW_B2,
 VROW_LN1G, VROW_LN1B, VROW_LN2G, VROW_LN2B) = range(8)
VROWS_TOTAL = LAYERS * VROWS_PER_LAYER + 2   # + final decoder_norm gamma/beta

# ----------------------------- in-kernel math --------------------------------
_SQRT1_2 = 1.0 / math.sqrt(2.0)


def _erf(x):
    # Abramowitz & Stegun 7.1.26 polynomial approximation (f32-accurate).
    a1, a2, a3, a4, a5 = 0.254829592, -0.284496736, 1.421413741, -1.453152027, 1.061405429
    p = 0.3275911
    sign = jnp.where(x >= 0.0, 1.0, -1.0)
    ax = jnp.abs(x)
    t = 1.0 / (1.0 + p * ax)
    poly = ((((a5 * t + a4) * t + a3) * t + a2) * t + a1) * t
    return sign * (1.0 - poly * jnp.exp(-ax * ax))


def _gelu(x):
    return 0.5 * x * (1.0 + _erf(x * _SQRT1_2))


def _layernorm(x, g, b):
    mu = jnp.mean(x, axis=-1, keepdims=True)
    var = jnp.mean((x - mu) ** 2, axis=-1, keepdims=True)
    return (x - mu) * jax.lax.rsqrt(var + EPS) * g + b


# ----------------------------- kernel ----------------------------------------
def decoder_kernel(hs_ref, f_ref, wa_ref, wb_ref, vec_ref, out_ref):
    # hs_ref : (B*N_KV, HIDDEN)          keys / values source (batch-flattened)
    # f_ref  : (B*N_Q,  HIDDEN)          queries source      (batch-flattened)
    # wa_ref : (LAYERS, HIDDEN+MLP_DIM, HIDDEN)   rows [0:32]=Wq*scale, [32:96]=W2
    # wb_ref : (2*LAYERS, HIDDEN, 2*HIDDEN)       [2l]=Wkv=[Wk|Wv], [2l+1]=W1
    # vec_ref: (VROWS_TOTAL, VEC_W)               biases / LN params, zero-padded
    hs = hs_ref[...]
    f = f_ref[...]
    vec = vec_ref[...]

    for l in range(LAYERS):                      # static unroll over layers
        wa = wa_ref[l]                           # (96, 32)
        wq = wa[:HIDDEN, :]                      # (32, 32)  pre-scaled by 1/sqrt(DH)
        w2 = wa[HIDDEN:, :]                      # (64, 32)
        wkv = wb_ref[2 * l]                      # (32, 64) = [Wk | Wv]
        w1 = wb_ref[2 * l + 1]                   # (32, 64)

        r = l * VROWS_PER_LAYER
        bq = vec[r + VROW_BQ, :HIDDEN]           # pre-scaled by 1/sqrt(DH)
        bkv = vec[r + VROW_BKV, :]
        b1 = vec[r + VROW_B1, :]
        b2 = vec[r + VROW_B2, :HIDDEN]
        g1 = vec[r + VROW_LN1G, :HIDDEN]
        be1 = vec[r + VROW_LN1B, :HIDDEN]
        g2 = vec[r + VROW_LN2G, :HIDDEN]
        be2 = vec[r + VROW_LN2B, :HIDDEN]

        # ---- attention_norm (applied to img_features / queries only) ----
        fn = _layernorm(f, g1, be1)

        # ---- projections: both batch elements at once, K/V fused ----
        q = jnp.dot(fn, wq, preferred_element_type=jnp.float32) + bq      # (B*N_Q, 32)
        kv = jnp.dot(hs, wkv, preferred_element_type=jnp.float32) + bkv   # (B*N_KV, 64)

        # ---- split heads once per layer (head axis leading) ----
        q3a = jnp.stack([q[:, h * DH:(h + 1) * DH]
                         for h in range(HEADS)], axis=0)                  # (H, B*N_Q, DH)
        k3a = jnp.stack([kv[:, h * DH:(h + 1) * DH]
                         for h in range(HEADS)], axis=0)                  # (H, B*N_KV, DH)
        v3a = jnp.stack([kv[:, HIDDEN + h * DH:HIDDEN + (h + 1) * DH]
                         for h in range(HEADS)], axis=0)                  # (H, B*N_KV, DH)

        # ---- per-batch attention, heads batched in one einsum / softmax ----
        ctx_parts = []
        for b in range(B):                        # static unroll (B == 2)
            q3 = q3a[:, b * N_Q:(b + 1) * N_Q, :]        # (H, N_Q, DH)
            k3 = k3a[:, b * N_KV:(b + 1) * N_KV, :]      # (H, N_KV, DH)
            v3 = v3a[:, b * N_KV:(b + 1) * N_KV, :]      # (H, N_KV, DH)

            s = jnp.einsum("hqd,hkd->hqk", q3, k3,
                           preferred_element_type=jnp.float32)            # (H, N_Q, N_KV)
            s = s - jnp.max(s, axis=-1, keepdims=True)
            e = jnp.exp(s)
            p = e * pl.reciprocal(jnp.sum(e, axis=-1, keepdims=True), approx=True)
            c3 = jnp.einsum("hqk,hkd->hqd", p, v3,
                            preferred_element_type=jnp.float32)           # (H, N_Q, DH)
            ctx_parts.append(
                jnp.concatenate([c3[h] for h in range(HEADS)], axis=-1))  # (N_Q, HIDDEN)
        ctx = jnp.concatenate(ctx_parts, axis=0)                          # (B*N_Q, HIDDEN)
        # NOTE: torch code discards the attention out-projection.

        # ---- residual 1 ----
        x = ctx + f

        # ---- ffn_norm + Mlp (exact gelu, dropout = identity) ----
        xn = _layernorm(x, g2, be2)
        hmid = _gelu(jnp.dot(xn, w1, preferred_element_type=jnp.float32) + b1)
        mlp = jnp.dot(hmid, w2, preferred_element_type=jnp.float32) + b2

        # ---- residual 2 ----
        f = mlp + x

    # ---- final decoder_norm ----
    dng = vec[LAYERS * VROWS_PER_LAYER + 0, :HIDDEN]
    dnb = vec[LAYERS * VROWS_PER_LAYER + 1, :HIDDEN]
    out_ref[...] = _layernorm(f, dng, dnb)


# ----------------------------- host-side packing ------------------------------
def _row(v):
    """Place a (width,) vector into a zero-padded (VEC_W,) row."""
    return jnp.zeros((VEC_W,), jnp.float32).at[:v.shape[0]].set(v)


def pack_params(P):
    """One-time packing of the natural (torch-like) params into 3 DMA blobs."""
    # Blob A: Wq (scaled) and W2 stacked along the input-row (sublane) axis.
    wa = jnp.concatenate([P["wq"] * ATTN_SCALE, P["w2"]], axis=1)  # (L, 96, 32)

    # Blob B: [Wk|Wv] and W1 interleaved on a flat leading axis.
    # (relies on MLP_DIM == 2*HIDDEN so both chunks are (HIDDEN, 64))
    assert MLP_DIM == 2 * HIDDEN
    wkv = jnp.concatenate([P["wk"], P["wv"]], axis=-1)             # (L, 32, 64)
    wb = jnp.stack([wkv, P["w1"]], axis=1).reshape(2 * LAYERS, HIDDEN, 2 * HIDDEN)

    # Blob C: all biases + LayerNorm params, one zero-padded 64-lane row each.
    rows = []
    for l in range(LAYERS):
        rows += [
            _row(P["bq"][l] * ATTN_SCALE),
            _row(jnp.concatenate([P["bk"][l], P["bv"][l]])),
            _row(P["b1"][l]),
            _row(P["b2"][l]),
            _row(P["ln1g"][l]), _row(P["ln1b"][l]),
            _row(P["ln2g"][l]), _row(P["ln2b"][l]),
        ]
    rows += [_row(P["dng"]), _row(P["dnb"])]
    vec = jnp.stack(rows, axis=0)                                  # (VROWS_TOTAL, VEC_W)
    assert vec.shape == (VROWS_TOTAL, VEC_W)
    return wa, wb, vec


# ----------------------------- wrapper ----------------------------------------
@jax.jit
def decoder_forward(hidden_states, img_features, wa, wb, vec):
    """Pallas implementation of Decoder.forward (vis=False -> weights dropped)."""
    hs_flat = hidden_states.reshape(B * N_KV, HIDDEN)
    f_flat = img_features.reshape(B * N_Q, HIDDEN)
    out = pl.pallas_call(
        decoder_kernel,
        out_shape=jax.ShapeDtypeStruct((B * N_Q, HIDDEN), jnp.float32),
    )(hs_flat, f_flat, wa, wb, vec)
    return out.reshape(B, N_Q, HIDDEN)


# ----------------------------- pure-JAX reference ------------------------------
def decoder_reference(hs, f, P):
    def ln(x, g, b):
        mu = jnp.mean(x, -1, keepdims=True)
        var = jnp.mean((x - mu) ** 2, -1, keepdims=True)
        return (x - mu) / jnp.sqrt(var + EPS) * g + b

    for l in range(LAYERS):
        fn = ln(f, P["ln1g"][l], P["ln1b"][l])
        q = fn @ P["wq"][l] + P["bq"][l]
        k = hs @ P["wk"][l] + P["bk"][l]
        v = hs @ P["wv"][l] + P["bv"][l]
        qh = q.reshape(B, N_Q, HEADS, DH).transpose(0, 2, 1, 3)
        kh = k.reshape(B, N_KV, HEADS, DH).transpose(0, 2, 1, 3)
        vh = v.reshape(B, N_KV, HEADS, DH).transpose(0, 2, 1, 3)
        s = jnp.einsum("bhqd,bhkd->bhqk", qh, kh) / math.sqrt(DH)
        p_attn = jax.nn.softmax(s, -1)
        ctx = jnp.einsum("bhqk,bhkd->bhqd", p_attn, vh)
        ctx = ctx.transpose(0, 2, 1, 3).reshape(B, N_Q, HIDDEN)
        x = ctx + f
        xn = ln(x, P["ln2g"][l], P["ln2b"][l])
        mlp = (jax.nn.gelu(xn @ P["w1"][l] + P["b1"][l], approximate=False)
               @ P["w2"][l] + P["b2"][l])
        f = mlp + x
    return ln(f, P["dng"], P["dnb"])


# ----------------------------- params / main ----------------------------------
def make_params(key):
    ks = jax.random.split(key, 16)
    n = lambda k, shape, s: s * jax.random.normal(k, shape, jnp.float32)
    return {
        # LayerNorm params (torch default: weight=1, bias=0)
        "ln1g": jnp.ones((LAYERS, HIDDEN), jnp.float32),
        "ln1b": jnp.zeros((LAYERS, HIDDEN), jnp.float32),
        "ln2g": jnp.ones((LAYERS, HIDDEN), jnp.float32),
        "ln2b": jnp.zeros((LAYERS, HIDDEN), jnp.float32),
        "dng": jnp.ones((HIDDEN,), jnp.float32),
        "dnb": jnp.zeros((HIDDEN,), jnp.float32),
        # Attention projections (stored as (in, out))
        "wq": n(ks[0], (LAYERS, HIDDEN, HIDDEN), 0.1),
        "bq": n(ks[1], (LAYERS, HIDDEN), 0.02),
        "wk": n(ks[2], (LAYERS, HIDDEN, HIDDEN), 0.1),
        "bk": n(ks[3], (LAYERS, HIDDEN), 0.02),
        "wv": n(ks[4], (LAYERS, HIDDEN, HIDDEN), 0.1),
        "bv": n(ks[5], (LAYERS, HIDDEN), 0.02),
        # Mlp
        "w1": n(ks[6], (LAYERS, HIDDEN, MLP_DIM), 0.1),
        "b1": n(ks[7], (LAYERS, MLP_DIM), 1e-6),
        "w2": n(ks[8], (LAYERS, MLP_DIM, HIDDEN), 0.1),
        "b2": n(ks[9], (LAYERS, HIDDEN), 1e-6),
    }


if __name__ == "__main__":
    key = jax.random.PRNGKey(0)
    k_hs, k_f, k_p = jax.random.split(key, 3)

    hidden_states = jax.random.normal(k_hs, (B, N_KV, HIDDEN), jnp.float32)
    img_features = jax.random.normal(k_f, (B, N_Q, HIDDEN), jnp.float32)
    P = make_params(k_p)

    wa, wb, vec = pack_params(P)          # one-time host-side weight packing

    encoded = decoder_forward(hidden_states, img_features, wa, wb, vec)
    encoded = jax.block_until_ready(encoded)

    ref = decoder_reference(hidden_states, img_features, P)
    assert encoded.shape == (B, N_Q, HIDDEN)
    # Tolerance left at 1e-2 because the softmax denominator uses the EUP
    # approximate reciprocal (per perf feedback); observed error is far smaller.
    assert jnp.max(jnp.abs(encoded - ref)) < 1e-2, "mismatch vs pure-JAX reference"

    print("KERNEL_OK")
</pallas_src>

<mosaic_0001>
module attributes {stable_mosaic.version = 11 : i64} {
  func.func @decoder_kernel(%arg0: memref<32x32xf32, #tpu.memory_space<vmem>>, %arg1: memref<16x32xf32, #tpu.memory_space<vmem>>, %arg2: memref<2x96x32xf32, #tpu.memory_space<vmem>>, %arg3: memref<4x32x64xf32, #tpu.memory_space<vmem>>, %arg4: memref<18x64xf32, #tpu.memory_space<vmem>>, %arg5: memref<16x32xf32, #tpu.memory_space<vmem>>) attributes {dimension_semantics = [], scalar_prefetch = 0 : i64, scratch_operands = 0 : i64, tpu.core_type = #tpu.core_type<tc>} {
    %c0 = arith.constant 0 : index
    %c0_0 = arith.constant 0 : index
    %0 = vector.load %arg0[%c0, %c0_0] : memref<32x32xf32, #tpu.memory_space<vmem>>, vector<32x32xf32>
    %c0_1 = arith.constant 0 : index
    %c0_2 = arith.constant 0 : index
    %1 = vector.load %arg1[%c0_1, %c0_2] : memref<16x32xf32, #tpu.memory_space<vmem>>, vector<16x32xf32>
    %c0_3 = arith.constant 0 : index
    %c0_4 = arith.constant 0 : index
    %2 = vector.load %arg4[%c0_3, %c0_4] : memref<18x64xf32, #tpu.memory_space<vmem>>, vector<18x64xf32>
    %c0_5 = arith.constant 0 : index
    %c0_6 = arith.constant 0 : index
    %c0_7 = arith.constant 0 : index
    %3 = vector.load %arg2[%c0_5, %c0_6, %c0_7] : memref<2x96x32xf32, #tpu.memory_space<vmem>>, vector<1x96x32xf32>
    %4 = vector.shape_cast %3 : vector<1x96x32xf32> to vector<96x32xf32>
    %5 = vector.extract_strided_slice %4 {offsets = [0, 0], sizes = [32, 32], strides = [1, 1]} : vector<96x32xf32> to vector<32x32xf32>
    %6 = vector.extract_strided_slice %4 {offsets = [32, 0], sizes = [64, 32], strides = [1, 1]} : vector<96x32xf32> to vector<64x32xf32>
    %c0_8 = arith.constant 0 : index
    %c0_9 = arith.constant 0 : index
    %c0_10 = arith.constant 0 : index
    %7 = vector.load %arg3[%c0_8, %c0_9, %c0_10] : memref<4x32x64xf32, #tpu.memory_space<vmem>>, vector<1x32x64xf32>
    %8 = vector.shape_cast %7 : vector<1x32x64xf32> to vector<32x64xf32>
    %c1 = arith.constant 1 : index
    %c0_11 = arith.constant 0 : index
    %c0_12 = arith.constant 0 : index
    %9 = vector.load %arg3[%c1, %c0_11, %c0_12] : memref<4x32x64xf32, #tpu.memory_space<vmem>>, vector<1x32x64xf32>
    %10 = vector.shape_cast %9 : vector<1x32x64xf32> to vector<32x64xf32>
    %11 = vector.extract_strided_slice %2 {offsets = [0, 0], sizes = [1, 32], strides = [1, 1]} : vector<18x64xf32> to vector<1x32xf32>
    %12 = vector.shape_cast %11 : vector<1x32xf32> to vector<32xf32>
    %13 = vector.extract_strided_slice %2 {offsets = [1, 0], sizes = [1, 64], strides = [1, 1]} : vector<18x64xf32> to vector<1x64xf32>
    %14 = vector.shape_cast %13 : vector<1x64xf32> to vector<64xf32>
    %15 = vector.extract_strided_slice %2 {offsets = [2, 0], sizes = [1, 64], strides = [1, 1]} : vector<18x64xf32> to vector<1x64xf32>
    %16 = vector.shape_cast %15 : vector<1x64xf32> to vector<64xf32>
    %17 = vector.extract_strided_slice %2 {offsets = [3, 0], sizes = [1, 32], strides = [1, 1]} : vector<18x64xf32> to vector<1x32xf32>
    %18 = vector.shape_cast %17 : vector<1x32xf32> to vector<32xf32>
    %19 = vector.extract_strided_slice %2 {offsets = [4, 0], sizes = [1, 32], strides = [1, 1]} : vector<18x64xf32> to vector<1x32xf32>
    %20 = vector.shape_cast %19 : vector<1x32xf32> to vector<32xf32>
    %21 = vector.extract_strided_slice %2 {offsets = [5, 0], sizes = [1, 32], strides = [1, 1]} : vector<18x64xf32> to vector<1x32xf32>
    %22 = vector.shape_cast %21 : vector<1x32xf32> to vector<32xf32>
    %23 = vector.extract_strided_slice %2 {offsets = [6, 0], sizes = [1, 32], strides = [1, 1]} : vector<18x64xf32> to vector<1x32xf32>
    %24 = vector.shape_cast %23 : vector<1x32xf32> to vector<32xf32>
    %25 = vector.extract_strided_slice %2 {offsets = [7, 0], sizes = [1, 32], strides = [1, 1]} : vector<18x64xf32> to vector<1x32xf32>
    %26 = vector.shape_cast %25 : vector<1x32xf32> to vector<32xf32>
    %cst = arith.constant dense<0.000000e+00> : vector<16xf32>
    %27 = vector.multi_reduction <add>, %1, %cst [1] : vector<16x32xf32> to vector<16xf32>
    %28 = vector.shape_cast %27 : vector<16xf32> to vector<16x1xf32>
    %cst_13 = arith.constant 3.200000e+01 : f32
    %29 = vector.broadcast %cst_13 : f32 to vector<16x1xf32>
    %30 = arith.divf %28, %29 : vector<16x1xf32>
    %31 = vector.broadcast %30 : vector<16x1xf32> to vector<16x32xf32>
    %32 = arith.subf %1, %31 : vector<16x32xf32>
    %33 = arith.mulf %32, %32 : vector<16x32xf32>
    %cst_14 = arith.constant dense<0.000000e+00> : vector<16xf32>
    %34 = vector.multi_reduction <add>, %33, %cst_14 [1] : vector<16x32xf32> to vector<16xf32>
    %35 = vector.shape_cast %34 : vector<16xf32> to vector<16x1xf32>
    %cst_15 = arith.constant 3.200000e+01 : f32
    %36 = vector.broadcast %cst_15 : f32 to vector<16x1xf32>
    %37 = arith.divf %35, %36 : vector<16x1xf32>
    %38 = vector.broadcast %30 : vector<16x1xf32> to vector<16x32xf32>
    %39 = arith.subf %1, %38 : vector<16x32xf32>
    %cst_16 = arith.constant 9.99999997E-7 : f32
    %40 = vector.broadcast %cst_16 : f32 to vector<16x1xf32>
    %41 = arith.addf %37, %40 : vector<16x1xf32>
    %42 = math.rsqrt %41 : vector<16x1xf32>
    %43 = vector.broadcast %42 : vector<16x1xf32> to vector<16x32xf32>
    %44 = arith.mulf %39, %43 : vector<16x32xf32>
    %45 = vector.shape_cast %20 : vector<32xf32> to vector<1x32xf32>
    %46 = vector.broadcast %45 : vector<1x32xf32> to vector<16x32xf32>
    %47 = arith.mulf %44, %46 : vector<16x32xf32>
    %48 = vector.shape_cast %22 : vector<32xf32> to vector<1x32xf32>
    %49 = vector.broadcast %48 : vector<1x32xf32> to vector<16x32xf32>
    %50 = arith.addf %47, %49 : vector<16x32xf32>
    %cst_17 = arith.constant dense<0.000000e+00> : vector<16x32xf32>
    %51 = tpu.matmul %50, %5, %cst_17 {dimension_numbers = #tpu.dot_dimension_numbers<[1], [0], [0], [1], [0, 0, 1, 1], [], []>} : vector<16x32xf32>, vector<32x32xf32>, vector<16x32xf32> -> vector<16x32xf32>
    %52 = vector.shape_cast %12 : vector<32xf32> to vector<1x32xf32>
    %53 = vector.broadcast %52 : vector<1x32xf32> to vector<16x32xf32>
    %54 = arith.addf %51, %53 : vector<16x32xf32>
    %cst_18 = arith.constant dense<0.000000e+00> : vector<32x64xf32>
    %55 = tpu.matmul %0, %8, %cst_18 {dimension_numbers = #tpu.dot_dimension_numbers<[1], [0], [0], [1], [0, 0, 1, 1], [], []>} : vector<32x32xf32>, vector<32x64xf32>, vector<32x64xf32> -> vector<32x64xf32>
    %56 = vector.shape_cast %14 : vector<64xf32> to vector<1x64xf32>
    %57 = vector.broadcast %56 : vector<1x64xf32> to vector<32x64xf32>
    %58 = arith.addf %55, %57 : vector<32x64xf32>
    %59 = vector.extract_strided_slice %54 {offsets = [0, 0], sizes = [16, 8], strides = [1, 1]} : vector<16x32xf32> to vector<16x8xf32>
    %60 = vector.extract_strided_slice %54 {offsets = [0, 8], sizes = [16, 8], strides = [1, 1]} : vector<16x32xf32> to vector<16x8xf32>
    %61 = vector.extract_strided_slice %54 {offsets = [0, 16], sizes = [16, 8], strides = [1, 1]} : vector<16x32xf32> to vector<16x8xf32>
    %62 = vector.extract_strided_slice %54 {offsets = [0, 24], sizes = [16, 8], strides = [1, 1]} : vector<16x32xf32> to vector<16x8xf32>
    %63 = vector.shape_cast %59 : vector<16x8xf32> to vector<1x16x8xf32>
    %64 = vector.shape_cast %60 : vector<16x8xf32> to vector<1x16x8xf32>
    %65 = vector.shape_cast %61 : vector<16x8xf32> to vector<1x16x8xf32>
    %66 = vector.shape_cast %62 : vector<16x8xf32> to vector<1x16x8xf32>
    %67 = tpu.concatenate %63, %64, %65, %66 in 0 : vector<1x16x8xf32>, vector<1x16x8xf32>, vector<1x16x8xf32>, vector<1x16x8xf32> -> vector<4x16x8xf32>
    %68 = vector.extract_strided_slice %58 {offsets = [0, 0], sizes = [32, 8], strides = [1, 1]} : vector<32x64xf32> to vector<32x8xf32>
    %69 = vector.extract_strided_slice %58 {offsets = [0, 8], sizes = [32, 8], strides = [1, 1]} : vector<32x64xf32> to vector<32x8xf32>
    %70 = vector.extract_strided_slice %58 {offsets = [0, 16], sizes = [32, 8], strides = [1, 1]} : vector<32x64xf32> to vector<32x8xf32>
    %71 = vector.extract_strided_slice %58 {offsets = [0, 24], sizes = [32, 8], strides = [1, 1]} : vector<32x64xf32> to vector<32x8xf32>
    %72 = vector.shape_cast %68 : vector<32x8xf32> to vector<1x32x8xf32>
    %73 = vector.shape_cast %69 : vector<32x8xf32> to vector<1x32x8xf32>
    %74 = vector.shape_cast %70 : vector<32x8xf32> to vector<1x32x8xf32>
    %75 = vector.shape_cast %71 : vector<32x8xf32> to vector<1x32x8xf32>
    %76 = tpu.concatenate %72, %73, %74, %75 in 0 : vector<1x32x8xf32>, vector<1x32x8xf32>, vector<1x32x8xf32>, vector<1x32x8xf32> -> vector<4x32x8xf32>
    %77 = vector.extract_strided_slice %58 {offsets = [0, 32], sizes = [32, 8], strides = [1, 1]} : vector<32x64xf32> to vector<32x8xf32>
    %78 = vector.extract_strided_slice %58 {offsets = [0, 40], sizes = [32, 8], strides = [1, 1]} : vector<32x64xf32> to vector<32x8xf32>
    %79 = vector.extract_strided_slice %58 {offsets = [0, 48], sizes = [32, 8], strides = [1, 1]} : vector<32x64xf32> to vector<32x8xf32>
    %80 = vector.extract_strided_slice %58 {offsets = [0, 56], sizes = [32, 8], strides = [1, 1]} : vector<32x64xf32> to vector<32x8xf32>
    %81 = vector.shape_cast %77 : vector<32x8xf32> to vector<1x32x8xf32>
    %82 = vector.shape_cast %78 : vector<32x8xf32> to vector<1x32x8xf32>
    %83 = vector.shape_cast %79 : vector<32x8xf32> to vector<1x32x8xf32>
    %84 = vector.shape_cast %80 : vector<32x8xf32> to vector<1x32x8xf32>
    %85 = tpu.concatenate %81, %82, %83, %84 in 0 : vector<1x32x8xf32>, vector<1x32x8xf32>, vector<1x32x8xf32>, vector<1x32x8xf32> -> vector<4x32x8xf32>
    %86 = vector.extract_strided_slice %67 {offsets = [0, 0, 0], sizes = [4, 8, 8], strides = [1, 1, 1]} : vector<4x16x8xf32> to vector<4x8x8xf32>
    %87 = vector.extract_strided_slice %76 {offsets = [0, 0, 0], sizes = [4, 16, 8], strides = [1, 1, 1]} : vector<4x32x8xf32> to vector<4x16x8xf32>
    %88 = vector.extract_strided_slice %85 {offsets = [0, 0, 0], sizes = [4, 16, 8], strides = [1, 1, 1]} : vector<4x32x8xf32> to vector<4x16x8xf32>
    "tpu.trace_start"() <{level = 10 : i32, message = "hqd,hkd->hqk"}> : () -> ()
    %cst_19 = arith.constant dense<0.000000e+00> : vector<4x8x16xf32>
    %89 = tpu.matmul %86, %87, %cst_19 {dimension_numbers = #tpu.dot_dimension_numbers<[2], [2], [1], [1], [0, 0, 0, 1, 1, 1], [0], [0]>} : vector<4x8x8xf32>, vector<4x16x8xf32>, vector<4x8x16xf32> -> vector<4x8x16xf32>
    "tpu.trace_stop"() : () -> ()
    %cst_20 = arith.constant dense<0xFF800000> : vector<4x8xf32>
    %90 = vector.multi_reduction <maximumf>, %89, %cst_20 [2] : vector<4x8x16xf32> to vector<4x8xf32>
    %91 = vector.shape_cast %90 : vector<4x8xf32> to vector<4x8x1xf32>
    %92 = vector.broadcast %91 : vector<4x8x1xf32> to vector<4x8x16xf32>
    %93 = arith.subf %89, %92 : vector<4x8x16xf32>
    %94 = math.exp %93 : vector<4x8x16xf32>
    %cst_21 = arith.constant dense<0.000000e+00> : vector<4x8xf32>
    %95 = vector.multi_reduction <add>, %94, %cst_21 [2] : vector<4x8x16xf32> to vector<4x8xf32>
    %96 = vector.shape_cast %95 : vector<4x8xf32> to vector<4x8x1xf32>
    %97 = tpu.reciprocal %96 {approx = true} : vector<4x8x1xf32> -> vector<4x8x1xf32>
    %98 = vector.broadcast %97 : vector<4x8x1xf32> to vector<4x8x16xf32>
    %99 = arith.mulf %94, %98 : vector<4x8x16xf32>
    "tpu.trace_start"() <{level = 10 : i32, message = "hqk,hkd->hqd"}> : () -> ()
    %cst_22 = arith.constant dense<0.000000e+00> : vector<4x8x8xf32>
    %100 = tpu.matmul %99, %88, %cst_22 {dimension_numbers = #tpu.dot_dimension_numbers<[2], [1], [1], [2], [0, 0, 0, 1, 1, 2], [0], [0]>} : vector<4x8x16xf32>, vector<4x16x8xf32>, vector<4x8x8xf32> -> vector<4x8x8xf32>
    "tpu.trace_stop"() : () -> ()
    %101 = vector.extract_strided_slice %100 {offsets = [0, 0, 0], sizes = [1, 8, 8], strides = [1, 1, 1]} : vector<4x8x8xf32> to vector<1x8x8xf32>
    %102 = vector.shape_cast %101 : vector<1x8x8xf32> to vector<8x8xf32>
    %103 = vector.extract_strided_slice %100 {offsets = [1, 0, 0], sizes = [1, 8, 8], strides = [1, 1, 1]} : vector<4x8x8xf32> to vector<1x8x8xf32>
    %104 = vector.shape_cast %103 : vector<1x8x8xf32> to vector<8x8xf32>
    %105 = vector.extract_strided_slice %100 {offsets = [2, 0, 0], sizes = [1, 8, 8], strides = [1, 1, 1]} : vector<4x8x8xf32> to vector<1x8x8xf32>
    %106 = vector.shape_cast %105 : vector<1x8x8xf32> to vector<8x8xf32>
    %107 = vector.extract_strided_slice %100 {offsets = [3, 0, 0], sizes = [1, 8, 8], strides = [1, 1, 1]} : vector<4x8x8xf32> to vector<1x8x8xf32>
    %108 = vector.shape_cast %107 : vector<1x8x8xf32> to vector<8x8xf32>
    %109 = tpu.concatenate %102, %104, %106, %108 in 1 : vector<8x8xf32>, vector<8x8xf32>, vector<8x8xf32>, vector<8x8xf32> -> vector<8x32xf32>
    %110 = vector.extract_strided_slice %67 {offsets = [0, 8, 0], sizes = [4, 8, 8], strides = [1, 1, 1]} : vector<4x16x8xf32> to vector<4x8x8xf32>
    %111 = vector.extract_strided_slice %76 {offsets = [0, 16, 0], sizes = [4, 16, 8], strides = [1, 1, 1]} : vector<4x32x8xf32> to vector<4x16x8xf32>
    %112 = vector.extract_strided_slice %85 {offsets = [0, 16, 0], sizes = [4, 16, 8], strides = [1, 1, 1]} : vector<4x32x8xf32> to vector<4x16x8xf32>
    "tpu.trace_start"() <{level = 10 : i32, message = "hqd,hkd->hqk"}> : () -> ()
    %cst_23 = arith.constant dense<0.000000e+00> : vector<4x8x16xf32>
    %113 = tpu.matmul %110, %111, %cst_23 {dimension_numbers = #tpu.dot_dimension_numbers<[2], [2], [1], [1], [0, 0, 0, 1, 1, 1], [0], [0]>} : vector<4x8x8xf32>, vector<4x16x8xf32>, vector<4x8x16xf32> -> vector<4x8x16xf32>
    "tpu.trace_stop"() : () -> ()
    %cst_24 = arith.constant dense<0xFF800000> : vector<4x8xf32>
    %114 = vector.multi_reduction <maximumf>, %113, %cst_24 [2] : vector<4x8x16xf32> to vector<4x8xf32>
    %115 = vector.shape_cast %114 : vector<4x8xf32> to vector<4x8x1xf32>
    %116 = vector.broadcast %115 : vector<4x8x1xf32> to vector<4x8x16xf32>
    %117 = arith.subf %113, %116 : vector<4x8x16xf32>
    %118 = math.exp %117 : vector<4x8x16xf32>
    %cst_25 = arith.constant dense<0.000000e+00> : vector<4x8xf32>
    %119 = vector.multi_reduction <add>, %118, %cst_25 [2] : vector<4x8x16xf32> to vector<4x8xf32>
    %120 = vector.shape_cast %119 : vector<4x8xf32> to vector<4x8x1xf32>
    %121 = tpu.reciprocal %120 {approx = true} : vector<4x8x1xf32> -> vector<4x8x1xf32>
    %122 = vector.broadcast %121 : vector<4x8x1xf32> to vector<4x8x16xf32>
    %123 = arith.mulf %118, %122 : vector<4x8x16xf32>
    "tpu.trace_start"() <{level = 10 : i32, message = "hqk,hkd->hqd"}> : () -> ()
    %cst_26 = arith.constant dense<0.000000e+00> : vector<4x8x8xf32>
    %124 = tpu.matmul %123, %112, %cst_26 {dimension_numbers = #tpu.dot_dimension_numbers<[2], [1], [1], [2], [0, 0, 0, 1, 1, 2], [0], [0]>} : vector<4x8x16xf32>, vector<4x16x8xf32>, vector<4x8x8xf32> -> vector<4x8x8xf32>
    "tpu.trace_stop"() : () -> ()
    %125 = vector.extract_strided_slice %124 {offsets = [0, 0, 0], sizes = [1, 8, 8], strides = [1, 1, 1]} : vector<4x8x8xf32> to vector<1x8x8xf32>
    %126 = vector.shape_cast %125 : vector<1x8x8xf32> to vector<8x8xf32>
    %127 = vector.extract_strided_slice %124 {offsets = [1, 0, 0], sizes = [1, 8, 8], strides = [1, 1, 1]} : vector<4x8x8xf32> to vector<1x8x8xf32>
    %128 = vector.shape_cast %127 : vector<1x8x8xf32> to vector<8x8xf32>
    %129 = vector.extract_strided_slice %124 {offsets = [2, 0, 0], sizes = [1, 8, 8], strides = [1, 1, 1]} : vector<4x8x8xf32> to vector<1x8x8xf32>
    %130 = vector.shape_cast %129 : vector<1x8x8xf32> to vector<8x8xf32>
    %131 = vector.extract_strided_slice %124 {offsets = [3, 0, 0], sizes = [1, 8, 8], strides = [1, 1, 1]} : vector<4x8x8xf32> to vector<1x8x8xf32>
    %132 = vector.shape_cast %131 : vector<1x8x8xf32> to vector<8x8xf32>
    %133 = tpu.concatenate %126, %128, %130, %132 in 1 : vector<8x8xf32>, vector<8x8xf32>, vector<8x8xf32>, vector<8x8xf32> -> vector<8x32xf32>
    %134 = tpu.concatenate %109, %133 in 0 : vector<8x32xf32>, vector<8x32xf32> -> vector<16x32xf32>
    %135 = arith.addf %134, %1 : vector<16x32xf32>
    %cst_27 = arith.constant dense<0.000000e+00> : vector<16xf32>
    %136 = vector.multi_reduction <add>, %135, %cst_27 [1] : vector<16x32xf32> to vector<16xf32>
    %137 = vector.shape_cast %136 : vector<16xf32> to vector<16x1xf32>
    %cst_28 = arith.constant 3.200000e+01 : f32
    %138 = vector.broadcast %cst_28 : f32 to vector<16x1xf32>
    %139 = arith.divf %137, %138 : vector<16x1xf32>
    %140 = vector.broadcast %139 : vector<16x1xf32> to vector<16x32xf32>
    %141 = arith.subf %135, %140 : vector<16x32xf32>
    %142 = arith.mulf %141, %141 : vector<16x32xf32>
    %cst_29 = arith.constant dense<0.000000e+00> : vector<16xf32>
    %143 = vector.multi_reduction <add>, %142, %cst_29 [1] : vector<16x32xf32> to vector<16xf32>
    %144 = vector.shape_cast %143 : vector<16xf32> to vector<16x1xf32>
    %cst_30 = arith.constant 3.200000e+01 : f32
    %145 = vector.broadcast %cst_30 : f32 to vector<16x1xf32>
    %146 = arith.divf %144, %145 : vector<16x1xf32>
    %147 = vector.broadcast %139 : vector<16x1xf32> to vector<16x32xf32>
    %148 = arith.subf %135, %147 : vector<16x32xf32>
    %cst_31 = arith.constant 9.99999997E-7 : f32
    %149 = vector.broadcast %cst_31 : f32 to vector<16x1xf32>
    %150 = arith.addf %146, %149 : vector<16x1xf32>
    %151 = math.rsqrt %150 : vector<16x1xf32>
    %152 = vector.broadcast %151 : vector<16x1xf32> to vector<16x32xf32>
    %153 = arith.mulf %148, %152 : vector<16x32xf32>
    %154 = vector.shape_cast %24 : vector<32xf32> to vector<1x32xf32>
    %155 = vector.broadcast %154 : vector<1x32xf32> to vector<16x32xf32>
    %156 = arith.mulf %153, %155 : vector<16x32xf32>
    %157 = vector.shape_cast %26 : vector<32xf32> to vector<1x32xf32>
    %158 = vector.broadcast %157 : vector<1x32xf32> to vector<16x32xf32>
    %159 = arith.addf %156, %158 : vector<16x32xf32>
    %cst_32 = arith.constant dense<0.000000e+00> : vector<16x64xf32>
    %160 = tpu.matmul %159, %10, %cst_32 {dimension_numbers = #tpu.dot_dimension_numbers<[1], [0], [0], [1], [0, 0, 1, 1], [], []>} : vector<16x32xf32>, vector<32x64xf32>, vector<16x64xf32> -> vector<16x64xf32>
    %161 = vector.shape_cast %16 : vector<64xf32> to vector<1x64xf32>
    %162 = vector.broadcast %161 : vector<1x64xf32> to vector<16x64xf32>
    %163 = arith.addf %160, %162 : vector<16x64xf32>
    %cst_33 = arith.constant 5.000000e-01 : f32
    %164 = vector.broadcast %cst_33 : f32 to vector<16x64xf32>
    %165 = arith.mulf %164, %163 : vector<16x64xf32>
    %cst_34 = arith.constant 0.707106769 : f32
    %166 = vector.broadcast %cst_34 : f32 to vector<16x64xf32>
    %167 = arith.mulf %163, %166 : vector<16x64xf32>
    %cst_35 = arith.constant 0.000000e+00 : f32
    %168 = vector.broadcast %cst_35 : f32 to vector<16x64xf32>
    %169 = arith.cmpf oge, %167, %168 : vector<16x64xf32>
    %cst_36 = arith.constant 1.000000e+00 : f32
    %cst_37 = arith.constant -1.000000e+00 : f32
    %170 = vector.broadcast %cst_36 : f32 to vector<16x64xf32>
    %171 = vector.broadcast %cst_37 : f32 to vector<16x64xf32>
    %172 = arith.select %169, %170, %171 : vector<16x64xi1>, vector<16x64xf32>
    %173 = math.absf %167 : vector<16x64xf32>
    %cst_38 = arith.constant 0.327591091 : f32
    %174 = vector.broadcast %cst_38 : f32 to vector<16x64xf32>
    %175 = arith.mulf %174, %173 : vector<16x64xf32>
    %cst_39 = arith.constant 1.000000e+00 : f32
    %176 = vector.broadcast %cst_39 : f32 to vector<16x64xf32>
    %177 = arith.addf %176, %175 : vector<16x64xf32>
    %cst_40 = arith.constant 1.000000e+00 : f32
    %178 = vector.broadcast %cst_40 : f32 to vector<16x64xf32>
    %179 = arith.divf %178, %177 : vector<16x64xf32>
    %cst_41 = arith.constant 1.06140542 : f32
    %180 = vector.broadcast %cst_41 : f32 to vector<16x64xf32>
    %181 = arith.mulf %180, %179 : vector<16x64xf32>
    %cst_42 = arith.constant -1.45315206 : f32
    %182 = vector.broadcast %cst_42 : f32 to vector<16x64xf32>
    %183 = arith.addf %181, %182 : vector<16x64xf32>
    %184 = arith.mulf %183, %179 : vector<16x64xf32>
    %cst_43 = arith.constant 1.42141378 : f32
    %185 = vector.broadcast %cst_43 : f32 to vector<16x64xf32>
    %186 = arith.addf %184, %185 : vector<16x64xf32>
    %187 = arith.mulf %186, %179 : vector<16x64xf32>
    %cst_44 = arith.constant -0.284496725 : f32
    %188 = vector.broadcast %cst_44 : f32 to vector<16x64xf32>
    %189 = arith.addf %187, %188 : vector<16x64xf32>
    %190 = arith.mulf %189, %179 : vector<16x64xf32>
    %cst_45 = arith.constant 0.254829586 : f32
    %191 = vector.broadcast %cst_45 : f32 to vector<16x64xf32>
    %192 = arith.addf %190, %191 : vector<16x64xf32>
    %193 = arith.mulf %192, %179 : vector<16x64xf32>
    %cst_46 = arith.constant 0.000000e+00 : f32
    %194 = vector.broadcast %cst_46 : f32 to vector<16x64xf32>
    %195 = arith.subf %194, %173 : vector<16x64xf32>
    %196 = arith.mulf %195, %173 : vector<16x64xf32>
    %197 = math.exp %196 : vector<16x64xf32>
    %198 = arith.mulf %193, %197 : vector<16x64xf32>
    %cst_47 = arith.constant 1.000000e+00 : f32
    %199 = vector.broadcast %cst_47 : f32 to vector<16x64xf32>
    %200 = arith.subf %199, %198 : vector<16x64xf32>
    %201 = arith.mulf %172, %200 : vector<16x64xf32>
    %cst_48 = arith.constant 1.000000e+00 : f32
    %202 = vector.broadcast %cst_48 : f32 to vector<16x64xf32>
    %203 = arith.addf %202, %201 : vector<16x64xf32>
    %204 = arith.mulf %165, %203 : vector<16x64xf32>
    %cst_49 = arith.constant dense<0.000000e+00> : vector<16x32xf32>
    %205 = tpu.matmul %204, %6, %cst_49 {dimension_numbers = #tpu.dot_dimension_numbers<[1], [0], [0], [1], [0, 0, 1, 1], [], []>} : vector<16x64xf32>, vector<64x32xf32>, vector<16x32xf32> -> vector<16x32xf32>
    %206 = vector.shape_cast %18 : vector<32xf32> to vector<1x32xf32>
    %207 = vector.broadcast %206 : vector<1x32xf32> to vector<16x32xf32>
    %208 = arith.addf %205, %207 : vector<16x32xf32>
    %209 = arith.addf %208, %135 : vector<16x32xf32>
    %c1_50 = arith.constant 1 : index
    %c0_51 = arith.constant 0 : index
    %c0_52 = arith.constant 0 : index
    %210 = vector.load %arg2[%c1_50, %c0_51, %c0_52] : memref<2x96x32xf32, #tpu.memory_space<vmem>>, vector<1x96x32xf32>
    %211 = vector.shape_cast %210 : vector<1x96x32xf32> to vector<96x32xf32>
    %212 = vector.extract_strided_slice %211 {offsets = [0, 0], sizes = [32, 32], strides = [1, 1]} : vector<96x32xf32> to vector<32x32xf32>
    %213 = vector.extract_strided_slice %211 {offsets = [32, 0], sizes = [64, 32], strides = [1, 1]} : vector<96x32xf32> to vector<64x32xf32>
    %c2 = arith.constant 2 : index
    %c0_53 = arith.constant 0 : index
    %c0_54 = arith.constant 0 : index
    %214 = vector.load %arg3[%c2, %c0_53, %c0_54] : memref<4x32x64xf32, #tpu.memory_space<vmem>>, vector<1x32x64xf32>
    %215 = vector.shape_cast %214 : vector<1x32x64xf32> to vector<32x64xf32>
    %c3 = arith.constant 3 : index
    %c0_55 = arith.constant 0 : index
    %c0_56 = arith.constant 0 : index
    %216 = vector.load %arg3[%c3, %c0_55, %c0_56] : memref<4x32x64xf32, #tpu.memory_space<vmem>>, vector<1x32x64xf32>
    %217 = vector.shape_cast %216 : vector<1x32x64xf32> to vector<32x64xf32>
    %218 = vector.extract_strided_slice %2 {offsets = [8, 0], sizes = [1, 32], strides = [1, 1]} : vector<18x64xf32> to vector<1x32xf32>
    %219 = vector.shape_cast %218 : vector<1x32xf32> to vector<32xf32>
    %220 = vector.extract_strided_slice %2 {offsets = [9, 0], sizes = [1, 64], strides = [1, 1]} : vector<18x64xf32> to vector<1x64xf32>
    %221 = vector.shape_cast %220 : vector<1x64xf32> to vector<64xf32>
    %222 = vector.extract_strided_slice %2 {offsets = [10, 0], sizes = [1, 64], strides = [1, 1]} : vector<18x64xf32> to vector<1x64xf32>
    %223 = vector.shape_cast %222 : vector<1x64xf32> to vector<64xf32>
    %224 = vector.extract_strided_slice %2 {offsets = [11, 0], sizes = [1, 32], strides = [1, 1]} : vector<18x64xf32> to vector<1x32xf32>
    %225 = vector.shape_cast %224 : vector<1x32xf32> to vector<32xf32>
    %226 = vector.extract_strided_slice %2 {offsets = [12, 0], sizes = [1, 32], strides = [1, 1]} : vector<18x64xf32> to vector<1x32xf32>
    %227 = vector.shape_cast %226 : vector<1x32xf32> to vector<32xf32>
    %228 = vector.extract_strided_slice %2 {offsets = [13, 0], sizes = [1, 32], strides = [1, 1]} : vector<18x64xf32> to vector<1x32xf32>
    %229 = vector.shape_cast %228 : vector<1x32xf32> to vector<32xf32>
    %230 = vector.extract_strided_slice %2 {offsets = [14, 0], sizes = [1, 32], strides = [1, 1]} : vector<18x64xf32> to vector<1x32xf32>
    %231 = vector.shape_cast %230 : vector<1x32xf32> to vector<32xf32>
    %232 = vector.extract_strided_slice %2 {offsets = [15, 0], sizes = [1, 32], strides = [1, 1]} : vector<18x64xf32> to vector<1x32xf32>
    %233 = vector.shape_cast %232 : vector<1x32xf32> to vector<32xf32>
    %cst_57 = arith.constant dense<0.000000e+00> : vector<16xf32>
    %234 = vector.multi_reduction <add>, %209, %cst_57 [1] : vector<16x32xf32> to vector<16xf32>
    %235 = vector.shape_cast %234 : vector<16xf32> to vector<16x1xf32>
    %cst_58 = arith.constant 3.200000e+01 : f32
    %236 = vector.broadcast %cst_58 : f32 to vector<16x1xf32>
    %237 = arith.divf %235, %236 : vector<16x1xf32>
    %238 = vector.broadcast %237 : vector<16x1xf32> to vector<16x32xf32>
    %239 = arith.subf %209, %238 : vector<16x32xf32>
    %240 = arith.mulf %239, %239 : vector<16x32xf32>
    %cst_59 = arith.constant dense<0.000000e+00> : vector<16xf32>
    %241 = vector.multi_reduction <add>, %240, %cst_59 [1] : vector<16x32xf32> to vector<16xf32>
    %242 = vector.shape_cast %241 : vector<16xf32> to vector<16x1xf32>
    %cst_60 = arith.constant 3.200000e+01 : f32
    %243 = vector.broadcast %cst_60 : f32 to vector<16x1xf32>
    %244 = arith.divf %242, %243 : vector<16x1xf32>
    %245 = vector.broadcast %237 : vector<16x1xf32> to vector<16x32xf32>
    %246 = arith.subf %209, %245 : vector<16x32xf32>
    %cst_61 = arith.constant 9.99999997E-7 : f32
    %247 = vector.broadcast %cst_61 : f32 to vector<16x1xf32>
    %248 = arith.addf %244, %247 : vector<16x1xf32>
    %249 = math.rsqrt %248 : vector<16x1xf32>
    %250 = vector.broadcast %249 : vector<16x1xf32> to vector<16x32xf32>
    %251 = arith.mulf %246, %250 : vector<16x32xf32>
    %252 = vector.shape_cast %227 : vector<32xf32> to vector<1x32xf32>
    %253 = vector.broadcast %252 : vector<1x32xf32> to vector<16x32xf32>
    %254 = arith.mulf %251, %253 : vector<16x32xf32>
    %255 = vector.shape_cast %229 : vector<32xf32> to vector<1x32xf32>
    %256 = vector.broadcast %255 : vector<1x32xf32> to vector<16x32xf32>
    %257 = arith.addf %254, %256 : vector<16x32xf32>
    %cst_62 = arith.constant dense<0.000000e+00> : vector<16x32xf32>
    %258 = tpu.matmul %257, %212, %cst_62 {dimension_numbers = #tpu.dot_dimension_numbers<[1], [0], [0], [1], [0, 0, 1, 1], [], []>} : vector<16x32xf32>, vector<32x32xf32>, vector<16x32xf32> -> vector<16x32xf32>
    %259 = vector.shape_cast %219 : vector<32xf32> to vector<1x32xf32>
    %260 = vector.broadcast %259 : vector<1x32xf32> to vector<16x32xf32>
    %261 = arith.addf %258, %260 : vector<16x32xf32>
    %cst_63 = arith.constant dense<0.000000e+00> : vector<32x64xf32>
    %262 = tpu.matmul %0, %215, %cst_63 {dimension_numbers = #tpu.dot_dimension_numbers<[1], [0], [0], [1], [0, 0, 1, 1], [], []>} : vector<32x32xf32>, vector<32x64xf32>, vector<32x64xf32> -> vector<32x64xf32>
    %263 = vector.shape_cast %221 : vector<64xf32> to vector<1x64xf32>
    %264 = vector.broadcast %263 : vector<1x64xf32> to vector<32x64xf32>
    %265 = arith.addf %262, %264 : vector<32x64xf32>
    %266 = vector.extract_strided_slice %261 {offsets = [0, 0], sizes = [16, 8], strides = [1, 1]} : vector<16x32xf32> to vector<16x8xf32>
    %267 = vector.extract_strided_slice %261 {offsets = [0, 8], sizes = [16, 8], strides = [1, 1]} : vector<16x32xf32> to vector<16x8xf32>
    %268 = vector.extract_strided_slice %261 {offsets = [0, 16], sizes = [16, 8], strides = [1, 1]} : vector<16x32xf32> to vector<16x8xf32>
    %269 = vector.extract_strided_slice %261 {offsets = [0, 24], sizes = [16, 8], strides = [1, 1]} : vector<16x32xf32> to vector<16x8xf32>
    %270 = vector.shape_cast %266 : vector<16x8xf32> to vector<1x16x8xf32>
    %271 = vector.shape_cast %267 : vector<16x8xf32> to vector<1x16x8xf32>
    %272 = vector.shape_cast %268 : vector<16x8xf32> to vector<1x16x8xf32>
    %273 = vector.shape_cast %269 : vector<16x8xf32> to vector<1x16x8xf32>
    %274 = tpu.concatenate %270, %271, %272, %273 in 0 : vector<1x16x8xf32>, vector<1x16x8xf32>, vector<1x16x8xf32>, vector<1x16x8xf32> -> vector<4x16x8xf32>
    %275 = vector.extract_strided_slice %265 {offsets = [0, 0], sizes = [32, 8], strides = [1, 1]} : vector<32x64xf32> to vector<32x8xf32>
    %276 = vector.extract_strided_slice %265 {offsets = [0, 8], sizes = [32, 8], strides = [1, 1]} : vector<32x64xf32> to vector<32x8xf32>
    %277 = vector.extract_strided_slice %265 {offsets = [0, 16], sizes = [32, 8], strides = [1, 1]} : vector<32x64xf32> to vector<32x8xf32>
    %278 = vector.extract_strided_slice %265 {offsets = [0, 24], sizes = [32, 8], strides = [1, 1]} : vector<32x64xf32> to vector<32x8xf32>
    %279 = vector.shape_cast %275 : vector<32x8xf32> to vector<1x32x8xf32>
    %280 = vector.shape_cast %276 : vector<32x8xf32> to vector<1x32x8xf32>
    %281 = vector.shape_cast %277 : vector<32x8xf32> to vector<1x32x8xf32>
    %282 = vector.shape_cast %278 : vector<32x8xf32> to vector<1x32x8xf32>
    %283 = tpu.concatenate %279, %280, %281, %282 in 0 : vector<1x32x8xf32>, vector<1x32x8xf32>, vector<1x32x8xf32>, vector<1x32x8xf32> -> vector<4x32x8xf32>
    %284 = vector.extract_strided_slice %265 {offsets = [0, 32], sizes = [32, 8], strides = [1, 1]} : vector<32x64xf32> to vector<32x8xf32>
    %285 = vector.extract_strided_slice %265 {offsets = [0, 40], sizes = [32, 8], strides = [1, 1]} : vector<32x64xf32> to vector<32x8xf32>
    %286 = vector.extract_strided_slice %265 {offsets = [0, 48], sizes = [32, 8], strides = [1, 1]} : vector<32x64xf32> to vector<32x8xf32>
    %287 = vector.extract_strided_slice %265 {offsets = [0, 56], sizes = [32, 8], strides = [1, 1]} : vector<32x64xf32> to vector<32x8xf32>
    %288 = vector.shape_cast %284 : vector<32x8xf32> to vector<1x32x8xf32>
    %289 = vector.shape_cast %285 : vector<32x8xf32> to vector<1x32x8xf32>
    %290 = vector.shape_cast %286 : vector<32x8xf32> to vector<1x32x8xf32>
    %291 = vector.shape_cast %287 : vector<32x8xf32> to vector<1x32x8xf32>
    %292 = tpu.concatenate %288, %289, %290, %291 in 0 : vector<1x32x8xf32>, vector<1x32x8xf32>, vector<1x32x8xf32>, vector<1x32x8xf32> -> vector<4x32x8xf32>
    %293 = vector.extract_strided_slice %274 {offsets = [0, 0, 0], sizes = [4, 8, 8], strides = [1, 1, 1]} : vector<4x16x8xf32> to vector<4x8x8xf32>
    %294 = vector.extract_strided_slice %283 {offsets = [0, 0, 0], sizes = [4, 16, 8], strides = [1, 1, 1]} : vector<4x32x8xf32> to vector<4x16x8xf32>
    %295 = vector.extract_strided_slice %292 {offsets = [0, 0, 0], sizes = [4, 16, 8], strides = [1, 1, 1]} : vector<4x32x8xf32> to vector<4x16x8xf32>
    "tpu.trace_start"() <{level = 10 : i32, message = "hqd,hkd->hqk"}> : () -> ()
    %cst_64 = arith.constant dense<0.000000e+00> : vector<4x8x16xf32>
    %296 = tpu.matmul %293, %294, %cst_64 {dimension_numbers = #tpu.dot_dimension_numbers<[2], [2], [1], [1], [0, 0, 0, 1, 1, 1], [0], [0]>} : vector<4x8x8xf32>, vector<4x16x8xf32>, vector<4x8x16xf32> -> vector<4x8x16xf32>
    "tpu.trace_stop"() : () -> ()
    %cst_65 = arith.constant dense<0xFF800000> : vector<4x8xf32>
    %297 = vector.multi_reduction <maximumf>, %296, %cst_65 [2] : vector<4x8x16xf32> to vector<4x8xf32>
    %298 = vector.shape_cast %297 : vector<4x8xf32> to vector<4x8x1xf32>
    %299 = vector.broadcast %298 : vector<4x8x1xf32> to vector<4x8x16xf32>
    %300 = arith.subf %296, %299 : vector<4x8x16xf32>
    %301 = math.exp %300 : vector<4x8x16xf32>
    %cst_66 = arith.constant dense<0.000000e+00> : vector<4x8xf32>
    %302 = vector.multi_reduction <add>, %301, %cst_66 [2] : vector<4x8x16xf32> to vector<4x8xf32>
    %303 = vector.shape_cast %302 : vector<4x8xf32> to vector<4x8x1xf32>
    %304 = tpu.reciprocal %303 {approx = true} : vector<4x8x1xf32> -> vector<4x8x1xf32>
    %305 = vector.broadcast %304 : vector<4x8x1xf32> to vector<4x8x16xf32>
    %306 = arith.mulf %301, %305 : vector<4x8x16xf32>
    "tpu.trace_start"() <{level = 10 : i32, message = "hqk,hkd->hqd"}> : () -> ()
    %cst_67 = arith.constant dense<0.000000e+00> : vector<4x8x8xf32>
    %307 = tpu.matmul %306, %295, %cst_67 {dimension_numbers = #tpu.dot_dimension_numbers<[2], [1], [1], [2], [0, 0, 0, 1, 1, 2], [0], [0]>} : vector<4x8x16xf32>, vector<4x16x8xf32>, vector<4x8x8xf32> -> vector<4x8x8xf32>
    "tpu.trace_stop"() : () -> ()
    %308 = vector.extract_strided_slice %307 {offsets = [0, 0, 0], sizes = [1, 8, 8], strides = [1, 1, 1]} : vector<4x8x8xf32> to vector<1x8x8xf32>
    %309 = vector.shape_cast %308 : vector<1x8x8xf32> to vector<8x8xf32>
    %310 = vector.extract_strided_slice %307 {offsets = [1, 0, 0], sizes = [1, 8, 8], strides = [1, 1, 1]} : vector<4x8x8xf32> to vector<1x8x8xf32>
    %311 = vector.shape_cast %310 : vector<1x8x8xf32> to vector<8x8xf32>
    %312 = vector.extract_strided_slice %307 {offsets = [2, 0, 0], sizes = [1, 8, 8], strides = [1, 1, 1]} : vector<4x8x8xf32> to vector<1x8x8xf32>
    %313 = vector.shape_cast %312 : vector<1x8x8xf32> to vector<8x8xf32>
    %314 = vector.extract_strided_slice %307 {offsets = [3, 0, 0], sizes = [1, 8, 8], strides = [1, 1, 1]} : vector<4x8x8xf32> to vector<1x8x8xf32>
    %315 = vector.shape_cast %314 : vector<1x8x8xf32> to vector<8x8xf32>
    %316 = tpu.concatenate %309, %311, %313, %315 in 1 : vector<8x8xf32>, vector<8x8xf32>, vector<8x8xf32>, vector<8x8xf32> -> vector<8x32xf32>
    %317 = vector.extract_strided_slice %274 {offsets = [0, 8, 0], sizes = [4, 8, 8], strides = [1, 1, 1]} : vector<4x16x8xf32> to vector<4x8x8xf32>
    %318 = vector.extract_strided_slice %283 {offsets = [0, 16, 0], sizes = [4, 16, 8], strides = [1, 1, 1]} : vector<4x32x8xf32> to vector<4x16x8xf32>
    %319 = vector.extract_strided_slice %292 {offsets = [0, 16, 0], sizes = [4, 16, 8], strides = [1, 1, 1]} : vector<4x32x8xf32> to vector<4x16x8xf32>
    "tpu.trace_start"() <{level = 10 : i32, message = "hqd,hkd->hqk"}> : () -> ()
    %cst_68 = arith.constant dense<0.000000e+00> : vector<4x8x16xf32>
    %320 = tpu.matmul %317, %318, %cst_68 {dimension_numbers = #tpu.dot_dimension_numbers<[2], [2], [1], [1], [0, 0, 0, 1, 1, 1], [0], [0]>} : vector<4x8x8xf32>, vector<4x16x8xf32>, vector<4x8x16xf32> -> vector<4x8x16xf32>
    "tpu.trace_stop"() : () -> ()
    %cst_69 = arith.constant dense<0xFF800000> : vector<4x8xf32>
    %321 = vector.multi_reduction <maximumf>, %320, %cst_69 [2] : vector<4x8x16xf32> to vector<4x8xf32>
    %322 = vector.shape_cast %321 : vector<4x8xf32> to vector<4x8x1xf32>
    %323 = vector.broadcast %322 : vector<4x8x1xf32> to vector<4x8x16xf32>
    %324 = arith.subf %320, %323 : vector<4x8x16xf32>
    %325 = math.exp %324 : vector<4x8x16xf32>
    %cst_70 = arith.constant dense<0.000000e+00> : vector<4x8xf32>
    %326 = vector.multi_reduction <add>, %325, %cst_70 [2] : vector<4x8x16xf32> to vector<4x8xf32>
    %327 = vector.shape_cast %326 : vector<4x8xf32> to vector<4x8x1xf32>
    %328 = tpu.reciprocal %327 {approx = true} : vector<4x8x1xf32> -> vector<4x8x1xf32>
    %329 = vector.broadcast %328 : vector<4x8x1xf32> to vector<4x8x16xf32>
    %330 = arith.mulf %325, %329 : vector<4x8x16xf32>
    "tpu.trace_start"() <{level = 10 : i32, message = "hqk,hkd->hqd"}> : () -> ()
    %cst_71 = arith.constant dense<0.000000e+00> : vector<4x8x8xf32>
    %331 = tpu.matmul %330, %319, %cst_71 {dimension_numbers = #tpu.dot_dimension_numbers<[2], [1], [1], [2], [0, 0, 0, 1, 1, 2], [0], [0]>} : vector<4x8x16xf32>, vector<4x16x8xf32>, vector<4x8x8xf32> -> vector<4x8x8xf32>
    "tpu.trace_stop"() : () -> ()
    %332 = vector.extract_strided_slice %331 {offsets = [0, 0, 0], sizes = [1, 8, 8], strides = [1, 1, 1]} : vector<4x8x8xf32> to vector<1x8x8xf32>
    %333 = vector.shape_cast %332 : vector<1x8x8xf32> to vector<8x8xf32>
    %334 = vector.extract_strided_slice %331 {offsets = [1, 0, 0], sizes = [1, 8, 8], strides = [1, 1, 1]} : vector<4x8x8xf32> to vector<1x8x8xf32>
    %335 = vector.shape_cast %334 : vector<1x8x8xf32> to vector<8x8xf32>
    %336 = vector.extract_strided_slice %331 {offsets = [2, 0, 0], sizes = [1, 8, 8], strides = [1, 1, 1]} : vector<4x8x8xf32> to vector<1x8x8xf32>
    %337 = vector.shape_cast %336 : vector<1x8x8xf32> to vector<8x8xf32>
    %338 = vector.extract_strided_slice %331 {offsets = [3, 0, 0], sizes = [1, 8, 8], strides = [1, 1, 1]} : vector<4x8x8xf32> to vector<1x8x8xf32>
    %339 = vector.shape_cast %338 : vector<1x8x8xf32> to vector<8x8xf32>
    %340 = tpu.concatenate %333, %335, %337, %339 in 1 : vector<8x8xf32>, vector<8x8xf32>, vector<8x8xf32>, vector<8x8xf32> -> vector<8x32xf32>
    %341 = tpu.concatenate %316, %340 in 0 : vector<8x32xf32>, vector<8x32xf32> -> vector<16x32xf32>
    %342 = arith.addf %341, %209 : vector<16x32xf32>
    %cst_72 = arith.constant dense<0.000000e+00> : vector<16xf32>
    %343 = vector.multi_reduction <add>, %342, %cst_72 [1] : vector<16x32xf32> to vector<16xf32>
    %344 = vector.shape_cast %343 : vector<16xf32> to vector<16x1xf32>
    %cst_73 = arith.constant 3.200000e+01 : f32
    %345 = vector.broadcast %cst_73 : f32 to vector<16x1xf32>
    %346 = arith.divf %344, %345 : vector<16x1xf32>
    %347 = vector.broadcast %346 : vector<16x1xf32> to vector<16x32xf32>
    %348 = arith.subf %342, %347 : vector<16x32xf32>
    %349 = arith.mulf %348, %348 : vector<16x32xf32>
    %cst_74 = arith.constant dense<0.000000e+00> : vector<16xf32>
    %350 = vector.multi_reduction <add>, %349, %cst_74 [1] : vector<16x32xf32> to vector<16xf32>
    %351 = vector.shape_cast %350 : vector<16xf32> to vector<16x1xf32>
    %cst_75 = arith.constant 3.200000e+01 : f32
    %352 = vector.broadcast %cst_75 : f32 to vector<16x1xf32>
    %353 = arith.divf %351, %352 : vector<16x1xf32>
    %354 = vector.broadcast %346 : vector<16x1xf32> to vector<16x32xf32>
    %355 = arith.subf %342, %354 : vector<16x32xf32>
    %cst_76 = arith.constant 9.99999997E-7 : f32
    %356 = vector.broadcast %cst_76 : f32 to vector<16x1xf32>
    %357 = arith.addf %353, %356 : vector<16x1xf32>
    %358 = math.rsqrt %357 : vector<16x1xf32>
    %359 = vector.broadcast %358 : vector<16x1xf32> to vector<16x32xf32>
    %360 = arith.mulf %355, %359 : vector<16x32xf32>
    %361 = vector.shape_cast %231 : vector<32xf32> to vector<1x32xf32>
    %362 = vector.broadcast %361 : vector<1x32xf32> to vector<16x32xf32>
    %363 = arith.mulf %360, %362 : vector<16x32xf32>
    %364 = vector.shape_cast %233 : vector<32xf32> to vector<1x32xf32>
    %365 = vector.broadcast %364 : vector<1x32xf32> to vector<16x32xf32>
    %366 = arith.addf %363, %365 : vector<16x32xf32>
    %cst_77 = arith.constant dense<0.000000e+00> : vector<16x64xf32>
    %367 = tpu.matmul %366, %217, %cst_77 {dimension_numbers = #tpu.dot_dimension_numbers<[1], [0], [0], [1], [0, 0, 1, 1], [], []>} : vector<16x32xf32>, vector<32x64xf32>, vector<16x64xf32> -> vector<16x64xf32>
    %368 = vector.shape_cast %223 : vector<64xf32> to vector<1x64xf32>
    %369 = vector.broadcast %368 : vector<1x64xf32> to vector<16x64xf32>
    %370 = arith.addf %367, %369 : vector<16x64xf32>
    %cst_78 = arith.constant 5.000000e-01 : f32
    %371 = vector.broadcast %cst_78 : f32 to vector<16x64xf32>
    %372 = arith.mulf %371, %370 : vector<16x64xf32>
    %cst_79 = arith.constant 0.707106769 : f32
    %373 = vector.broadcast %cst_79 : f32 to vector<16x64xf32>
    %374 = arith.mulf %370, %373 : vector<16x64xf32>
    %cst_80 = arith.constant 0.000000e+00 : f32
    %375 = vector.broadcast %cst_80 : f32 to vector<16x64xf32>
    %376 = arith.cmpf oge, %374, %375 : vector<16x64xf32>
    %cst_81 = arith.constant 1.000000e+00 : f32
    %cst_82 = arith.constant -1.000000e+00 : f32
    %377 = vector.broadcast %cst_81 : f32 to vector<16x64xf32>
    %378 = vector.broadcast %cst_82 : f32 to vector<16x64xf32>
    %379 = arith.select %376, %377, %378 : vector<16x64xi1>, vector<16x64xf32>
    %380 = math.absf %374 : vector<16x64xf32>
    %cst_83 = arith.constant 0.327591091 : f32
    %381 = vector.broadcast %cst_83 : f32 to vector<16x64xf32>
    %382 = arith.mulf %381, %380 : vector<16x64xf32>
    %cst_84 = arith.constant 1.000000e+00 : f32
    %383 = vector.broadcast %cst_84 : f32 to vector<16x64xf32>
    %384 = arith.addf %383, %382 : vector<16x64xf32>
    %cst_85 = arith.constant 1.000000e+00 : f32
    %385 = vector.broadcast %cst_85 : f32 to vector<16x64xf32>
    %386 = arith.divf %385, %384 : vector<16x64xf32>
    %cst_86 = arith.constant 1.06140542 : f32
    %387 = vector.broadcast %cst_86 : f32 to vector<16x64xf32>
    %388 = arith.mulf %387, %386 : vector<16x64xf32>
    %cst_87 = arith.constant -1.45315206 : f32
    %389 = vector.broadcast %cst_87 : f32 to vector<16x64xf32>
    %390 = arith.addf %388, %389 : vector<16x64xf32>
    %391 = arith.mulf %390, %386 : vector<16x64xf32>
    %cst_88 = arith.constant 1.42141378 : f32
    %392 = vector.broadcast %cst_88 : f32 to vector<16x64xf32>
    %393 = arith.addf %391, %392 : vector<16x64xf32>
    %394 = arith.mulf %393, %386 : vector<16x64xf32>
    %cst_89 = arith.constant -0.284496725 : f32
    %395 = vector.broadcast %cst_89 : f32 to vector<16x64xf32>
    %396 = arith.addf %394, %395 : vector<16x64xf32>
    %397 = arith.mulf %396, %386 : vector<16x64xf32>
    %cst_90 = arith.constant 0.254829586 : f32
    %398 = vector.broadcast %cst_90 : f32 to vector<16x64xf32>
    %399 = arith.addf %397, %398 : vector<16x64xf32>
    %400 = arith.mulf %399, %386 : vector<16x64xf32>
    %cst_91 = arith.constant 0.000000e+00 : f32
    %401 = vector.broadcast %cst_91 : f32 to vector<16x64xf32>
    %402 = arith.subf %401, %380 : vector<16x64xf32>
    %403 = arith.mulf %402, %380 : vector<16x64xf32>
    %404 = math.exp %403 : vector<16x64xf32>
    %405 = arith.mulf %400, %404 : vector<16x64xf32>
    %cst_92 = arith.constant 1.000000e+00 : f32
    %406 = vector.broadcast %cst_92 : f32 to vector<16x64xf32>
    %407 = arith.subf %406, %405 : vector<16x64xf32>
    %408 = arith.mulf %379, %407 : vector<16x64xf32>
    %cst_93 = arith.constant 1.000000e+00 : f32
    %409 = vector.broadcast %cst_93 : f32 to vector<16x64xf32>
    %410 = arith.addf %409, %408 : vector<16x64xf32>
    %411 = arith.mulf %372, %410 : vector<16x64xf32>
    %cst_94 = arith.constant dense<0.000000e+00> : vector<16x32xf32>
    %412 = tpu.matmul %411, %213, %cst_94 {dimension_numbers = #tpu.dot_dimension_numbers<[1], [0], [0], [1], [0, 0, 1, 1], [], []>} : vector<16x64xf32>, vector<64x32xf32>, vector<16x32xf32> -> vector<16x32xf32>
    %413 = vector.shape_cast %225 : vector<32xf32> to vector<1x32xf32>
    %414 = vector.broadcast %413 : vector<1x32xf32> to vector<16x32xf32>
    %415 = arith.addf %412, %414 : vector<16x32xf32>
    %416 = arith.addf %415, %342 : vector<16x32xf32>
    %417 = vector.extract_strided_slice %2 {offsets = [16, 0], sizes = [1, 32], strides = [1, 1]} : vector<18x64xf32> to vector<1x32xf32>
    %418 = vector.shape_cast %417 : vector<1x32xf32> to vector<32xf32>
    %419 = vector.extract_strided_slice %2 {offsets = [17, 0], sizes = [1, 32], strides = [1, 1]} : vector<18x64xf32> to vector<1x32xf32>
    %420 = vector.shape_cast %419 : vector<1x32xf32> to vector<32xf32>
    %cst_95 = arith.constant dense<0.000000e+00> : vector<16xf32>
    %421 = vector.multi_reduction <add>, %416, %cst_95 [1] : vector<16x32xf32> to vector<16xf32>
    %422 = vector.shape_cast %421 : vector<16xf32> to vector<16x1xf32>
    %cst_96 = arith.constant 3.200000e+01 : f32
    %423 = vector.broadcast %cst_96 : f32 to vector<16x1xf32>
    %424 = arith.divf %422, %423 : vector<16x1xf32>
    %425 = vector.broadcast %424 : vector<16x1xf32> to vector<16x32xf32>
    %426 = arith.subf %416, %425 : vector<16x32xf32>
    %427 = arith.mulf %426, %426 : vector<16x32xf32>
    %cst_97 = arith.constant dense<0.000000e+00> : vector<16xf32>
    %428 = vector.multi_reduction <add>, %427, %cst_97 [1] : vector<16x32xf32> to vector<16xf32>
    %429 = vector.shape_cast %428 : vector<16xf32> to vector<16x1xf32>
    %cst_98 = arith.constant 3.200000e+01 : f32
    %430 = vector.broadcast %cst_98 : f32 to vector<16x1xf32>
    %431 = arith.divf %429, %430 : vector<16x1xf32>
    %432 = vector.broadcast %424 : vector<16x1xf32> to vector<16x32xf32>
    %433 = arith.subf %416, %432 : vector<16x32xf32>
    %cst_99 = arith.constant 9.99999997E-7 : f32
    %434 = vector.broadcast %cst_99 : f32 to vector<16x1xf32>
    %435 = arith.addf %431, %434 : vector<16x1xf32>
    %436 = math.rsqrt %435 : vector<16x1xf32>
    %437 = vector.broadcast %436 : vector<16x1xf32> to vector<16x32xf32>
    %438 = arith.mulf %433, %437 : vector<16x32xf32>
    %439 = vector.shape_cast %418 : vector<32xf32> to vector<1x32xf32>
    %440 = vector.broadcast %439 : vector<1x32xf32> to vector<16x32xf32>
    %441 = arith.mulf %438, %440 : vector<16x32xf32>
    %442 = vector.shape_cast %420 : vector<32xf32> to vector<1x32xf32>
    %443 = vector.broadcast %442 : vector<1x32xf32> to vector<16x32xf32>
    %444 = arith.addf %441, %443 : vector<16x32xf32>
    %c0_100 = arith.constant 0 : index
    %c0_101 = arith.constant 0 : index
    %445 = vector.load %arg5[%c0_100, %c0_101] : memref<16x32xf32, #tpu.memory_space<vmem>>, vector<16x32xf32>
    tpu.vector_store %arg5[%c0_100, %c0_101], %444 {strides = array<i32>} : memref<16x32xf32, #tpu.memory_space<vmem>>, vector<16x32xf32>,
    return
  }
}

</mosaic_0001>

<llo_original>
// kernel: decoder_forward.1
$region0: #{decoder_forward.1}
  #allocation0 [shape = 'u32[]', space=smem, size = 0x4, offset = 0x4, fixed_abs, tag = 'smem constant byte address 0x4 - core index']
  #allocation1 [shape = 'u32[144,128]{1,0:T(1,128)}', space=vmem, size = 0x12000, scoped, tag = 'internal scratch']
  %s0 = inlined_call_operand.vmem [shape: f32[32,32], index: 0, kind: input, shape index: {}]
  %s1 = inlined_call_operand.vmem [shape: f32[16,32], index: 1, kind: input, shape index: {}]
  %s2 = inlined_call_operand.vmem [shape: f32[2,96,32], index: 2, kind: input, shape index: {}]
  %s3 = inlined_call_operand.vmem [shape: f32[4,32,64], index: 3, kind: input, shape index: {}]
  %s4 = inlined_call_operand.vmem [shape: f32[18,64], index: 4, kind: input, shape index: {}]
  %s5 = inlined_call_operand.hbm [shape: f32[16,32], index: 5, kind: output, shape index: {}]
  %s6 = sld [smem:[#allocation0]]
  $region30: #{decoder_forward.1} parent=0
    _
  %s8 = ssub.s32 1, %s6
  %s9 = scalar_select 0, %s8, %s6
  $region1: #{decoder_forward.1} parent=0
    #allocation2 [shape = 'u8[8192]{0}', space=vmem, size = 0x2000, scoped, tag = 'output window, operand 0, single buffered']
    #allocation3 [shape = 's32[1]{0}', space=sflag, size = 0x4, scoped, tag = 'scoped memory for decoder_forward.1']
    %10 = vsyncpa [#allocation3], 0
    // Predicated region
    $region2: #{decoder_forward.1} parent=1 // pred_check
      _
    $region3: #{decoder_forward.1} parent=1 // pred_check_branch
      %12 = sbr.rel (0) target = $region5
    $region4: #{decoder_forward.1} parent=1 // pred_region
      _
    $region5: #{decoder_forward.1} parent=1 // pred_fallthru
      _
    // Predicated region
    $region6: #{decoder_forward.1} parent=1 // pred_check
      _
    $region7: #{decoder_forward.1} parent=1 // pred_check_branch
      %14 = sbr.rel (0) target = $region9
    $region8: #{decoder_forward.1} parent=1 // pred_region
      _
    $region9: #{decoder_forward.1} parent=1 // pred_fallthru
      _
    // Predicated region
    $region10: #{decoder_forward.1} parent=1 // pred_check
      _
    $region11: #{decoder_forward.1} parent=1 // pred_check_branch
      %16 = sbr.rel (0) target = $region13
    $region12: #{decoder_forward.1} parent=1 // pred_region
      _
    $region13: #{decoder_forward.1} parent=1 // pred_fallthru
      _
    // Predicated region
    $region14: #{decoder_forward.1} parent=1 // pred_check
      _
    $region15: #{decoder_forward.1} parent=1 // pred_check_branch
      %18 = sbr.rel (0) target = $region17
    $region16: #{decoder_forward.1} parent=1 // pred_region
      _
    $region17: #{decoder_forward.1} parent=1 // pred_fallthru
      _
    // Predicated region
    $region18: #{decoder_forward.1} parent=1 // pred_check
      _
    $region19: #{decoder_forward.1} parent=1 // pred_check_branch
      %20 = sbr.rel (0) target = $region21
    $region20: #{decoder_forward.1} parent=1 // pred_region
      _
    $region21: #{decoder_forward.1} parent=1 // pred_fallthru
      _
    %v21 = vld [vmem:[%s0] sm:$0xff]
    %v22 = vld [vmem:[%s0 + $0x8] sm:$0xff]
    %v23 = vld [vmem:[%s0 + $0x10] sm:$0xff]
    %v24 = vld [vmem:[%s0 + $0x18] sm:$0xff]
    %v25 = vld [vmem:[%s1] sm:$0xff]
    %v26 = vld [vmem:[%s1 + $0x8] sm:$0xff]
    %v27 = vld [vmem:[%s4] sm:$0xff]
    %v28 = vld [vmem:[%s4 + $0x8] sm:$0xff]
    %v29 = vld [vmem:[%s4 + $0x10] sm:$0x3]
    %v30 = vld [vmem:[%s2] sm:$0xff]
    %v31 = vld [vmem:[%s2 + $0x8] sm:$0xff]
    %v32 = vld [vmem:[%s2 + $0x10] sm:$0xff]
    %v33 = vld [vmem:[%s2 + $0x18] sm:$0xff]
    %v34 = vld [vmem:[%s2 + $0x20] sm:$0xff]
    %v35 = vld [vmem:[%s2 + $0x28] sm:$0xff]
    %v36 = vld [vmem:[%s2 + $0x30] sm:$0xff]
    %v37 = vld [vmem:[%s2 + $0x38] sm:$0xff]
    %v38 = vld [vmem:[%s2 + $0x40] sm:$0xff]
    %v39 = vld [vmem:[%s2 + $0x48] sm:$0xff]
    %v40 = vld [vmem:[%s2 + $0x50] sm:$0xff]
    %v41 = vld [vmem:[%s2 + $0x58] sm:$0xff]
    %v42 = vld [vmem:[%s3] sm:$0xff]
    %v43 = vld [vmem:[%s3 + $0x8] sm:$0xff]
    %v44 = vld [vmem:[%s3 + $0x10] sm:$0xff]
    %v45 = vld [vmem:[%s3 + $0x18] sm:$0xff]
    %s46 = scalar_lea.vmem %s3, 32
    %v47 = vld [vmem:[%s46] sm:$0xff]
    %v48 = vld [vmem:[%s46 + $0x8] sm:$0xff]
    %v49 = vld [vmem:[%s46 + $0x10] sm:$0xff]
    %v50 = vld [vmem:[%s46 + $0x18] sm:$0xff]
    %vm51 = vcmask 261120
    %v52 = vsel %vm51, %v25, 0.0
    %53 = vadd.xlane.f32.xlu0 %v52
    %v54 = vpop.xlane.xlu0 %53
    %v55 = vsel %vm51, %v26, 0.0
    %56 = vadd.xlane.f32.xlu0 %v55
    %v57 = vpop.xlane.xlu0 %56
    %v58 = vrcp.pop 32.0
    %v59 = vmul.f32 %v54, %v58
    %v60 = vmul.f32 %v57, %v58
    %v61 = vsub.f32 %v25, %v59
    %v62 = vsub.f32 %v26, %v60
    %v63 = vmul.f32 %v61, %v61
    %v64 = vmul.f32 %v62, %v62
    %v65 = vsel %vm51, %v63, 0.0
    %66 = vadd.xlane.f32.xlu0 %v65
    %v67 = vpop.xlane.xlu0 %66
    %v68 = vsel %vm51, %v64, 0.0
    %69 = vadd.xlane.f32.xlu0 %v68
    %v70 = vpop.xlane.xlu0 %69
    %v71 = vmul.f32 %v67, %v58
    %v72 = vmul.f32 %v70, %v58
    %v73 = vadd.f32 %v71, 1e-06
    %v74 = vadd.f32 %v72, 1e-06
    %v75 = vrsqrt.pop %v73
    %v76 = vrsqrt.pop %v74
    %v77 = vmul.f32 %v61, %v75
    %v78 = vmul.f32 %v62, %v76
    %v79 = vlaneseq
    %v80 = vshrl.u32 %v79, 7
    %v81 = vsub.s32 4, %v80
    %v82 = vrot.slane %v27, %v81
    %v83 = vmul.f32 %v77, %v82
    %v84 = vmul.f32 %v78, %v82
    %v85 = vlaneseq
    %v86 = vshrl.u32 %v85, 7
    %v87 = vsub.s32 5, %v86
    %v88 = vrot.slane %v27, %v87
    %v89 = vadd.f32 %v83, %v88
    %v90 = vadd.f32 %v84, %v88
    %v91 = vlaneseq
    %v92 = vshrl.u32 %v91, 7
    %v93 = vsub.s32 0, %v92
    %v94 = vrot.slane %v27, %v93
    %v96 = vsel %vm51, %v89, 0
    %v99 = vsel %vm51, %v90, 0
    %101 = vmatprep.subr.mxu0 0.0
    %102 = vmatpush1.msra.mxu0 %v30
    %103 = vmatprep.subr.mxu0 0.0
    %104 = vmatpush1.msra.mxu0 %v31
    %105 = vmatprep.subr.mxu0 0.0
    %106 = vmatpush1.msra.mxu0 %v32
    %107 = vmatprep.subr.mxu0 0.0
    %108 = vmatpush1.msra.mxu0 %v33
    %109 = vmatprep.subr.mxu0 0.0
    %110 = vmatpush1.msra.mxu0 0.0
    %111 = vmatprep.subr.mxu0 0.0
    %112 = vmatpush1.msra.mxu0 0.0
    %113 = vmatprep.subr.mxu0 0.0
    %114 = vmatpush1.msra.mxu0 0.0
    %115 = vmatprep.subr.mxu0 0.0
    %116 = vmatpush1.msra.mxu0 0.0
    %117 = vmatprep.subr.mxu0 0.0
    %118 = vmatpush1.msra.mxu0 0.0
    %119 = vmatprep.subr.mxu0 0.0
    %120 = vmatpush1.msra.mxu0 0.0
    %121 = vmatprep.subr.mxu0 0.0
    %122 = vmatpush1.msra.mxu0 0.0
    %123 = vmatprep.subr.mxu0 0.0
    %124 = vmatpush1.msra.mxu0 0.0
    %125 = vmatprep.subr.mxu0 0.0
    %126 = vmatpush1.msra.mxu0 0.0
    %127 = vmatprep.subr.mxu0 0.0
    %128 = vmatpush1.msra.mxu0 0.0
    %129 = vmatprep.subr.mxu0 0.0
    %130 = vmatpush1.msra.mxu0 0.0
    %131 = vmatprep.subr.mxu0 0.0
    %132 = vmatpush1.msra.mxu0 0.0
    %133 = vmatprep.subr.mxu0 0.0
    %134 = vmatpush1.msra.mxu0 0.0
    %135 = vmatprep.subr.mxu0 0.0
    %136 = vmatpush1.msra.mxu0 0.0
    %137 = vmatprep.subr.mxu0 0.0
    %138 = vmatpush1.msra.mxu0 0.0
    %139 = vmatprep.subr.mxu0 0.0
    %140 = vmatpush1.msra.mxu0 0.0
    %141 = vmatprep.subr.mxu0 0.0
    %142 = vmatpush1.msra.mxu0 0.0
    %143 = vmatprep.subr.mxu0 0.0
    %144 = vmatpush1.msra.mxu0 0.0
    %145 = vmatprep.subr.mxu0 0.0
    %146 = vmatpush1.msra.mxu0 0.0
    %147 = vmatprep.subr.mxu0 0.0
    %148 = vmatpush1.msra.mxu0 0.0
    %149 = vmatprep.subr.mxu0 0.0
    %150 = vmatpush1.msra.mxu0 0.0
    %151 = vmatprep.subr.mxu0 0.0
    %152 = vmatpush1.msra.mxu0 0.0
    %153 = vmatprep.subr.mxu0 0.0
    %154 = vmatpush1.msra.mxu0 0.0
    %155 = vmatprep.subr.mxu0 0.0
    %156 = vmatpush1.msra.mxu0 0.0
    %157 = vmatprep.subr.mxu0 0.0
    %158 = vmatpush1.msra.mxu0 0.0
    %159 = vmatprep.subr.mxu0 0.0
    %160 = vmatpush1.msra.mxu0 0.0
    %161 = vmatprep.subr.mxu0 0.0
    %162 = vmatpush1.msra.mxu0 0.0
    %163 = vmatprep.subr.mxu0 0.0
    %164 = vmatpush1.msra.mxu0 0.0
    %165 = vmatprep.mubr.f32.mxu0 0.0
    %166 = vmatmul.mubr.f32.gmra.mrb[0].mxu0 %v96
    %v167 = vpop.f32.mrb[0].mxu0
    %v168 = vadd.f32 %v94, %v167
    %v169 = vpop.f32.mrb[0].mxu0
    %170 = vmatprep.mubr.f32.mxu0 0.0
    %171 = vmatmul.mubr.f32.gmra.mrb[0].mxu0 %v99
    %v172 = vpop.f32.mrb[0].mxu0
    %v173 = vadd.f32 %v94, %v172
    %v174 = vpop.f32.mrb[0].mxu0
    %175 = vdwg.mxu0
    %v176 = vlaneseq
    %v177 = vshrl.u32 %v176, 7
    %v178 = vsub.s32 1, %v177
    %v179 = vrot.slane %v27, %v178
    %v181 = vsel %vm51, %v21, 0
    %v184 = vsel %vm51, %v22, 0
    %v187 = vsel %vm51, %v23, 0
    %v190 = vsel %vm51, %v24, 0
    %192 = vmatprep.subr.mxu0 0.0
    %193 = vmatpush1.msra.mxu0 %v42
    %194 = vmatprep.subr.mxu0 0.0
    %195 = vmatpush1.msra.mxu0 %v43
    %196 = vmatprep.subr.mxu0 0.0
    %197 = vmatpush1.msra.mxu0 %v44
    %198 = vmatprep.subr.mxu0 0.0
    %199 = vmatpush1.msra.mxu0 %v45
    %200 = vmatprep.subr.mxu0 0.0
    %201 = vmatpush1.msra.mxu0 0.0
    %202 = vmatprep.subr.mxu0 0.0
    %203 = vmatpush1.msra.mxu0 0.0
    %204 = vmatprep.subr.mxu0 0.0
    %205 = vmatpush1.msra.mxu0 0.0
    %206 = vmatprep.subr.mxu0 0.0
    %207 = vmatpush1.msra.mxu0 0.0
    %208 = vmatprep.subr.mxu0 0.0
    %209 = vmatpush1.msra.mxu0 0.0
    %210 = vmatprep.subr.mxu0 0.0
    %211 = vmatpush1.msra.mxu0 0.0
    %212 = vmatprep.subr.mxu0 0.0
    %213 = vmatpush1.msra.mxu0 0.0
    %214 = vmatprep.subr.mxu0 0.0
    %215 = vmatpush1.msra.mxu0 0.0
    %216 = vmatprep.subr.mxu0 0.0
    %217 = vmatpush1.msra.mxu0 0.0
    %218 = vmatprep.subr.mxu0 0.0
    %219 = vmatpush1.msra.mxu0 0.0
    %220 = vmatprep.subr.mxu0 0.0
    %221 = vmatpush1.msra.mxu0 0.0
    %222 = vmatprep.subr.mxu0 0.0
    %223 = vmatpush1.msra.mxu0 0.0
    %224 = vmatprep.subr.mxu0 0.0
    %225 = vmatpush1.msra.mxu0 0.0
    %226 = vmatprep.subr.mxu0 0.0
    %227 = vmatpush1.msra.mxu0 0.0
    %228 = vmatprep.subr.mxu0 0.0
    %229 = vmatpush1.msra.mxu0 0.0
    %230 = vmatprep.subr.mxu0 0.0
    %231 = vmatpush1.msra.mxu0 0.0
    %232 = vmatprep.subr.mxu0 0.0
    %233 = vmatpush1.msra.mxu0 0.0
    %234 = vmatprep.subr.mxu0 0.0
    %235 = vmatpush1.msra.mxu0 0.0
    %236 = vmatprep.subr.mxu0 0.0
    %237 = vmatpush1.msra.mxu0 0.0
    %238 = vmatprep.subr.mxu0 0.0
    %239 = vmatpush1.msra.mxu0 0.0
    %240 = vmatprep.subr.mxu0 0.0
    %241 = vmatpush1.msra.mxu0 0.0
    %242 = vmatprep.subr.mxu0 0.0
    %243 = vmatpush1.msra.mxu0 0.0
    %244 = vmatprep.subr.mxu0 0.0
    %245 = vmatpush1.msra.mxu0 0.0
    %246 = vmatprep.subr.mxu0 0.0
    %247 = vmatpush1.msra.mxu0 0.0
    %248 = vmatprep.subr.mxu0 0.0
    %249 = vmatpush1.msra.mxu0 0.0
    %250 = vmatprep.subr.mxu0 0.0
    %251 = vmatpush1.msra.mxu0 0.0
    %252 = vmatprep.subr.mxu0 0.0
    %253 = vmatpush1.msra.mxu0 0.0
    %254 = vmatprep.subr.mxu0 0.0
    %255 = vmatpush1.msra.mxu0 0.0
    %256 = vmatprep.mubr.f32.mxu0 0.0
    %257 = vmatmul.mubr.f32.gmra.mrb[0].mxu0 %v181
    %v258 = vpop.f32.mrb[0].mxu0
    %v259 = vadd.f32 %v179, %v258
    %v260 = vpop.f32.mrb[0].mxu0
    %261 = vmatprep.mubr.f32.mxu0 0.0
    %262 = vmatmul.mubr.f32.gmra.mrb[0].mxu0 %v184
    %v263 = vpop.f32.mrb[0].mxu0
    %v264 = vadd.f32 %v179, %v263
    %v265 = vpop.f32.mrb[0].mxu0
    %266 = vmatprep.mubr.f32.mxu0 0.0
    %267 = vmatmul.mubr.f32.gmra.mrb[0].mxu0 %v187
    %v268 = vpop.f32.mrb[0].mxu0
    %v269 = vadd.f32 %v179, %v268
    %v270 = vpop.f32.mrb[0].mxu0
    %271 = vmatprep.mubr.f32.mxu0 0.0
    %272 = vmatmul.mubr.f32.gmra.mrb[0].mxu0 %v190
    %v273 = vpop.f32.mrb[0].mxu0
    %v274 = vadd.f32 %v179, %v273
    %v275 = vpop.f32.mrb[0].mxu0
    %276 = vdwg.mxu0
    %279 = vrot.lane.b32.xlu0 %v168, 120
    %v280 = vpop.permute.xlu0 %279
    %281 = vrot.lane.b32.xlu0 %v173, 120
    %v282 = vpop.permute.xlu0 %281
    %283 = vrot.lane.b32.xlu0 %v168, 112
    %v284 = vpop.permute.xlu0 %283
    %285 = vrot.lane.b32.xlu0 %v173, 112
    %v286 = vpop.permute.xlu0 %285
    %287 = vrot.lane.b32.xlu0 %v168, 104
    %v288 = vpop.permute.xlu0 %287
    %289 = vrot.lane.b32.xlu0 %v173, 104
    %v290 = vpop.permute.xlu0 %289
    %295 = vrot.lane.b32.xlu0 %v259, 120
    %v296 = vpop.permute.xlu0 %295
    %297 = vrot.lane.b32.xlu0 %v264, 120
    %v298 = vpop.permute.xlu0 %297
    %299 = vrot.lane.b32.xlu0 %v269, 120
    %v300 = vpop.permute.xlu0 %299
    %301 = vrot.lane.b32.xlu0 %v274, 120
    %v302 = vpop.permute.xlu0 %301
    %303 = vrot.lane.b32.xlu0 %v259, 112
    %v304 = vpop.permute.xlu0 %303
    %305 = vrot.lane.b32.xlu0 %v264, 112
    %v306 = vpop.permute.xlu0 %305
    %307 = vrot.lane.b32.xlu0 %v269, 112
    %v308 = vpop.permute.xlu0 %307
    %309 = vrot.lane.b32.xlu0 %v274, 112
    %v310 = vpop.permute.xlu0 %309
    %311 = vrot.lane.b32.xlu0 %v259, 104
    %v312 = vpop.permute.xlu0 %311
    %313 = vrot.lane.b32.xlu0 %v264, 104
    %v314 = vpop.permute.xlu0 %313
    %315 = vrot.lane.b32.xlu0 %v269, 104
    %v316 = vpop.permute.xlu0 %315
    %317 = vrot.lane.b32.xlu0 %v274, 104
    %v318 = vpop.permute.xlu0 %317
    %vm319 = vcmask 64512
    %v320 = vsel %vm319, %v168, 0
    %v322 = vsel %vm319, %v259, 0
    %v324 = vsel %vm319, %v264, 0
    %326 = vmatprep.subr.mxu0 0.0
    %327 = vmatpush1.xpose.msra.mxu0 %v322
    %328 = vmatprep.subr.mxu0 0.0
    %329 = vmatpush1.xpose.msra.mxu0 %v324
    %330 = vmatprep.subr.mxu0 0.0
    %331 = vmatpush1.xpose.msra.mxu0 0.0
    %332 = vmatprep.subr.mxu0 0.0
    %333 = vmatpush1.xpose.msra.mxu0 0.0
    %334 = vmatprep.subr.mxu0 0.0
    %335 = vmatpush1.xpose.msra.mxu0 0.0
    %336 = vmatprep.subr.mxu0 0.0
    %337 = vmatpush1.xpose.msra.mxu0 0.0
    %338 = vmatprep.subr.mxu0 0.0
    %339 = vmatpush1.xpose.msra.mxu0 0.0
    %340 = vmatprep.subr.mxu0 0.0
    %341 = vmatpush1.xpose.msra.mxu0 0.0
    %342 = vmatprep.subr.mxu0 0.0
    %343 = vmatpush1.xpose.msra.mxu0 0.0
    %344 = vmatprep.subr.mxu0 0.0
    %345 = vmatpush1.xpose.msra.mxu0 0.0
    %346 = vmatprep.subr.mxu0 0.0
    %347 = vmatpush1.xpose.msra.mxu0 0.0
    %348 = vmatprep.subr.mxu0 0.0
    %349 = vmatpush1.xpose.msra.mxu0 0.0
    %350 = vmatprep.subr.mxu0 0.0
    %351 = vmatpush1.xpose.msra.mxu0 0.0
    %352 = vmatprep.subr.mxu0 0.0
    %353 = vmatpush1.xpose.msra.mxu0 0.0
    %354 = vmatprep.subr.mxu0 0.0
    %355 = vmatpush1.xpose.msra.mxu0 0.0
    %356 = vmatprep.subr.mxu0 0.0
    %357 = vmatpush1.xpose.msra.mxu0 0.0
    %358 = vmatprep.subr.mxu0 0.0
    %359 = vmatpush1.xpose.msra.mxu0 0.0
    %360 = vmatprep.subr.mxu0 0.0
    %361 = vmatpush1.xpose.msra.mxu0 0.0
    %362 = vmatprep.subr.mxu0 0.0
    %363 = vmatpush1.xpose.msra.mxu0 0.0
    %364 = vmatprep.subr.mxu0 0.0
    %365 = vmatpush1.xpose.msra.mxu0 0.0
    %366 = vmatprep.subr.mxu0 0.0
    %367 = vmatpush1.xpose.msra.mxu0 0.0
    %368 = vmatprep.subr.mxu0 0.0
    %369 = vmatpush1.xpose.msra.mxu0 0.0
    %370 = vmatprep.subr.mxu0 0.0
    %371 = vmatpush1.xpose.msra.mxu0 0.0
    %372 = vmatprep.subr.mxu0 0.0
    %373 = vmatpush1.xpose.msra.mxu0 0.0
    %374 = vmatprep.subr.mxu0 0.0
    %375 = vmatpush1.xpose.msra.mxu0 0.0
    %376 = vmatprep.subr.mxu0 0.0
    %377 = vmatpush1.xpose.msra.mxu0 0.0
    %378 = vmatprep.subr.mxu0 0.0
    %379 = vmatpush1.xpose.msra.mxu0 0.0
    %380 = vmatprep.subr.mxu0 0.0
    %381 = vmatpush1.xpose.msra.mxu0 0.0
    %382 = vmatprep.subr.mxu0 0.0
    %383 = vmatpush1.xpose.msra.mxu0 0.0
    %384 = vmatprep.subr.mxu0 0.0
    %385 = vmatpush1.xpose.msra.mxu0 0.0
    %386 = vmatprep.subr.mxu0 0.0
    %387 = vmatpush1.xpose.msra.mxu0 0.0
    %388 = vmatprep.subr.mxu0 0.0
    %389 = vmatpush1.xpose.msra.mxu0 0.0
    %390 = vmatprep.mubr.f32.mxu0 0.0
    %391 = vmatmul.mubr.f32.gmra.mrb[0].mxu0 %v320
    %v392 = vpop.f32.mrb[0].mxu0
    %v393 = vadd.f32 0.0, %v392
    %v394 = vpop.f32.mrb[0].mxu0
    %395 = vdwg.mxu0
    %v396 = vsel %vm319, %v280, 0
    %v398 = vsel %vm319, %v296, 0
    %v400 = vsel %vm319, %v298, 0
    %402 = vmatprep.subr.mxu0 0.0
    %403 = vmatpush1.xpose.msra.mxu0 %v398
    %404 = vmatprep.subr.mxu0 0.0
    %405 = vmatpush1.xpose.msra.mxu0 %v400
    %406 = vmatprep.subr.mxu0 0.0
    %407 = vmatpush1.xpose.msra.mxu0 0.0
    %408 = vmatprep.subr.mxu0 0.0
    %409 = vmatpush1.xpose.msra.mxu0 0.0
    %410 = vmatprep.subr.mxu0 0.0
    %411 = vmatpush1.xpose.msra.mxu0 0.0
    %412 = vmatprep.subr.mxu0 0.0
    %413 = vmatpush1.xpose.msra.mxu0 0.0
    %414 = vmatprep.subr.mxu0 0.0
    %415 = vmatpush1.xpose.msra.mxu0 0.0
    %416 = vmatprep.subr.mxu0 0.0
    %417 = vmatpush1.xpose.msra.mxu0 0.0
    %418 = vmatprep.subr.mxu0 0.0
    %419 = vmatpush1.xpose.msra.mxu0 0.0
    %420 = vmatprep.subr.mxu0 0.0
    %421 = vmatpush1.xpose.msra.mxu0 0.0
    %422 = vmatprep.subr.mxu0 0.0
    %423 = vmatpush1.xpose.msra.mxu0 0.0
    %424 = vmatprep.subr.mxu0 0.0
    %425 = vmatpush1.xpose.msra.mxu0 0.0
    %426 = vmatprep.subr.mxu0 0.0
    %427 = vmatpush1.xpose.msra.mxu0 0.0
    %428 = vmatprep.subr.mxu0 0.0
    %429 = vmatpush1.xpose.msra.mxu0 0.0
    %430 = vmatprep.subr.mxu0 0.0
    %431 = vmatpush1.xpose.msra.mxu0 0.0
    %432 = vmatprep.subr.mxu0 0.0
    %433 = vmatpush1.xpose.msra.mxu0 0.0
    %434 = vmatprep.subr.mxu0 0.0
    %435 = vmatpush1.xpose.msra.mxu0 0.0
    %436 = vmatprep.subr.mxu0 0.0
    %437 = vmatpush1.xpose.msra.mxu0 0.0
    %438 = vmatprep.subr.mxu0 0.0
    %439 = vmatpush1.xpose.msra.mxu0 0.0
    %440 = vmatprep.subr.mxu0 0.0
    %441 = vmatpush1.xpose.msra.mxu0 0.0
    %442 = vmatprep.subr.mxu0 0.0
    %443 = vmatpush1.xpose.msra.mxu0 0.0
    %444 = vmatprep.subr.mxu0 0.0
    %445 = vmatpush1.xpose.msra.mxu0 0.0
    %446 = vmatprep.subr.mxu0 0.0
    %447 = vmatpush1.xpose.msra.mxu0 0.0
    %448 = vmatprep.subr.mxu0 0.0
    %449 = vmatpush1.xpose.msra.mxu0 0.0
    %450 = vmatprep.subr.mxu0 0.0
    %451 = vmatpush1.xpose.msra.mxu0 0.0
    %452 = vmatprep.subr.mxu0 0.0
    %453 = vmatpush1.xpose.msra.mxu0 0.0
    %454 = vmatprep.subr.mxu0 0.0
    %455 = vmatpush1.xpose.msra.mxu0 0.0
    %456 = vmatprep.subr.mxu0 0.0
    %457 = vmatpush1.xpose.msra.mxu0 0.0
    %458 = vmatprep.subr.mxu0 0.0
    %459 = vmatpush1.xpose.msra.mxu0 0.0
    %460 = vmatprep.subr.mxu0 0.0
    %461 = vmatpush1.xpose.msra.mxu0 0.0
    %462 = vmatprep.subr.mxu0 0.0
    %463 = vmatpush1.xpose.msra.mxu0 0.0
    %464 = vmatprep.subr.mxu0 0.0
    %465 = vmatpush1.xpose.msra.mxu0 0.0
    %466 = vmatprep.mubr.f32.mxu0 0.0
    %467 = vmatmul.mubr.f32.gmra.mrb[0].mxu0 %v396
    %v468 = vpop.f32.mrb[0].mxu0
    %v469 = vadd.f32 0.0, %v468
    %v470 = vpop.f32.mrb[0].mxu0
    %471 = vdwg.mxu0
    %v472 = vsel %vm319, %v284, 0
    %v474 = vsel %vm319, %v304, 0
    %v476 = vsel %vm319, %v306, 0
    %478 = vmatprep.subr.mxu0 0.0
    %479 = vmatpush1.xpose.msra.mxu0 %v474
    %480 = vmatprep.subr.mxu0 0.0
    %481 = vmatpush1.xpose.msra.mxu0 %v476
    %482 = vmatprep.subr.mxu0 0.0
    %483 = vmatpush1.xpose.msra.mxu0 0.0
    %484 = vmatprep.subr.mxu0 0.0
    %485 = vmatpush1.xpose.msra.mxu0 0.0
    %486 = vmatprep.subr.mxu0 0.0
    %487 = vmatpush1.xpose.msra.mxu0 0.0
    %488 = vmatprep.subr.mxu0 0.0
    %489 = vmatpush1.xpose.msra.mxu0 0.0
    %490 = vmatprep.subr.mxu0 0.0
    %491 = vmatpush1.xpose.msra.mxu0 0.0
    %492 = vmatprep.subr.mxu0 0.0
    %493 = vmatpush1.xpose.msra.mxu0 0.0
    %494 = vmatprep.subr.mxu0 0.0
    %495 = vmatpush1.xpose.msra.mxu0 0.0
    %496 = vmatprep.subr.mxu0 0.0
    %497 = vmatpush1.xpose.msra.mxu0 0.0
    %498 = vmatprep.subr.mxu0 0.0
    %499 = vmatpush1.xpose.msra.mxu0 0.0
    %500 = vmatprep.subr.mxu0 0.0
    %501 = vmatpush1.xpose.msra.mxu0 0.0
    %502 = vmatprep.subr.mxu0 0.0
    %503 = vmatpush1.xpose.msra.mxu0 0.0
    %504 = vmatprep.subr.mxu0 0.0
    %505 = vmatpush1.xpose.msra.mxu0 0.0
    %506 = vmatprep.subr.mxu0 0.0
    %507 = vmatpush1.xpose.msra.mxu0 0.0
    %508 = vmatprep.subr.mxu0 0.0
    %509 = vmatpush1.xpose.msra.mxu0 0.0
    %510 = vmatprep.subr.mxu0 0.0
    %511 = vmatpush1.xpose.msra.mxu0 0.0
    %512 = vmatprep.subr.mxu0 0.0
    %513 = vmatpush1.xpose.msra.mxu0 0.0
    %514 = vmatprep.subr.mxu0 0.0
    %515 = vmatpush1.xpose.msra.mxu0 0.0
    %516 = vmatprep.subr.mxu0 0.0
    %517 = vmatpush1.xpose.msra.mxu0 0.0
    %518 = vmatprep.subr.mxu0 0.0
    %519 = vmatpush1.xpose.msra.mxu0 0.0
    %520 = vmatprep.subr.mxu0 0.0
    %521 = vmatpush1.xpose.msra.mxu0 0.0
    %522 = vmatprep.subr.mxu0 0.0
    %523 = vmatpush1.xpose.msra.mxu0 0.0
    %524 = vmatprep.subr.mxu0 0.0
    %525 = vmatpush1.xpose.msra.mxu0 0.0
    %526 = vmatprep.subr.mxu0 0.0
    %527 = vmatpush1.xpose.msra.mxu0 0.0
    %528 = vmatprep.subr.mxu0 0.0
    %529 = vmatpush1.xpose.msra.mxu0 0.0
    %530 = vmatprep.subr.mxu0 0.0
    %531 = vmatpush1.xpose.msra.mxu0 0.0
    %532 = vmatprep.subr.mxu0 0.0
    %533 = vmatpush1.xpose.msra.mxu0 0.0
    %534 = vmatprep.subr.mxu0 0.0
    %535 = vmatpush1.xpose.msra.mxu0 0.0
    %536 = vmatprep.subr.mxu0 0.0
    %537 = vmatpush1.xpose.msra.mxu0 0.0
    %538 = vmatprep.subr.mxu0 0.0
    %539 = vmatpush1.xpose.msra.mxu0 0.0
    %540 = vmatprep.subr.mxu0 0.0
    %541 = vmatpush1.xpose.msra.mxu0 0.0
    %542 = vmatprep.mubr.f32.mxu0 0.0
    %543 = vmatmul.mubr.f32.gmra.mrb[0].mxu0 %v472
    %v544 = vpop.f32.mrb[0].mxu0
    %v545 = vadd.f32 0.0, %v544
    %v546 = vpop.f32.mrb[0].mxu0
    %547 = vdwg.mxu0
    %v548 = vsel %vm319, %v288, 0
    %v550 = vsel %vm319, %v312, 0
    %v552 = vsel %vm319, %v314, 0
    %554 = vmatprep.subr.mxu0 0.0
    %555 = vmatpush1.xpose.msra.mxu0 %v550
    %556 = vmatprep.subr.mxu0 0.0
    %557 = vmatpush1.xpose.msra.mxu0 %v552
    %558 = vmatprep.subr.mxu0 0.0
    %559 = vmatpush1.xpose.msra.mxu0 0.0
    %560 = vmatprep.subr.mxu0 0.0
    %561 = vmatpush1.xpose.msra.mxu0 0.0
    %562 = vmatprep.subr.mxu0 0.0
    %563 = vmatpush1.xpose.msra.mxu0 0.0
    %564 = vmatprep.subr.mxu0 0.0
    %565 = vmatpush1.xpose.msra.mxu0 0.0
    %566 = vmatprep.subr.mxu0 0.0
    %567 = vmatpush1.xpose.msra.mxu0 0.0
    %568 = vmatprep.subr.mxu0 0.0
    %569 = vmatpush1.xpose.msra.mxu0 0.0
    %570 = vmatprep.subr.mxu0 0.0
    %571 = vmatpush1.xpose.msra.mxu0 0.0
    %572 = vmatprep.subr.mxu0 0.0
    %573 = vmatpush1.xpose.msra.mxu0 0.0
    %574 = vmatprep.subr.mxu0 0.0
    %575 = vmatpush1.xpose.msra.mxu0 0.0
    %576 = vmatprep.subr.mxu0 0.0
    %577 = vmatpush1.xpose.msra.mxu0 0.0
    %578 = vmatprep.subr.mxu0 0.0
    %579 = vmatpush1.xpose.msra.mxu0 0.0
    %580 = vmatprep.subr.mxu0 0.0
    %581 = vmatpush1.xpose.msra.mxu0 0.0
    %582 = vmatprep.subr.mxu0 0.0
    %583 = vmatpush1.xpose.msra.mxu0 0.0
    %584 = vmatprep.subr.mxu0 0.0
    %585 = vmatpush1.xpose.msra.mxu0 0.0
    %586 = vmatprep.subr.mxu0 0.0
    %587 = vmatpush1.xpose.msra.mxu0 0.0
    %588 = vmatprep.subr.mxu0 0.0
    %589 = vmatpush1.xpose.msra.mxu0 0.0
    %590 = vmatprep.subr.mxu0 0.0
    %591 = vmatpush1.xpose.msra.mxu0 0.0
    %592 = vmatprep.subr.mxu0 0.0
    %593 = vmatpush1.xpose.msra.mxu0 0.0
    %594 = vmatprep.subr.mxu0 0.0
    %595 = vmatpush1.xpose.msra.mxu0 0.0
    %596 = vmatprep.subr.mxu0 0.0
    %597 = vmatpush1.xpose.msra.mxu0 0.0
    %598 = vmatprep.subr.mxu0 0.0
    %599 = vmatpush1.xpose.msra.mxu0 0.0
    %600 = vmatprep.subr.mxu0 0.0
    %601 = vmatpush1.xpose.msra.mxu0 0.0
    %602 = vmatprep.subr.mxu0 0.0
    %603 = vmatpush1.xpose.msra.mxu0 0.0
    %604 = vmatprep.subr.mxu0 0.0
    %605 = vmatpush1.xpose.msra.mxu0 0.0
    %606 = vmatprep.subr.mxu0 0.0
    %607 = vmatpush1.xpose.msra.mxu0 0.0
    %608 = vmatprep.subr.mxu0 0.0
    %609 = vmatpush1.xpose.msra.mxu0 0.0
    %610 = vmatprep.subr.mxu0 0.0
    %611 = vmatpush1.xpose.msra.mxu0 0.0
    %612 = vmatprep.subr.mxu0 0.0
    %613 = vmatpush1.xpose.msra.mxu0 0.0
    %614 = vmatprep.subr.mxu0 0.0
    %615 = vmatpush1.xpose.msra.mxu0 0.0
    %616 = vmatprep.subr.mxu0 0.0
    %617 = vmatpush1.xpose.msra.mxu0 0.0
    %618 = vmatprep.mubr.f32.mxu0 0.0
    %619 = vmatmul.mubr.f32.gmra.mrb[0].mxu0 %v548
    %v620 = vpop.f32.mrb[0].mxu0
    %v621 = vadd.f32 0.0, %v620
    %v622 = vpop.f32.mrb[0].mxu0
    %623 = vdwg.mxu0
    %vm624 = vcmask 130048
    %v625 = vsel %vm624, %v393, -inf
    %626 = vmax.xlane.f32.xlu0 %v625
    %v627 = vpop.xlane.xlu0 %626
    %v628 = vsel %vm624, %v469, -inf
    %629 = vmax.xlane.f32.xlu0 %v628
    %v630 = vpop.xlane.xlu0 %629
    %v631 = vsel %vm624, %v545, -inf
    %632 = vmax.xlane.f32.xlu0 %v631
    %v633 = vpop.xlane.xlu0 %632
    %v634 = vsel %vm624, %v621, -inf
    %635 = vmax.xlane.f32.xlu0 %v634
    %v636 = vpop.xlane.xlu0 %635
    %v637 = vsub.f32 %v393, %v627
    %v638 = vsub.f32 %v469, %v630
    %v639 = vsub.f32 %v545, %v633
    %v640 = vsub.f32 %v621, %v636
    %v641 = vmul.f32 %v637, 1.442695
    %v642 = vpow.pop %v641
    %v643 = vmul.f32 %v638, 1.442695
    %v644 = vpow.pop %v643
    %v645 = vmul.f32 %v639, 1.442695
    %v646 = vpow.pop %v645
    %v647 = vmul.f32 %v640, 1.442695
    %v648 = vpow.pop %v647
    %v649 = vsel %vm624, %v642, 0.0
    %650 = vadd.xlane.f32.xlu0 %v649
    %v651 = vpop.xlane.xlu0 %650
    %v652 = vsel %vm624, %v644, 0.0
    %653 = vadd.xlane.f32.xlu0 %v652
    %v654 = vpop.xlane.xlu0 %653
    %v655 = vsel %vm624, %v646, 0.0
    %656 = vadd.xlane.f32.xlu0 %v655
    %v657 = vpop.xlane.xlu0 %656
    %v658 = vsel %vm624, %v648, 0.0
    %659 = vadd.xlane.f32.xlu0 %v658
    %v660 = vpop.xlane.xlu0 %659
    %v661 = vrcp.pop %v651
    %v662 = vrcp.pop %v654
    %v663 = vrcp.pop %v657
    %v664 = vrcp.pop %v660
    %v665 = vmul.f32 %v642, %v661
    %v666 = vmul.f32 %v644, %v662
    %v667 = vmul.f32 %v646, %v663
    %v668 = vmul.f32 %v648, %v664
    %669 = vrot.lane.b32.xlu0 %v259, 96
    %v670 = vpop.permute.xlu0 %669
    %671 = vrot.lane.b32.xlu0 %v264, 96
    %v672 = vpop.permute.xlu0 %671
    %v676 = vsel %vm624, %v665, 0
    %678 = vmatprep.subr.mxu0 0.0
    %679 = vmatpush1.msra.mxu0 %v670
    %680 = vmatprep.subr.mxu0 0.0
    %681 = vmatpush1.msra.mxu0 %v672
    %682 = vmatprep.subr.mxu0 0.0
    %683 = vmatpush1.msra.mxu0 0.0
    %684 = vmatprep.subr.mxu0 0.0
    %685 = vmatpush1.msra.mxu0 0.0
    %686 = vmatprep.subr.mxu0 0.0
    %687 = vmatpush1.msra.mxu0 0.0
    %688 = vmatprep.subr.mxu0 0.0
    %689 = vmatpush1.msra.mxu0 0.0
    %690 = vmatprep.subr.mxu0 0.0
    %691 = vmatpush1.msra.mxu0 0.0
    %692 = vmatprep.subr.mxu0 0.0
    %693 = vmatpush1.msra.mxu0 0.0
    %694 = vmatprep.subr.mxu0 0.0
    %695 = vmatpush1.msra.mxu0 0.0
    %696 = vmatprep.subr.mxu0 0.0
    %697 = vmatpush1.msra.mxu0 0.0
    %698 = vmatprep.subr.mxu0 0.0
    %699 = vmatpush1.msra.mxu0 0.0
    %700 = vmatprep.subr.mxu0 0.0
    %701 = vmatpush1.msra.mxu0 0.0
    %702 = vmatprep.subr.mxu0 0.0
    %703 = vmatpush1.msra.mxu0 0.0
    %704 = vmatprep.subr.mxu0 0.0
    %705 = vmatpush1.msra.mxu0 0.0
    %706 = vmatprep.subr.mxu0 0.0
    %707 = vmatpush1.msra.mxu0 0.0
    %708 = vmatprep.subr.mxu0 0.0
    %709 = vmatpush1.msra.mxu0 0.0
    %710 = vmatprep.subr.mxu0 0.0
    %711 = vmatpush1.msra.mxu0 0.0
    %712 = vmatprep.subr.mxu0 0.0
    %713 = vmatpush1.msra.mxu0 0.0
    %714 = vmatprep.subr.mxu0 0.0
    %715 = vmatpush1.msra.mxu0 0.0
    %716 = vmatprep.subr.mxu0 0.0
    %717 = vmatpush1.msra.mxu0 0.0
    %718 = vmatprep.subr.mxu0 0.0
    %719 = vmatpush1.msra.mxu0 0.0
    %720 = vmatprep.subr.mxu0 0.0
    %721 = vmatpush1.msra.mxu0 0.0
    %722 = vmatprep.subr.mxu0 0.0
    %723 = vmatpush1.msra.mxu0 0.0
    %724 = vmatprep.subr.mxu0 0.0
    %725 = vmatpush1.msra.mxu0 0.0
    %726 = vmatprep.subr.mxu0 0.0
    %727 = vmatpush1.msra.mxu0 0.0
    %728 = vmatprep.subr.mxu0 0.0
    %729 = vmatpush1.msra.mxu0 0.0
    %730 = vmatprep.subr.mxu0 0.0
    %731 = vmatpush1.msra.mxu0 0.0
    %732 = vmatprep.subr.mxu0 0.0
    %733 = vmatpush1.msra.mxu0 0.0
    %734 = vmatprep.subr.mxu0 0.0
    %735 = vmatpush1.msra.mxu0 0.0
    %736 = vmatprep.subr.mxu0 0.0
    %737 = vmatpush1.msra.mxu0 0.0
    %738 = vmatprep.subr.mxu0 0.0
    %739 = vmatpush1.msra.mxu0 0.0
    %740 = vmatprep.subr.mxu0 0.0
    %741 = vmatpush1.msra.mxu0 0.0
    %742 = vmatprep.mubr.f32.mxu0 0.0
    %743 = vmatmul.mubr.f32.gmra.mrb[0].mxu0 %v676
    %v744 = vpop.f32.mrb[0].mxu0
    %v745 = vadd.f32 0.0, %v744
    %v746 = vpop.f32.mrb[0].mxu0
    %747 = vdwg.mxu0
    %748 = vrot.lane.b32.xlu0 %v296, 96
    %v749 = vpop.permute.xlu0 %748
    %750 = vrot.lane.b32.xlu0 %v298, 96
    %v751 = vpop.permute.xlu0 %750
    %v755 = vsel %vm624, %v666, 0
    %757 = vmatprep.subr.mxu0 0.0
    %758 = vmatpush1.msra.mxu0 %v749
    %759 = vmatprep.subr.mxu0 0.0
    %760 = vmatpush1.msra.mxu0 %v751
    %761 = vmatprep.subr.mxu0 0.0
    %762 = vmatpush1.msra.mxu0 0.0
    %763 = vmatprep.subr.mxu0 0.0
    %764 = vmatpush1.msra.mxu0 0.0
    %765 = vmatprep.subr.mxu0 0.0
    %766 = vmatpush1.msra.mxu0 0.0
    %767 = vmatprep.subr.mxu0 0.0
    %768 = vmatpush1.msra.mxu0 0.0
    %769 = vmatprep.subr.mxu0 0.0
    %770 = vmatpush1.msra.mxu0 0.0
    %771 = vmatprep.subr.mxu0 0.0
    %772 = vmatpush1.msra.mxu0 0.0
    %773 = vmatprep.subr.mxu0 0.0
    %774 = vmatpush1.msra.mxu0 0.0
    %775 = vmatprep.subr.mxu0 0.0
    %776 = vmatpush1.msra.mxu0 0.0
    %777 = vmatprep.subr.mxu0 0.0
    %778 = vmatpush1.msra.mxu0 0.0
    %779 = vmatprep.subr.mxu0 0.0
    %780 = vmatpush1.msra.mxu0 0.0
    %781 = vmatprep.subr.mxu0 0.0
    %782 = vmatpush1.msra.mxu0 0.0
    %783 = vmatprep.subr.mxu0 0.0
    %784 = vmatpush1.msra.mxu0 0.0
    %785 = vmatprep.subr.mxu0 0.0
    %786 = vmatpush1.msra.mxu0 0.0
    %787 = vmatprep.subr.mxu0 0.0
    %788 = vmatpush1.msra.mxu0 0.0
    %789 = vmatprep.subr.mxu0 0.0
    %790 = vmatpush1.msra.mxu0 0.0
    %791 = vmatprep.subr.mxu0 0.0
    %792 = vmatpush1.msra.mxu0 0.0
    %793 = vmatprep.subr.mxu0 0.0
    %794 = vmatpush1.msra.mxu0 0.0
    %795 = vmatprep.subr.mxu0 0.0
    %796 = vmatpush1.msra.mxu0 0.0
    %797 = vmatprep.subr.mxu0 0.0
    %798 = vmatpush1.msra.mxu0 0.0
    %799 = vmatprep.subr.mxu0 0.0
    %800 = vmatpush1.msra.mxu0 0.0
    %801 = vmatprep.subr.mxu0 0.0
    %802 = vmatpush1.msra.mxu0 0.0
    %803 = vmatprep.subr.mxu0 0.0
    %804 = vmatpush1.msra.mxu0 0.0
    %805 = vmatprep.subr.mxu0 0.0
    %806 = vmatpush1.msra.mxu0 0.0
    %807 = vmatprep.subr.mxu0 0.0
    %808 = vmatpush1.msra.mxu0 0.0
    %809 = vmatprep.subr.mxu0 0.0
    %810 = vmatpush1.msra.mxu0 0.0
    %811 = vmatprep.subr.mxu0 0.0
    %812 = vmatpush1.msra.mxu0 0.0
    %813 = vmatprep.subr.mxu0 0.0
    %814 = vmatpush1.msra.mxu0 0.0
    %815 = vmatprep.subr.mxu0 0.0
    %816 = vmatpush1.msra.mxu0 0.0
    %817 = vmatprep.subr.mxu0 0.0
    %818 = vmatpush1.msra.mxu0 0.0
    %819 = vmatprep.subr.mxu0 0.0
    %820 = vmatpush1.msra.mxu0 0.0
    %821 = vmatprep.mubr.f32.mxu0 0.0
    %822 = vmatmul.mubr.f32.gmra.mrb[0].mxu0 %v755
    %v823 = vpop.f32.mrb[0].mxu0
    %v824 = vadd.f32 0.0, %v823
    %v825 = vpop.f32.mrb[0].mxu0
    %826 = vdwg.mxu0
    %827 = vrot.lane.b32.xlu0 %v304, 96
    %v828 = vpop.permute.xlu0 %827
    %829 = vrot.lane.b32.xlu0 %v306, 96
    %v830 = vpop.permute.xlu0 %829
    %v834 = vsel %vm624, %v667, 0
    %836 = vmatprep.subr.mxu0 0.0
    %837 = vmatpush1.msra.mxu0 %v828
    %838 = vmatprep.subr.mxu0 0.0
    %839 = vmatpush1.msra.mxu0 %v830
    %840 = vmatprep.subr.mxu0 0.0
    %841 = vmatpush1.msra.mxu0 0.0
    %842 = vmatprep.subr.mxu0 0.0
    %843 = vmatpush1.msra.mxu0 0.0
    %844 = vmatprep.subr.mxu0 0.0
    %845 = vmatpush1.msra.mxu0 0.0
    %846 = vmatprep.subr.mxu0 0.0
    %847 = vmatpush1.msra.mxu0 0.0
    %848 = vmatprep.subr.mxu0 0.0
    %849 = vmatpush1.msra.mxu0 0.0
    %850 = vmatprep.subr.mxu0 0.0
    %851 = vmatpush1.msra.mxu0 0.0
    %852 = vmatprep.subr.mxu0 0.0
    %853 = vmatpush1.msra.mxu0 0.0
    %854 = vmatprep.subr.mxu0 0.0
    %855 = vmatpush1.msra.mxu0 0.0
    %856 = vmatprep.subr.mxu0 0.0
    %857 = vmatpush1.msra.mxu0 0.0
    %858 = vmatprep.subr.mxu0 0.0
    %859 = vmatpush1.msra.mxu0 0.0
    %860 = vmatprep.subr.mxu0 0.0
    %861 = vmatpush1.msra.mxu0 0.0
    %862 = vmatprep.subr.mxu0 0.0
    %863 = vmatpush1.msra.mxu0 0.0
    %864 = vmatprep.subr.mxu0 0.0
    %865 = vmatpush1.msra.mxu0 0.0
    %866 = vmatprep.subr.mxu0 0.0
    %867 = vmatpush1.msra.mxu0 0.0
    %868 = vmatprep.subr.mxu0 0.0
    %869 = vmatpush1.msra.mxu0 0.0
    %870 = vmatprep.subr.mxu0 0.0
    %871 = vmatpush1.msra.mxu0 0.0
    %872 = vmatprep.subr.mxu0 0.0
    %873 = vmatpush1.msra.mxu0 0.0
    %874 = vmatprep.subr.mxu0 0.0
    %875 = vmatpush1.msra.mxu0 0.0
    %876 = vmatprep.subr.mxu0 0.0
    %877 = vmatpush1.msra.mxu0 0.0
    %878 = vmatprep.subr.mxu0 0.0
    %879 = vmatpush1.msra.mxu0 0.0
    %880 = vmatprep.subr.mxu0 0.0
    %881 = vmatpush1.msra.mxu0 0.0
    %882 = vmatprep.subr.mxu0 0.0
    %883 = vmatpush1.msra.mxu0 0.0
    %884 = vmatprep.subr.mxu0 0.0
    %885 = vmatpush1.msra.mxu0 0.0
    %886 = vmatprep.subr.mxu0 0.0
    %887 = vmatpush1.msra.mxu0 0.0
    %888 = vmatprep.subr.mxu0 0.0
    %889 = vmatpush1.msra.mxu0 0.0
    %890 = vmatprep.subr.mxu0 0.0
    %891 = vmatpush1.msra.mxu0 0.0
    %892 = vmatprep.subr.mxu0 0.0
    %893 = vmatpush1.msra.mxu0 0.0
    %894 = vmatprep.subr.mxu0 0.0
    %895 = vmatpush1.msra.mxu0 0.0
    %896 = vmatprep.subr.mxu0 0.0
    %897 = vmatpush1.msra.mxu0 0.0
    %898 = vmatprep.subr.mxu0 0.0
    %899 = vmatpush1.msra.mxu0 0.0
    %900 = vmatprep.mubr.f32.mxu0 0.0
    %901 = vmatmul.mubr.f32.gmra.mrb[0].mxu0 %v834
    %v902 = vpop.f32.mrb[0].mxu0
    %v903 = vadd.f32 0.0, %v902
    %v904 = vpop.f32.mrb[0].mxu0
    %905 = vdwg.mxu0
    %906 = vrot.lane.b32.xlu0 %v312, 96
    %v907 = vpop.permute.xlu0 %906
    %908 = vrot.lane.b32.xlu0 %v314, 96
    %v909 = vpop.permute.xlu0 %908
    %v913 = vsel %vm624, %v668, 0
    %915 = vmatprep.subr.mxu0 0.0
    %916 = vmatpush1.msra.mxu0 %v907
    %917 = vmatprep.subr.mxu0 0.0
    %918 = vmatpush1.msra.mxu0 %v909
    %919 = vmatprep.subr.mxu0 0.0
    %920 = vmatpush1.msra.mxu0 0.0
    %921 = vmatprep.subr.mxu0 0.0
    %922 = vmatpush1.msra.mxu0 0.0
    %923 = vmatprep.subr.mxu0 0.0
    %924 = vmatpush1.msra.mxu0 0.0
    %925 = vmatprep.subr.mxu0 0.0
    %926 = vmatpush1.msra.mxu0 0.0
    %927 = vmatprep.subr.mxu0 0.0
    %928 = vmatpush1.msra.mxu0 0.0
    %929 = vmatprep.subr.mxu0 0.0
    %930 = vmatpush1.msra.mxu0 0.0
    %931 = vmatprep.subr.mxu0 0.0
    %932 = vmatpush1.msra.mxu0 0.0
    %933 = vmatprep.subr.mxu0 0.0
    %934 = vmatpush1.msra.mxu0 0.0
    %935 = vmatprep.subr.mxu0 0.0
    %936 = vmatpush1.msra.mxu0 0.0
    %937 = vmatprep.subr.mxu0 0.0
    %938 = vmatpush1.msra.mxu0 0.0
    %939 = vmatprep.subr.mxu0 0.0
    %940 = vmatpush1.msra.mxu0 0.0
    %941 = vmatprep.subr.mxu0 0.0
    %942 = vmatpush1.msra.mxu0 0.0
    %943 = vmatprep.subr.mxu0 0.0
    %944 = vmatpush1.msra.mxu0 0.0
    %945 = vmatprep.subr.mxu0 0.0
    %946 = vmatpush1.msra.mxu0 0.0
    %947 = vmatprep.subr.mxu0 0.0
    %948 = vmatpush1.msra.mxu0 0.0
    %949 = vmatprep.subr.mxu0 0.0
    %950 = vmatpush1.msra.mxu0 0.0
    %951 = vmatprep.subr.mxu0 0.0
    %952 = vmatpush1.msra.mxu0 0.0
    %953 = vmatprep.subr.mxu0 0.0
    %954 = vmatpush1.msra.mxu0 0.0
    %955 = vmatprep.subr.mxu0 0.0
    %956 = vmatpush1.msra.mxu0 0.0
    %957 = vmatprep.subr.mxu0 0.0
    %958 = vmatpush1.msra.mxu0 0.0
    %959 = vmatprep.subr.mxu0 0.0
    %960 = vmatpush1.msra.mxu0 0.0
    %961 = vmatprep.subr.mxu0 0.0
    %962 = vmatpush1.msra.mxu0 0.0
    %963 = vmatprep.subr.mxu0 0.0
    %964 = vmatpush1.msra.mxu0 0.0
    %965 = vmatprep.subr.mxu0 0.0
    %966 = vmatpush1.msra.mxu0 0.0
    %967 = vmatprep.subr.mxu0 0.0
    %968 = vmatpush1.msra.mxu0 0.0
    %969 = vmatprep.subr.mxu0 0.0
    %970 = vmatpush1.msra.mxu0 0.0
    %971 = vmatprep.subr.mxu0 0.0
    %972 = vmatpush1.msra.mxu0 0.0
    %973 = vmatprep.subr.mxu0 0.0
    %974 = vmatpush1.msra.mxu0 0.0
    %975 = vmatprep.subr.mxu0 0.0
    %976 = vmatpush1.msra.mxu0 0.0
    %977 = vmatprep.subr.mxu0 0.0
    %978 = vmatpush1.msra.mxu0 0.0
    %979 = vmatprep.mubr.f32.mxu0 0.0
    %980 = vmatmul.mubr.f32.gmra.mrb[0].mxu0 %v913
    %v981 = vpop.f32.mrb[0].mxu0
    %v982 = vadd.f32 0.0, %v981
    %v983 = vpop.f32.mrb[0].mxu0
    %984 = vdwg.mxu0
    %986 = vrot.lane.b32.xlu0 %v824, 8
    %v987 = vpop.permute.xlu0 %986
    %990 = vrot.lane.b32.xlu0 %v903, 16
    %v991 = vpop.permute.xlu0 %990
    %994 = vrot.lane.b32.xlu0 %v982, 24
    %v995 = vpop.permute.xlu0 %994
    %v997 = vsel %vm319, %v745, %v987
    %v998 = vsel %vm624, %v997, %v991
    %vm999 = vcmask 195584
    %v1000 = vsel %vm999, %v998, %v995
    %v1001 = vsel %vm319, %v173, 0
    %v1003 = vsel %vm319, %v269, 0
    %v1005 = vsel %vm319, %v274, 0
    %1007 = vmatprep.subr.mxu0 0.0
    %1008 = vmatpush1.xpose.msra.mxu0 %v1003
    %1009 = vmatprep.subr.mxu0 0.0
    %1010 = vmatpush1.xpose.msra.mxu0 %v1005
    %1011 = vmatprep.subr.mxu0 0.0
    %1012 = vmatpush1.xpose.msra.mxu0 0.0
    %1013 = vmatprep.subr.mxu0 0.0
    %1014 = vmatpush1.xpose.msra.mxu0 0.0
    %1015 = vmatprep.subr.mxu0 0.0
    %1016 = vmatpush1.xpose.msra.mxu0 0.0
    %1017 = vmatprep.subr.mxu0 0.0
    %1018 = vmatpush1.xpose.msra.mxu0 0.0
    %1019 = vmatprep.subr.mxu0 0.0
    %1020 = vmatpush1.xpose.msra.mxu0 0.0
    %1021 = vmatprep.subr.mxu0 0.0
    %1022 = vmatpush1.xpose.msra.mxu0 0.0
    %1023 = vmatprep.subr.mxu0 0.0
    %1024 = vmatpush1.xpose.msra.mxu0 0.0
    %1025 = vmatprep.subr.mxu0 0.0
    %1026 = vmatpush1.xpose.msra.mxu0 0.0
    %1027 = vmatprep.subr.mxu0 0.0
    %1028 = vmatpush1.xpose.msra.mxu0 0.0
    %1029 = vmatprep.subr.mxu0 0.0
    %1030 = vmatpush1.xpose.msra.mxu0 0.0
    %1031 = vmatprep.subr.mxu0 0.0
    %1032 = vmatpush1.xpose.msra.mxu0 0.0
    %1033 = vmatprep.subr.mxu0 0.0
    %1034 = vmatpush1.xpose.msra.mxu0 0.0
    %1035 = vmatprep.subr.mxu0 0.0
    %1036 = vmatpush1.xpose.msra.mxu0 0.0
    %1037 = vmatprep.subr.mxu0 0.0
    %1038 = vmatpush1.xpose.msra.mxu0 0.0
    %1039 = vmatprep.subr.mxu0 0.0
    %1040 = vmatpush1.xpose.msra.mxu0 0.0
    %1041 = vmatprep.subr.mxu0 0.0
    %1042 = vmatpush1.xpose.msra.mxu0 0.0
    %1043 = vmatprep.subr.mxu0 0.0
    %1044 = vmatpush1.xpose.msra.mxu0 0.0
    %1045 = vmatprep.subr.mxu0 0.0
    %1046 = vmatpush1.xpose.msra.mxu0 0.0
    %1047 = vmatprep.subr.mxu0 0.0
    %1048 = vmatpush1.xpose.msra.mxu0 0.0
    %1049 = vmatprep.subr.mxu0 0.0
    %1050 = vmatpush1.xpose.msra.mxu0 0.0
    %1051 = vmatprep.subr.mxu0 0.0
    %1052 = vmatpush1.xpose.msra.mxu0 0.0
    %1053 = vmatprep.subr.mxu0 0.0
    %1054 = vmatpush1.xpose.msra.mxu0 0.0
    %1055 = vmatprep.subr.mxu0 0.0
    %1056 = vmatpush1.xpose.msra.mxu0 0.0
    %1057 = vmatprep.subr.mxu0 0.0
    %1058 = vmatpush1.xpose.msra.mxu0 0.0
    %1059 = vmatprep.subr.mxu0 0.0
    %1060 = vmatpush1.xpose.msra.mxu0 0.0
    %1061 = vmatprep.subr.mxu0 0.0
    %1062 = vmatpush1.xpose.msra.mxu0 0.0
    %1063 = vmatprep.subr.mxu0 0.0
    %1064 = vmatpush1.xpose.msra.mxu0 0.0
    %1065 = vmatprep.subr.mxu0 0.0
    %1066 = vmatpush1.xpose.msra.mxu0 0.0
    %1067 = vmatprep.subr.mxu0 0.0
    %1068 = vmatpush1.xpose.msra.mxu0 0.0
    %1069 = vmatprep.subr.mxu0 0.0
    %1070 = vmatpush1.xpose.msra.mxu0 0.0
    %1071 = vmatprep.mubr.f32.mxu0 0.0
    %1072 = vmatmul.mubr.f32.gmra.mrb[0].mxu0 %v1001
    %v1073 = vpop.f32.mrb[0].mxu0
    %v1074 = vadd.f32 0.0, %v1073
    %v1075 = vpop.f32.mrb[0].mxu0
    %1076 = vdwg.mxu0
    %v1077 = vsel %vm319, %v282, 0
    %v1079 = vsel %vm319, %v300, 0
    %v1081 = vsel %vm319, %v302, 0
    %1083 = vmatprep.subr.mxu0 0.0
    %1084 = vmatpush1.xpose.msra.mxu0 %v1079
    %1085 = vmatprep.subr.mxu0 0.0
    %1086 = vmatpush1.xpose.msra.mxu0 %v1081
    %1087 = vmatprep.subr.mxu0 0.0
    %1088 = vmatpush1.xpose.msra.mxu0 0.0
    %1089 = vmatprep.subr.mxu0 0.0
    %1090 = vmatpush1.xpose.msra.mxu0 0.0
    %1091 = vmatprep.subr.mxu0 0.0
    %1092 = vmatpush1.xpose.msra.mxu0 0.0
    %1093 = vmatprep.subr.mxu0 0.0
    %1094 = vmatpush1.xpose.msra.mxu0 0.0
    %1095 = vmatprep.subr.mxu0 0.0
    %1096 = vmatpush1.xpose.msra.mxu0 0.0
    %1097 = vmatprep.subr.mxu0 0.0
    %1098 = vmatpush1.xpose.msra.mxu0 0.0
    %1099 = vmatprep.subr.mxu0 0.0
    %1100 = vmatpush1.xpose.msra.mxu0 0.0
    %1101 = vmatprep.subr.mxu0 0.0
    %1102 = vmatpush1.xpose.msra.mxu0 0.0
    %1103 = vmatprep.subr.mxu0 0.0
    %1104 = vmatpush1.xpose.msra.mxu0 0.0
    %1105 = vmatprep.subr.mxu0 0.0
    %1106 = vmatpush1.xpose.msra.mxu0 0.0
    %1107 = vmatprep.subr.mxu0 0.0
    %1108 = vmatpush1.xpose.msra.mxu0 0.0
    %1109 = vmatprep.subr.mxu0 0.0
    %1110 = vmatpush1.xpose.msra.mxu0 0.0
    %1111 = vmatprep.subr.mxu0 0.0
    %1112 = vmatpush1.xpose.msra.mxu0 0.0
    %1113 = vmatprep.subr.mxu0 0.0
    %1114 = vmatpush1.xpose.msra.mxu0 0.0
    %1115 = vmatprep.subr.mxu0 0.0
    %1116 = vmatpush1.xpose.msra.mxu0 0.0
    %1117 = vmatprep.subr.mxu0 0.0
    %1118 = vmatpush1.xpose.msra.mxu0 0.0
    %1119 = vmatprep.subr.mxu0 0.0
    %1120 = vmatpush1.xpose.msra.mxu0 0.0
    %1121 = vmatprep.subr.mxu0 0.0
    %1122 = vmatpush1.xpose.msra.mxu0 0.0
    %1123 = vmatprep.subr.mxu0 0.0
    %1124 = vmatpush1.xpose.msra.mxu0 0.0
    %1125 = vmatprep.subr.mxu0 0.0
    %1126 = vmatpush1.xpose.msra.mxu0 0.0
    %1127 = vmatprep.subr.mxu0 0.0
    %1128 = vmatpush1.xpose.msra.mxu0 0.0
    %1129 = vmatprep.subr.mxu0 0.0
    %1130 = vmatpush1.xpose.msra.mxu0 0.0
    %1131 = vmatprep.subr.mxu0 0.0
    %1132 = vmatpush1.xpose.msra.mxu0 0.0
    %1133 = vmatprep.subr.mxu0 0.0
    %1134 = vmatpush1.xpose.msra.mxu0 0.0
    %1135 = vmatprep.subr.mxu0 0.0
    %1136 = vmatpush1.xpose.msra.mxu0 0.0
    %1137 = vmatprep.subr.mxu0 0.0
    %1138 = vmatpush1.xpose.msra.mxu0 0.0
    %1139 = vmatprep.subr.mxu0 0.0
    %1140 = vmatpush1.xpose.msra.mxu0 0.0
    %1141 = vmatprep.subr.mxu0 0.0
    %1142 = vmatpush1.xpose.msra.mxu0 0.0
    %1143 = vmatprep.subr.mxu0 0.0
    %1144 = vmatpush1.xpose.msra.mxu0 0.0
    %1145 = vmatprep.subr.mxu0 0.0
    %1146 = vmatpush1.xpose.msra.mxu0 0.0
    %1147 = vmatprep.mubr.f32.mxu0 0.0
    %1148 = vmatmul.mubr.f32.gmra.mrb[0].mxu0 %v1077
    %v1149 = vpop.f32.mrb[0].mxu0
    %v1150 = vadd.f32 0.0, %v1149
    %v1151 = vpop.f32.mrb[0].mxu0
    %1152 = vdwg.mxu0
    %v1153 = vsel %vm319, %v286, 0
    %v1155 = vsel %vm319, %v308, 0
    %v1157 = vsel %vm319, %v310, 0
    %1159 = vmatprep.subr.mxu0 0.0
    %1160 = vmatpush1.xpose.msra.mxu0 %v1155
    %1161 = vmatprep.subr.mxu0 0.0
    %1162 = vmatpush1.xpose.msra.mxu0 %v1157
    %1163 = vmatprep.subr.mxu0 0.0
    %1164 = vmatpush1.xpose.msra.mxu0 0.0
    %1165 = vmatprep.subr.mxu0 0.0
    %1166 = vmatpush1.xpose.msra.mxu0 0.0
    %1167 = vmatprep.subr.mxu0 0.0
    %1168 = vmatpush1.xpose.msra.mxu0 0.0
    %1169 = vmatprep.subr.mxu0 0.0
    %1170 = vmatpush1.xpose.msra.mxu0 0.0
    %1171 = vmatprep.subr.mxu0 0.0
    %1172 = vmatpush1.xpose.msra.mxu0 0.0
    %1173 = vmatprep.subr.mxu0 0.0
    %1174 = vmatpush1.xpose.msra.mxu0 0.0
    %1175 = vmatprep.subr.mxu0 0.0
    %1176 = vmatpush1.xpose.msra.mxu0 0.0
    %1177 = vmatprep.subr.mxu0 0.0
    %1178 = vmatpush1.xpose.msra.mxu0 0.0
    %1179 = vmatprep.subr.mxu0 0.0
    %1180 = vmatpush1.xpose.msra.mxu0 0.0
    %1181 = vmatprep.subr.mxu0 0.0
    %1182 = vmatpush1.xpose.msra.mxu0 0.0
    %1183 = vmatprep.subr.mxu0 0.0
    %1184 = vmatpush1.xpose.msra.mxu0 0.0
    %1185 = vmatprep.subr.mxu0 0.0
    %1186 = vmatpush1.xpose.msra.mxu0 0.0
    %1187 = vmatprep.subr.mxu0 0.0
    %1188 = vmatpush1.xpose.msra.mxu0 0.0
    %1189 = vmatprep.subr.mxu0 0.0
    %1190 = vmatpush1.xpose.msra.mxu0 0.0
    %1191 = vmatprep.subr.mxu0 0.0
    %1192 = vmatpush1.xpose.msra.mxu0 0.0
    %1193 = vmatprep.subr.mxu0 0.0
    %1194 = vmatpush1.xpose.msra.mxu0 0.0
    %1195 = vmatprep.subr.mxu0 0.0
    %1196 = vmatpush1.xpose.msra.mxu0 0.0
    %1197 = vmatprep.subr.mxu0 0.0
    %1198 = vmatpush1.xpose.msra.mxu0 0.0
    %1199 = vmatprep.subr.mxu0 0.0
    %1200 = vmatpush1.xpose.msra.mxu0 0.0
    %1201 = vmatprep.subr.mxu0 0.0
    %1202 = vmatpush1.xpose.msra.mxu0 0.0
    %1203 = vmatprep.subr.mxu0 0.0
    %1204 = vmatpush1.xpose.msra.mxu0 0.0
    %1205 = vmatprep.subr.mxu0 0.0
    %1206 = vmatpush1.xpose.msra.mxu0 0.0
    %1207 = vmatprep.subr.mxu0 0.0
    %1208 = vmatpush1.xpose.msra.mxu0 0.0
    %1209 = vmatprep.subr.mxu0 0.0
    %1210 = vmatpush1.xpose.msra.mxu0 0.0
    %1211 = vmatprep.subr.mxu0 0.0
    %1212 = vmatpush1.xpose.msra.mxu0 0.0
    %1213 = vmatprep.subr.mxu0 0.0
    %1214 = vmatpush1.xpose.msra.mxu0 0.0
    %1215 = vmatprep.subr.mxu0 0.0
    %1216 = vmatpush1.xpose.msra.mxu0 0.0
    %1217 = vmatprep.subr.mxu0 0.0
    %1218 = vmatpush1.xpose.msra.mxu0 0.0
    %1219 = vmatprep.subr.mxu0 0.0
    %1220 = vmatpush1.xpose.msra.mxu0 0.0
    %1221 = vmatprep.subr.mxu0 0.0
    %1222 = vmatpush1.xpose.msra.mxu0 0.0
    %1223 = vmatprep.mubr.f32.mxu0 0.0
    %1224 = vmatmul.mubr.f32.gmra.mrb[0].mxu0 %v1153
    %v1225 = vpop.f32.mrb[0].mxu0
    %v1226 = vadd.f32 0.0, %v1225
    %v1227 = vpop.f32.mrb[0].mxu0
    %1228 = vdwg.mxu0
    %v1229 = vsel %vm319, %v290, 0
    %v1231 = vsel %vm319, %v316, 0
    %v1233 = vsel %vm319, %v318, 0
    %1235 = vmatprep.subr.mxu0 0.0
    %1236 = vmatpush1.xpose.msra.mxu0 %v1231
    %1237 = vmatprep.subr.mxu0 0.0
    %1238 = vmatpush1.xpose.msra.mxu0 %v1233
    %1239 = vmatprep.subr.mxu0 0.0
    %1240 = vmatpush1.xpose.msra.mxu0 0.0
    %1241 = vmatprep.subr.mxu0 0.0
    %1242 = vmatpush1.xpose.msra.mxu0 0.0
    %1243 = vmatprep.subr.mxu0 0.0
    %1244 = vmatpush1.xpose.msra.mxu0 0.0
    %1245 = vmatprep.subr.mxu0 0.0
    %1246 = vmatpush1.xpose.msra.mxu0 0.0
    %1247 = vmatprep.subr.mxu0 0.0
    %1248 = vmatpush1.xpose.msra.mxu0 0.0
    %1249 = vmatprep.subr.mxu0 0.0
    %1250 = vmatpush1.xpose.msra.mxu0 0.0
    %1251 = vmatprep.subr.mxu0 0.0
    %1252 = vmatpush1.xpose.msra.mxu0 0.0
    %1253 = vmatprep.subr.mxu0 0.0
    %1254 = vmatpush1.xpose.msra.mxu0 0.0
    %1255 = vmatprep.subr.mxu0 0.0
    %1256 = vmatpush1.xpose.msra.mxu0 0.0
    %1257 = vmatprep.subr.mxu0 0.0
    %1258 = vmatpush1.xpose.msra.mxu0 0.0
    %1259 = vmatprep.subr.mxu0 0.0
    %1260 = vmatpush1.xpose.msra.mxu0 0.0
    %1261 = vmatprep.subr.mxu0 0.0
    %1262 = vmatpush1.xpose.msra.mxu0 0.0
    %1263 = vmatprep.subr.mxu0 0.0
    %1264 = vmatpush1.xpose.msra.mxu0 0.0
    %1265 = vmatprep.subr.mxu0 0.0
    %1266 = vmatpush1.xpose.msra.mxu0 0.0
    %1267 = vmatprep.subr.mxu0 0.0
    %1268 = vmatpush1.xpose.msra.mxu0 0.0
    %1269 = vmatprep.subr.mxu0 0.0
    %1270 = vmatpush1.xpose.msra.mxu0 0.0
    %1271 = vmatprep.subr.mxu0 0.0
    %1272 = vmatpush1.xpose.msra.mxu0 0.0
    %1273 = vmatprep.subr.mxu0 0.0
    %1274 = vmatpush1.xpose.msra.mxu0 0.0
    %1275 = vmatprep.subr.mxu0 0.0
    %1276 = vmatpush1.xpose.msra.mxu0 0.0
    %1277 = vmatprep.subr.mxu0 0.0
    %1278 = vmatpush1.xpose.msra.mxu0 0.0
    %1279 = vmatprep.subr.mxu0 0.0
    %1280 = vmatpush1.xpose.msra.mxu0 0.0
    %1281 = vmatprep.subr.mxu0 0.0
    %1282 = vmatpush1.xpose.msra.mxu0 0.0
    %1283 = vmatprep.subr.mxu0 0.0
    %1284 = vmatpush1.xpose.msra.mxu0 0.0
    %1285 = vmatprep.subr.mxu0 0.0
    %1286 = vmatpush1.xpose.msra.mxu0 0.0
    %1287 = vmatprep.subr.mxu0 0.0
    %1288 = vmatpush1.xpose.msra.mxu0 0.0
    %1289 = vmatprep.subr.mxu0 0.0
    %1290 = vmatpush1.xpose.msra.mxu0 0.0
    %1291 = vmatprep.subr.mxu0 0.0
    %1292 = vmatpush1.xpose.msra.mxu0 0.0
    %1293 = vmatprep.subr.mxu0 0.0
    %1294 = vmatpush1.xpose.msra.mxu0 0.0
    %1295 = vmatprep.subr.mxu0 0.0
    %1296 = vmatpush1.xpose.msra.mxu0 0.0
    %1297 = vmatprep.subr.mxu0 0.0
    %1298 = vmatpush1.xpose.msra.mxu0 0.0
    %1299 = vmatprep.mubr.f32.mxu0 0.0
    %1300 = vmatmul.mubr.f32.gmra.mrb[0].mxu0 %v1229
    %v1301 = vpop.f32.mrb[0].mxu0
    %v1302 = vadd.f32 0.0, %v1301
    %v1303 = vpop.f32.mrb[0].mxu0
    %1304 = vdwg.mxu0
    %v1305 = vsel %vm624, %v1074, -inf
    %1306 = vmax.xlane.f32.xlu0 %v1305
    %v1307 = vpop.xlane.xlu0 %1306
    %v1308 = vsel %vm624, %v1150, -inf
    %1309 = vmax.xlane.f32.xlu0 %v1308
    %v1310 = vpop.xlane.xlu0 %1309
    %v1311 = vsel %vm624, %v1226, -inf
    %1312 = vmax.xlane.f32.xlu0 %v1311
    %v1313 = vpop.xlane.xlu0 %1312
    %v1314 = vsel %vm624, %v1302, -inf
    %1315 = vmax.xlane.f32.xlu0 %v1314
    %v1316 = vpop.xlane.xlu0 %1315
    %v1317 = vsub.f32 %v1074, %v1307
    %v1318 = vsub.f32 %v1150, %v1310
    %v1319 = vsub.f32 %v1226, %v1313
    %v1320 = vsub.f32 %v1302, %v1316
    %v1321 = vmul.f32 %v1317, 1.442695
    %v1322 = vpow.pop %v1321
    %v1323 = vmul.f32 %v1318, 1.442695
    %v1324 = vpow.pop %v1323
    %v1325 = vmul.f32 %v1319, 1.442695
    %v1326 = vpow.pop %v1325
    %v1327 = vmul.f32 %v1320, 1.442695
    %v1328 = vpow.pop %v1327
    %v1329 = vsel %vm624, %v1322, 0.0
    %1330 = vadd.xlane.f32.xlu0 %v1329
    %v1331 = vpop.xlane.xlu0 %1330
    %v1332 = vsel %vm624, %v1324, 0.0
    %1333 = vadd.xlane.f32.xlu0 %v1332
    %v1334 = vpop.xlane.xlu0 %1333
    %v1335 = vsel %vm624, %v1326, 0.0
    %1336 = vadd.xlane.f32.xlu0 %v1335
    %v1337 = vpop.xlane.xlu0 %1336
    %v1338 = vsel %vm624, %v1328, 0.0
    %1339 = vadd.xlane.f32.xlu0 %v1338
    %v1340 = vpop.xlane.xlu0 %1339
    %v1341 = vrcp.pop %v1331
    %v1342 = vrcp.pop %v1334
    %v1343 = vrcp.pop %v1337
    %v1344 = vrcp.pop %v1340
    %v1345 = vmul.f32 %v1322, %v1341
    %v1346 = vmul.f32 %v1324, %v1342
    %v1347 = vmul.f32 %v1326, %v1343
    %v1348 = vmul.f32 %v1328, %v1344
    %1349 = vrot.lane.b32.xlu0 %v269, 96
    %v1350 = vpop.permute.xlu0 %1349
    %1351 = vrot.lane.b32.xlu0 %v274, 96
    %v1352 = vpop.permute.xlu0 %1351
    %v1356 = vsel %vm624, %v1345, 0
    %1358 = vmatprep.subr.mxu0 0.0
    %1359 = vmatpush1.msra.mxu0 %v1350
    %1360 = vmatprep.subr.mxu0 0.0
    %1361 = vmatpush1.msra.mxu0 %v1352
    %1362 = vmatprep.subr.mxu0 0.0
    %1363 = vmatpush1.msra.mxu0 0.0
    %1364 = vmatprep.subr.mxu0 0.0
    %1365 = vmatpush1.msra.mxu0 0.0
    %1366 = vmatprep.subr.mxu0 0.0
    %1367 = vmatpush1.msra.mxu0 0.0
    %1368 = vmatprep.subr.mxu0 0.0
    %1369 = vmatpush1.msra.mxu0 0.0
    %1370 = vmatprep.subr.mxu0 0.0
    %1371 = vmatpush1.msra.mxu0 0.0
    %1372 = vmatprep.subr.mxu0 0.0
    %1373 = vmatpush1.msra.mxu0 0.0
    %1374 = vmatprep.subr.mxu0 0.0
    %1375 = vmatpush1.msra.mxu0 0.0
    %1376 = vmatprep.subr.mxu0 0.0
    %1377 = vmatpush1.msra.mxu0 0.0
    %1378 = vmatprep.subr.mxu0 0.0
    %1379 = vmatpush1.msra.mxu0 0.0
    %1380 = vmatprep.subr.mxu0 0.0
    %1381 = vmatpush1.msra.mxu0 0.0
    %1382 = vmatprep.subr.mxu0 0.0
    %1383 = vmatpush1.msra.mxu0 0.0
    %1384 = vmatprep.subr.mxu0 0.0
    %1385 = vmatpush1.msra.mxu0 0.0
    %1386 = vmatprep.subr.mxu0 0.0
    %1387 = vmatpush1.msra.mxu0 0.0
    %1388 = vmatprep.subr.mxu0 0.0
    %1389 = vmatpush1.msra.mxu0 0.0
    %1390 = vmatprep.subr.mxu0 0.0
    %1391 = vmatpush1.msra.mxu0 0.0
    %1392 = vmatprep.subr.mxu0 0.0
    %1393 = vmatpush1.msra.mxu0 0.0
    %1394 = vmatprep.subr.mxu0 0.0
    %1395 = vmatpush1.msra.mxu0 0.0
    %1396 = vmatprep.subr.mxu0 0.0
    %1397 = vmatpush1.msra.mxu0 0.0
    %1398 = vmatprep.subr.mxu0 0.0
    %1399 = vmatpush1.msra.mxu0 0.0
    %1400 = vmatprep.subr.mxu0 0.0
    %1401 = vmatpush1.msra.mxu0 0.0
    %1402 = vmatprep.subr.mxu0 0.0
    %1403 = vmatpush1.msra.mxu0 0.0
    %1404 = vmatprep.subr.mxu0 0.0
    %1405 = vmatpush1.msra.mxu0 0.0
    %1406 = vmatprep.subr.mxu0 0.0
    %1407 = vmatpush1.msra.mxu0 0.0
    %1408 = vmatprep.subr.mxu0 0.0
    %1409 = vmatpush1.msra.mxu0 0.0
    %1410 = vmatprep.subr.mxu0 0.0
    %1411 = vmatpush1.msra.mxu0 0.0
    %1412 = vmatprep.subr.mxu0 0.0
    %1413 = vmatpush1.msra.mxu0 0.0
    %1414 = vmatprep.subr.mxu0 0.0
    %1415 = vmatpush1.msra.mxu0 0.0
    %1416 = vmatprep.subr.mxu0 0.0
    %1417 = vmatpush1.msra.mxu0 0.0
    %1418 = vmatprep.subr.mxu0 0.0
    %1419 = vmatpush1.msra.mxu0 0.0
    %1420 = vmatprep.subr.mxu0 0.0
    %1421 = vmatpush1.msra.mxu0 0.0
    %1422 = vmatprep.mubr.f32.mxu0 0.0
    %1423 = vmatmul.mubr.f32.gmra.mrb[0].mxu0 %v1356
    %v1424 = vpop.f32.mrb[0].mxu0
    %v1425 = vadd.f32 0.0, %v1424
    %v1426 = vpop.f32.mrb[0].mxu0
    %1427 = vdwg.mxu0
    %1428 = vrot.lane.b32.xlu0 %v300, 96
    %v1429 = vpop.permute.xlu0 %1428
    %1430 = vrot.lane.b32.xlu0 %v302, 96
    %v1431 = vpop.permute.xlu0 %1430
    %v1435 = vsel %vm624, %v1346, 0
    %1437 = vmatprep.subr.mxu0 0.0
    %1438 = vmatpush1.msra.mxu0 %v1429
    %1439 = vmatprep.subr.mxu0 0.0
    %1440 = vmatpush1.msra.mxu0 %v1431
    %1441 = vmatprep.subr.mxu0 0.0
    %1442 = vmatpush1.msra.mxu0 0.0
    %1443 = vmatprep.subr.mxu0 0.0
    %1444 = vmatpush1.msra.mxu0 0.0
    %1445 = vmatprep.subr.mxu0 0.0
    %1446 = vmatpush1.msra.mxu0 0.0
    %1447 = vmatprep.subr.mxu0 0.0
    %1448 = vmatpush1.msra.mxu0 0.0
    %1449 = vmatprep.subr.mxu0 0.0
    %1450 = vmatpush1.msra.mxu0 0.0
    %1451 = vmatprep.subr.mxu0 0.0
    %1452 = vmatpush1.msra.mxu0 0.0
    %1453 = vmatprep.subr.mxu0 0.0
    %1454 = vmatpush1.msra.mxu0 0.0
    %1455 = vmatprep.subr.mxu0 0.0
    %1456 = vmatpush1.msra.mxu0 0.0
    %1457 = vmatprep.subr.mxu0 0.0
    %1458 = vmatpush1.msra.mxu0 0.0
    %1459 = vmatprep.subr.mxu0 0.0
    %1460 = vmatpush1.msra.mxu0 0.0
    %1461 = vmatprep.subr.mxu0 0.0
    %1462 = vmatpush1.msra.mxu0 0.0
    %1463 = vmatprep.subr.mxu0 0.0
    %1464 = vmatpush1.msra.mxu0 0.0
    %1465 = vmatprep.subr.mxu0 0.0
    %1466 = vmatpush1.msra.mxu0 0.0
    %1467 = vmatprep.subr.mxu0 0.0
    %1468 = vmatpush1.msra.mxu0 0.0
    %1469 = vmatprep.subr.mxu0 0.0
    %1470 = vmatpush1.msra.mxu0 0.0
    %1471 = vmatprep.subr.mxu0 0.0
    %1472 = vmatpush1.msra.mxu0 0.0
    %1473 = vmatprep.subr.mxu0 0.0
    %1474 = vmatpush1.msra.mxu0 0.0
    %1475 = vmatprep.subr.mxu0 0.0
    %1476 = vmatpush1.msra.mxu0 0.0
    %1477 = vmatprep.subr.mxu0 0.0
    %1478 = vmatpush1.msra.mxu0 0.0
    %1479 = vmatprep.subr.mxu0 0.0
    %1480 = vmatpush1.msra.mxu0 0.0
    %1481 = vmatprep.subr.mxu0 0.0
    %1482 = vmatpush1.msra.mxu0 0.0
    %1483 = vmatprep.subr.mxu0 0.0
    %1484 = vmatpush1.msra.mxu0 0.0
    %1485 = vmatprep.subr.mxu0 0.0
    %1486 = vmatpush1.msra.mxu0 0.0
    %1487 = vmatprep.subr.mxu0 0.0
    %1488 = vmatpush1.msra.mxu0 0.0
    %1489 = vmatprep.subr.mxu0 0.0
    %1490 = vmatpush1.msra.mxu0 0.0
    %1491 = vmatprep.subr.mxu0 0.0
    %1492 = vmatpush1.msra.mxu0 0.0
    %1493 = vmatprep.subr.mxu0 0.0
    %1494 = vmatpush1.msra.mxu0 0.0
    %1495 = vmatprep.subr.mxu0 0.0
    %1496 = vmatpush1.msra.mxu0 0.0
    %1497 = vmatprep.subr.mxu0 0.0
    %1498 = vmatpush1.msra.mxu0 0.0
    %1499 = vmatprep.subr.mxu0 0.0
    %1500 = vmatpush1.msra.mxu0 0.0
    %1501 = vmatprep.mubr.f32.mxu0 0.0
    %1502 = vmatmul.mubr.f32.gmra.mrb[0].mxu0 %v1435
    %v1503 = vpop.f32.mrb[0].mxu0
    %v1504 = vadd.f32 0.0, %v1503
    %v1505 = vpop.f32.mrb[0].mxu0
    %1506 = vdwg.mxu0
    %1507 = vrot.lane.b32.xlu0 %v308, 96
    %v1508 = vpop.permute.xlu0 %1507
    %1509 = vrot.lane.b32.xlu0 %v310, 96
    %v1510 = vpop.permute.xlu0 %1509
    %v1514 = vsel %vm624, %v1347, 0
    %1516 = vmatprep.subr.mxu0 0.0
    %1517 = vmatpush1.msra.mxu0 %v1508
    %1518 = vmatprep.subr.mxu0 0.0
    %1519 = vmatpush1.msra.mxu0 %v1510
    %1520 = vmatprep.subr.mxu0 0.0
    %1521 = vmatpush1.msra.mxu0 0.0
    %1522 = vmatprep.subr.mxu0 0.0
    %1523 = vmatpush1.msra.mxu0 0.0
    %1524 = vmatprep.subr.mxu0 0.0
    %1525 = vmatpush1.msra.mxu0 0.0
    %1526 = vmatprep.subr.mxu0 0.0
    %1527 = vmatpush1.msra.mxu0 0.0
    %1528 = vmatprep.subr.mxu0 0.0
    %1529 = vmatpush1.msra.mxu0 0.0
    %1530 = vmatprep.subr.mxu0 0.0
    %1531 = vmatpush1.msra.mxu0 0.0
    %1532 = vmatprep.subr.mxu0 0.0
    %1533 = vmatpush1.msra.mxu0 0.0
    %1534 = vmatprep.subr.mxu0 0.0
    %1535 = vmatpush1.msra.mxu0 0.0
    %1536 = vmatprep.subr.mxu0 0.0
    %1537 = vmatpush1.msra.mxu0 0.0
    %1538 = vmatprep.subr.mxu0 0.0
    %1539 = vmatpush1.msra.mxu0 0.0
    %1540 = vmatprep.subr.mxu0 0.0
    %1541 = vmatpush1.msra.mxu0 0.0
    %1542 = vmatprep.subr.mxu0 0.0
    %1543 = vmatpush1.msra.mxu0 0.0
    %1544 = vmatprep.subr.mxu0 0.0
    %1545 = vmatpush1.msra.mxu0 0.0
    %1546 = vmatprep.subr.mxu0 0.0
    %1547 = vmatpush1.msra.mxu0 0.0
    %1548 = vmatprep.subr.mxu0 0.0
    %1549 = vmatpush1.msra.mxu0 0.0
    %1550 = vmatprep.subr.mxu0 0.0
    %1551 = vmatpush1.msra.mxu0 0.0
    %1552 = vmatprep.subr.mxu0 0.0
    %1553 = vmatpush1.msra.mxu0 0.0
    %1554 = vmatprep.subr.mxu0 0.0
    %1555 = vmatpush1.msra.mxu0 0.0
    %1556 = vmatprep.subr.mxu0 0.0
    %1557 = vmatpush1.msra.mxu0 0.0
    %1558 = vmatprep.subr.mxu0 0.0
    %1559 = vmatpush1.msra.mxu0 0.0
    %1560 = vmatprep.subr.mxu0 0.0
    %1561 = vmatpush1.msra.mxu0 0.0
    %1562 = vmatprep.subr.mxu0 0.0
    %1563 = vmatpush1.msra.mxu0 0.0
    %1564 = vmatprep.subr.mxu0 0.0
    %1565 = vmatpush1.msra.mxu0 0.0
    %1566 = vmatprep.subr.mxu0 0.0
    %1567 = vmatpush1.msra.mxu0 0.0
    %1568 = vmatprep.subr.mxu0 0.0
    %1569 = vmatpush1.msra.mxu0 0.0
    %1570 = vmatprep.subr.mxu0 0.0
    %1571 = vmatpush1.msra.mxu0 0.0
    %1572 = vmatprep.subr.mxu0 0.0
    %1573 = vmatpush1.msra.mxu0 0.0
    %1574 = vmatprep.subr.mxu0 0.0
    %1575 = vmatpush1.msra.mxu0 0.0
    %1576 = vmatprep.subr.mxu0 0.0
    %1577 = vmatpush1.msra.mxu0 0.0
    %1578 = vmatprep.subr.mxu0 0.0
    %1579 = vmatpush1.msra.mxu0 0.0
    %1580 = vmatprep.mubr.f32.mxu0 0.0
    %1581 = vmatmul.mubr.f32.gmra.mrb[0].mxu0 %v1514
    %v1582 = vpop.f32.mrb[0].mxu0
    %v1583 = vadd.f32 0.0, %v1582
    %v1584 = vpop.f32.mrb[0].mxu0
    %1585 = vdwg.mxu0
    %1586 = vrot.lane.b32.xlu0 %v316, 96
    %v1587 = vpop.permute.xlu0 %1586
    %1588 = vrot.lane.b32.xlu0 %v318, 96
    %v1589 = vpop.permute.xlu0 %1588
    %v1593 = vsel %vm624, %v1348, 0
    %1595 = vmatprep.subr.mxu0 0.0
    %1596 = vmatpush1.msra.mxu0 %v1587
    %1597 = vmatprep.subr.mxu0 0.0
    %1598 = vmatpush1.msra.mxu0 %v1589
    %1599 = vmatprep.subr.mxu0 0.0
    %1600 = vmatpush1.msra.mxu0 0.0
    %1601 = vmatprep.subr.mxu0 0.0
    %1602 = vmatpush1.msra.mxu0 0.0
    %1603 = vmatprep.subr.mxu0 0.0
    %1604 = vmatpush1.msra.mxu0 0.0
    %1605 = vmatprep.subr.mxu0 0.0
    %1606 = vmatpush1.msra.mxu0 0.0
    %1607 = vmatprep.subr.mxu0 0.0
    %1608 = vmatpush1.msra.mxu0 0.0
    %1609 = vmatprep.subr.mxu0 0.0
    %1610 = vmatpush1.msra.mxu0 0.0
    %1611 = vmatprep.subr.mxu0 0.0
    %1612 = vmatpush1.msra.mxu0 0.0
    %1613 = vmatprep.subr.mxu0 0.0
    %1614 = vmatpush1.msra.mxu0 0.0
    %1615 = vmatprep.subr.mxu0 0.0
    %1616 = vmatpush1.msra.mxu0 0.0
    %1617 = vmatprep.subr.mxu0 0.0
    %1618 = vmatpush1.msra.mxu0 0.0
    %1619 = vmatprep.subr.mxu0 0.0
    %1620 = vmatpush1.msra.mxu0 0.0
    %1621 = vmatprep.subr.mxu0 0.0
    %1622 = vmatpush1.msra.mxu0 0.0
    %1623 = vmatprep.subr.mxu0 0.0
    %1624 = vmatpush1.msra.mxu0 0.0
    %1625 = vmatprep.subr.mxu0 0.0
    %1626 = vmatpush1.msra.mxu0 0.0
    %1627 = vmatprep.subr.mxu0 0.0
    %1628 = vmatpush1.msra.mxu0 0.0
    %1629 = vmatprep.subr.mxu0 0.0
    %1630 = vmatpush1.msra.mxu0 0.0
    %1631 = vmatprep.subr.mxu0 0.0
    %1632 = vmatpush1.msra.mxu0 0.0
    %1633 = vmatprep.subr.mxu0 0.0
    %1634 = vmatpush1.msra.mxu0 0.0
    %1635 = vmatprep.subr.mxu0 0.0
    %1636 = vmatpush1.msra.mxu0 0.0
    %1637 = vmatprep.subr.mxu0 0.0
    %1638 = vmatpush1.msra.mxu0 0.0
    %1639 = vmatprep.subr.mxu0 0.0
    %1640 = vmatpush1.msra.mxu0 0.0
    %1641 = vmatprep.subr.mxu0 0.0
    %1642 = vmatpush1.msra.mxu0 0.0
    %1643 = vmatprep.subr.mxu0 0.0
    %1644 = vmatpush1.msra.mxu0 0.0
    %1645 = vmatprep.subr.mxu0 0.0
    %1646 = vmatpush1.msra.mxu0 0.0
    %1647 = vmatprep.subr.mxu0 0.0
    %1648 = vmatpush1.msra.mxu0 0.0
    %1649 = vmatprep.subr.mxu0 0.0
    %1650 = vmatpush1.msra.mxu0 0.0
    %1651 = vmatprep.subr.mxu0 0.0
    %1652 = vmatpush1.msra.mxu0 0.0
    %1653 = vmatprep.subr.mxu0 0.0
    %1654 = vmatpush1.msra.mxu0 0.0
    %1655 = vmatprep.subr.mxu0 0.0
    %1656 = vmatpush1.msra.mxu0 0.0
    %1657 = vmatprep.subr.mxu0 0.0
    %1658 = vmatpush1.msra.mxu0 0.0
    %1659 = vmatprep.mubr.f32.mxu0 0.0
    %1660 = vmatmul.mubr.f32.gmra.mrb[0].mxu0 %v1593
    %v1661 = vpop.f32.mrb[0].mxu0
    %v1662 = vadd.f32 0.0, %v1661
    %v1663 = vpop.f32.mrb[0].mxu0
    %1664 = vdwg.mxu0
    %1666 = vrot.lane.b32.xlu0 %v1504, 8
    %v1667 = vpop.permute.xlu0 %1666
    %1670 = vrot.lane.b32.xlu0 %v1583, 16
    %v1671 = vpop.permute.xlu0 %1670
    %1674 = vrot.lane.b32.xlu0 %v1662, 24
    %v1675 = vpop.permute.xlu0 %1674
    %v1677 = vsel %vm319, %v1425, %v1667
    %v1678 = vsel %vm624, %v1677, %v1671
    %v1679 = vsel %vm999, %v1678, %v1675
    %v1680 = vadd.f32 %v1000, %v25
    %v1681 = vadd.f32 %v1679, %v26
    %v1682 = vsel %vm51, %v1680, 0.0
    %1683 = vadd.xlane.f32.xlu0 %v1682
    %v1684 = vpop.xlane.xlu0 %1683
    %v1685 = vsel %vm51, %v1681, 0.0
    %1686 = vadd.xlane.f32.xlu0 %v1685
    %v1687 = vpop.xlane.xlu0 %1686
    %v1688 = vmul.f32 %v1684, %v58
    %v1689 = vmul.f32 %v1687, %v58
    %v1690 = vsub.f32 %v1680, %v1688
    %v1691 = vsub.f32 %v1681, %v1689
    %v1692 = vmul.f32 %v1690, %v1690
    %v1693 = vmul.f32 %v1691, %v1691
    %v1694 = vsel %vm51, %v1692, 0.0
    %1695 = vadd.xlane.f32.xlu0 %v1694
    %v1696 = vpop.xlane.xlu0 %1695
    %v1697 = vsel %vm51, %v1693, 0.0
    %1698 = vadd.xlane.f32.xlu0 %v1697
    %v1699 = vpop.xlane.xlu0 %1698
    %v1700 = vmul.f32 %v1696, %v58
    %v1701 = vmul.f32 %v1699, %v58
    %v1702 = vadd.f32 %v1700, 1e-06
    %v1703 = vadd.f32 %v1701, 1e-06
    %v1704 = vrsqrt.pop %v1702
    %v1705 = vrsqrt.pop %v1703
    %v1706 = vmul.f32 %v1690, %v1704
    %v1707 = vmul.f32 %v1691, %v1705
    %v1708 = vlaneseq
    %v1709 = vshrl.u32 %v1708, 7
    %v1710 = vsub.s32 6, %v1709
    %v1711 = vrot.slane %v27, %v1710
    %v1712 = vmul.f32 %v1706, %v1711
    %v1713 = vmul.f32 %v1707, %v1711
    %v1714 = vlaneseq
    %v1715 = vshrl.u32 %v1714, 7
    %v1716 = vsub.s32 7, %v1715
    %v1717 = vrot.slane %v27, %v1716
    %v1718 = vadd.f32 %v1712, %v1717
    %v1719 = vadd.f32 %v1713, %v1717
    %v1720 = vlaneseq
    %v1721 = vshrl.u32 %v1720, 7
    %v1722 = vsub.s32 2, %v1721
    %v1723 = vrot.slane %v27, %v1722
    %v1725 = vsel %vm51, %v1718, 0
    %v1728 = vsel %vm51, %v1719, 0
    %1730 = vmatprep.subr.mxu0 0.0
    %1731 = vmatpush1.msra.mxu0 %v47
    %1732 = vmatprep.subr.mxu0 0.0
    %1733 = vmatpush1.msra.mxu0 %v48
    %1734 = vmatprep.subr.mxu0 0.0
    %1735 = vmatpush1.msra.mxu0 %v49
    %1736 = vmatprep.subr.mxu0 0.0
    %1737 = vmatpush1.msra.mxu0 %v50
    %1738 = vmatprep.subr.mxu0 0.0
    %1739 = vmatpush1.msra.mxu0 0.0
    %1740 = vmatprep.subr.mxu0 0.0
    %1741 = vmatpush1.msra.mxu0 0.0
    %1742 = vmatprep.subr.mxu0 0.0
    %1743 = vmatpush1.msra.mxu0 0.0
    %1744 = vmatprep.subr.mxu0 0.0
    %1745 = vmatpush1.msra.mxu0 0.0
    %1746 = vmatprep.subr.mxu0 0.0
    %1747 = vmatpush1.msra.mxu0 0.0
    %1748 = vmatprep.subr.mxu0 0.0
    %1749 = vmatpush1.msra.mxu0 0.0
    %1750 = vmatprep.subr.mxu0 0.0
    %1751 = vmatpush1.msra.mxu0 0.0
    %1752 = vmatprep.subr.mxu0 0.0
    %1753 = vmatpush1.msra.mxu0 0.0
    %1754 = vmatprep.subr.mxu0 0.0
    %1755 = vmatpush1.msra.mxu0 0.0
    %1756 = vmatprep.subr.mxu0 0.0
    %1757 = vmatpush1.msra.mxu0 0.0
    %1758 = vmatprep.subr.mxu0 0.0
    %1759 = vmatpush1.msra.mxu0 0.0
    %1760 = vmatprep.subr.mxu0 0.0
    %1761 = vmatpush1.msra.mxu0 0.0
    %1762 = vmatprep.subr.mxu0 0.0
    %1763 = vmatpush1.msra.mxu0 0.0
    %1764 = vmatprep.subr.mxu0 0.0
    %1765 = vmatpush1.msra.mxu0 0.0
    %1766 = vmatprep.subr.mxu0 0.0
    %1767 = vmatpush1.msra.mxu0 0.0
    %1768 = vmatprep.subr.mxu0 0.0
    %1769 = vmatpush1.msra.mxu0 0.0
    %1770 = vmatprep.subr.mxu0 0.0
    %1771 = vmatpush1.msra.mxu0 0.0
    %1772 = vmatprep.subr.mxu0 0.0
    %1773 = vmatpush1.msra.mxu0 0.0
    %1774 = vmatprep.subr.mxu0 0.0
    %1775 = vmatpush1.msra.mxu0 0.0
    %1776 = vmatprep.subr.mxu0 0.0
    %1777 = vmatpush1.msra.mxu0 0.0
    %1778 = vmatprep.subr.mxu0 0.0
    %1779 = vmatpush1.msra.mxu0 0.0
    %1780 = vmatprep.subr.mxu0 0.0
    %1781 = vmatpush1.msra.mxu0 0.0
    %1782 = vmatprep.subr.mxu0 0.0
    %1783 = vmatpush1.msra.mxu0 0.0
    %1784 = vmatprep.subr.mxu0 0.0
    %1785 = vmatpush1.msra.mxu0 0.0
    %1786 = vmatprep.subr.mxu0 0.0
    %1787 = vmatpush1.msra.mxu0 0.0
    %1788 = vmatprep.subr.mxu0 0.0
    %1789 = vmatpush1.msra.mxu0 0.0
    %1790 = vmatprep.subr.mxu0 0.0
    %1791 = vmatpush1.msra.mxu0 0.0
    %1792 = vmatprep.subr.mxu0 0.0
    %1793 = vmatpush1.msra.mxu0 0.0
    %1794 = vmatprep.mubr.f32.mxu0 0.0
    %1795 = vmatmul.mubr.f32.gmra.mrb[0].mxu0 %v1725
    %v1796 = vpop.f32.mrb[0].mxu0
    %v1797 = vadd.f32 %v1723, %v1796
    %v1798 = vpop.f32.mrb[0].mxu0
    %1799 = vmatprep.mubr.f32.mxu0 0.0
    %1800 = vmatmul.mubr.f32.gmra.mrb[0].mxu0 %v1728
    %v1801 = vpop.f32.mrb[0].mxu0
    %v1802 = vadd.f32 %v1723, %v1801
    %v1803 = vpop.f32.mrb[0].mxu0
    %1804 = vdwg.mxu0
    %v1805 = vmul.f32 %v1797, 0.5
    %v1806 = vmul.f32 %v1802, 0.5
    %v1807 = vmul.f32 %v1797, 0.70710677
    %v1808 = vmul.f32 %v1802, 0.70710677
    %vm1809 = vcmp.ge.f32.partialorder %v1807, 0.0
    %vm1810 = vcmp.ge.f32.partialorder %v1808, 0.0
    %v1811 = vsel %vm1809, 1.0, -1.0
    %v1812 = vsel %vm1810, 1.0, -1.0
    %v1813 = vand.u32 2147483647, %v1807
    %v1814 = vand.u32 2147483647, %v1808
    %v1815 = vmul.f32 %v1813, 0.3275911
    %v1816 = vmul.f32 %v1814, 0.3275911
    %v1817 = vadd.f32 %v1815, 1.0
    %v1818 = vadd.f32 %v1816, 1.0
    %v1819 = vrcp.pop %v1817
    %v1820 = vmul.f32 1.0, %v1819
    %v1821 = vrcp.pop %v1818
    %v1822 = vmul.f32 1.0, %v1821
    %v1823 = vmul.f32 %v1820, 1.0614054
    %v1824 = vmul.f32 %v1822, 1.0614054
    %v1825 = vadd.f32 %v1823, -1.4531521
    %v1826 = vadd.f32 %v1824, -1.4531521
    %v1827 = vmul.f32 %v1825, %v1820
    %v1828 = vmul.f32 %v1826, %v1822
    %v1829 = vadd.f32 %v1827, 1.4214138
    %v1830 = vadd.f32 %v1828, 1.4214138
    %v1831 = vmul.f32 %v1829, %v1820
    %v1832 = vmul.f32 %v1830, %v1822
    %v1833 = vadd.f32 %v1831, -0.28449672
    %v1834 = vadd.f32 %v1832, -0.28449672
    %v1835 = vmul.f32 %v1833, %v1820
    %v1836 = vmul.f32 %v1834, %v1822
    %v1837 = vadd.f32 %v1835, 0.2548296
    %v1838 = vadd.f32 %v1836, 0.2548296
    %v1839 = vmul.f32 %v1837, %v1820
    %v1840 = vmul.f32 %v1838, %v1822
    %v1841 = vsub.f32 0.0, %v1813
    %v1842 = vsub.f32 0.0, %v1814
    %v1843 = vmul.f32 %v1841, %v1813
    %v1844 = vmul.f32 %v1842, %v1814
    %v1845 = vmul.f32 %v1843, 1.442695
    %v1846 = vpow.pop %v1845
    %v1847 = vmul.f32 %v1844, 1.442695
    %v1848 = vpow.pop %v1847
    %v1849 = vmul.f32 %v1839, %v1846
    %v1850 = vmul.f32 %v1840, %v1848
    %v1851 = vsub.f32 1.0, %v1849
    %v1852 = vsub.f32 1.0, %v1850
    %v1853 = vmul.f32 %v1811, %v1851
    %v1854 = vmul.f32 %v1812, %v1852
    %v1855 = vadd.f32 %v1853, 1.0
    %v1856 = vadd.f32 %v1854, 1.0
    %v1857 = vmul.f32 %v1805, %v1855
    %v1858 = vmul.f32 %v1806, %v1856
    %v1859 = vlaneseq
    %v1860 = vshrl.u32 %v1859, 7
    %v1861 = vsub.s32 3, %v1860
    %v1862 = vrot.slane %v27, %v1861
    %vm1863 = vcmask 523264
    %v1865 = vsel %vm1863, %v1857, 0
    %v1868 = vsel %vm1863, %v1858, 0
    %1870 = vmatprep.subr.mxu0 0.0
    %1871 = vmatpush1.msra.mxu0 %v34
    %1872 = vmatprep.subr.mxu0 0.0
    %1873 = vmatpush1.msra.mxu0 %v35
    %1874 = vmatprep.subr.mxu0 0.0
    %1875 = vmatpush1.msra.mxu0 %v36
    %1876 = vmatprep.subr.mxu0 0.0
    %1877 = vmatpush1.msra.mxu0 %v37
    %1878 = vmatprep.subr.mxu0 0.0
    %1879 = vmatpush1.msra.mxu0 %v38
    %1880 = vmatprep.subr.mxu0 0.0
    %1881 = vmatpush1.msra.mxu0 %v39
    %1882 = vmatprep.subr.mxu0 0.0
    %1883 = vmatpush1.msra.mxu0 %v40
    %1884 = vmatprep.subr.mxu0 0.0
    %1885 = vmatpush1.msra.mxu0 %v41
    %1886 = vmatprep.subr.mxu0 0.0
    %1887 = vmatpush1.msra.mxu0 0.0
    %1888 = vmatprep.subr.mxu0 0.0
    %1889 = vmatpush1.msra.mxu0 0.0
    %1890 = vmatprep.subr.mxu0 0.0
    %1891 = vmatpush1.msra.mxu0 0.0
    %1892 = vmatprep.subr.mxu0 0.0
    %1893 = vmatpush1.msra.mxu0 0.0
    %1894 = vmatprep.subr.mxu0 0.0
    %1895 = vmatpush1.msra.mxu0 0.0
    %1896 = vmatprep.subr.mxu0 0.0
    %1897 = vmatpush1.msra.mxu0 0.0
    %1898 = vmatprep.subr.mxu0 0.0
    %1899 = vmatpush1.msra.mxu0 0.0
    %1900 = vmatprep.subr.mxu0 0.0
    %1901 = vmatpush1.msra.mxu0 0.0
    %1902 = vmatprep.subr.mxu0 0.0
    %1903 = vmatpush1.msra.mxu0 0.0
    %1904 = vmatprep.subr.mxu0 0.0
    %1905 = vmatpush1.msra.mxu0 0.0
    %1906 = vmatprep.subr.mxu0 0.0
    %1907 = vmatpush1.msra.mxu0 0.0
    %1908 = vmatprep.subr.mxu0 0.0
    %1909 = vmatpush1.msra.mxu0 0.0
    %1910 = vmatprep.subr.mxu0 0.0
    %1911 = vmatpush1.msra.mxu0 0.0
    %1912 = vmatprep.subr.mxu0 0.0
    %1913 = vmatpush1.msra.mxu0 0.0
    %1914 = vmatprep.subr.mxu0 0.0
    %1915 = vmatpush1.msra.mxu0 0.0
    %1916 = vmatprep.subr.mxu0 0.0
    %1917 = vmatpush1.msra.mxu0 0.0
    %1918 = vmatprep.subr.mxu0 0.0
    %1919 = vmatpush1.msra.mxu0 0.0
    %1920 = vmatprep.subr.mxu0 0.0
    %1921 = vmatpush1.msra.mxu0 0.0
    %1922 = vmatprep.subr.mxu0 0.0
    %1923 = vmatpush1.msra.mxu0 0.0
    %1924 = vmatprep.subr.mxu0 0.0
    %1925 = vmatpush1.msra.mxu0 0.0
    %1926 = vmatprep.subr.mxu0 0.0
    %1927 = vmatpush1.msra.mxu0 0.0
    %1928 = vmatprep.subr.mxu0 0.0
    %1929 = vmatpush1.msra.mxu0 0.0
    %1930 = vmatprep.subr.mxu0 0.0
    %1931 = vmatpush1.msra.mxu0 0.0
    %1932 = vmatprep.subr.mxu0 0.0
    %1933 = vmatpush1.msra.mxu0 0.0
    %1934 = vmatprep.mubr.f32.mxu0 0.0
    %1935 = vmatmul.mubr.f32.gmra.mrb[0].mxu0 %v1865
    %v1936 = vpop.f32.mrb[0].mxu0
    %v1937 = vadd.f32 %v1862, %v1936
    %v1938 = vpop.f32.mrb[0].mxu0
    %1939 = vmatprep.mubr.f32.mxu0 0.0
    %1940 = vmatmul.mubr.f32.gmra.mrb[0].mxu0 %v1868
    %v1941 = vpop.f32.mrb[0].mxu0
    %v1942 = vadd.f32 %v1862, %v1941
    %v1943 = vpop.f32.mrb[0].mxu0
    %1944 = vdwg.mxu0
    %v1945 = vadd.f32 %v1937, %v1680
    %v1946 = vadd.f32 %v1942, %v1681
    %s1947 = scalar_lea.vmem %s2, 96
    %v1948 = vld [vmem:[%s1947] sm:$0xff]
    %v1949 = vld [vmem:[%s1947 + $0x8] sm:$0xff]
    %v1950 = vld [vmem:[%s1947 + $0x10] sm:$0xff]
    %v1951 = vld [vmem:[%s1947 + $0x18] sm:$0xff]
    %v1952 = vld [vmem:[%s1947 + $0x20] sm:$0xff]
    %v1953 = vld [vmem:[%s1947 + $0x28] sm:$0xff]
    %v1954 = vld [vmem:[%s1947 + $0x30] sm:$0xff]
    %v1955 = vld [vmem:[%s1947 + $0x38] sm:$0xff]
    %v1956 = vld [vmem:[%s1947 + $0x40] sm:$0xff]
    %v1957 = vld [vmem:[%s1947 + $0x48] sm:$0xff]
    %v1958 = vld [vmem:[%s1947 + $0x50] sm:$0xff]
    %v1959 = vld [vmem:[%s1947 + $0x58] sm:$0xff]
    %s1960 = scalar_lea.vmem %s3, 64
    %v1961 = vld [vmem:[%s1960] sm:$0xff]
    %v1962 = vld [vmem:[%s1960 + $0x8] sm:$0xff]
    %v1963 = vld [vmem:[%s1960 + $0x10] sm:$0xff]
    %v1964 = vld [vmem:[%s1960 + $0x18] sm:$0xff]
    %s1965 = scalar_lea.vmem %s3, 96
    %v1966 = vld [vmem:[%s1965] sm:$0xff]
    %v1967 = vld [vmem:[%s1965 + $0x8] sm:$0xff]
    %v1968 = vld [vmem:[%s1965 + $0x10] sm:$0xff]
    %v1969 = vld [vmem:[%s1965 + $0x18] sm:$0xff]
    %v1970 = vsel %vm51, %v1945, 0.0
    %1971 = vadd.xlane.f32.xlu0 %v1970
    %v1972 = vpop.xlane.xlu0 %1971
    %v1973 = vsel %vm51, %v1946, 0.0
    %1974 = vadd.xlane.f32.xlu0 %v1973
    %v1975 = vpop.xlane.xlu0 %1974
    %v1976 = vmul.f32 %v1972, %v58
    %v1977 = vmul.f32 %v1975, %v58
    %v1978 = vsub.f32 %v1945, %v1976
    %v1979 = vsub.f32 %v1946, %v1977
    %v1980 = vmul.f32 %v1978, %v1978
    %v1981 = vmul.f32 %v1979, %v1979
    %v1982 = vsel %vm51, %v1980, 0.0
    %1983 = vadd.xlane.f32.xlu0 %v1982
    %v1984 = vpop.xlane.xlu0 %1983
    %v1985 = vsel %vm51, %v1981, 0.0
    %1986 = vadd.xlane.f32.xlu0 %v1985
    %v1987 = vpop.xlane.xlu0 %1986
    %v1988 = vmul.f32 %v1984, %v58
    %v1989 = vmul.f32 %v1987, %v58
    %v1990 = vadd.f32 %v1988, 1e-06
    %v1991 = vadd.f32 %v1989, 1e-06
    %v1992 = vrsqrt.pop %v1990
    %v1993 = vrsqrt.pop %v1991
    %v1994 = vmul.f32 %v1978, %v1992
    %v1995 = vmul.f32 %v1979, %v1993
    %v1996 = vlaneseq
    %v1997 = vshrl.u32 %v1996, 7
    %v1998 = vsub.s32 4, %v1997
    %v1999 = vrot.slane %v28, %v1998
    %v2000 = vmul.f32 %v1994, %v1999
    %v2001 = vmul.f32 %v1995, %v1999
    %v2002 = vlaneseq
    %v2003 = vshrl.u32 %v2002, 7
    %v2004 = vsub.s32 5, %v2003
    %v2005 = vrot.slane %v28, %v2004
    %v2006 = vadd.f32 %v2000, %v2005
    %v2007 = vadd.f32 %v2001, %v2005
    %v2008 = vlaneseq
    %v2009 = vshrl.u32 %v2008, 7
    %v2010 = vsub.s32 0, %v2009
    %v2011 = vrot.slane %v28, %v2010
    %v2013 = vsel %vm51, %v2006, 0
    %v2016 = vsel %vm51, %v2007, 0
    %2018 = vmatprep.subr.mxu0 0.0
    %2019 = vmatpush1.msra.mxu0 %v1948
    %2020 = vmatprep.subr.mxu0 0.0
    %2021 = vmatpush1.msra.mxu0 %v1949
    %2022 = vmatprep.subr.mxu0 0.0
    %2023 = vmatpush1.msra.mxu0 %v1950
    %2024 = vmatprep.subr.mxu0 0.0
    %2025 = vmatpush1.msra.mxu0 %v1951
    %2026 = vmatprep.subr.mxu0 0.0
    %2027 = vmatpush1.msra.mxu0 0.0
    %2028 = vmatprep.subr.mxu0 0.0
    %2029 = vmatpush1.msra.mxu0 0.0
    %2030 = vmatprep.subr.mxu0 0.0
    %2031 = vmatpush1.msra.mxu0 0.0
    %2032 = vmatprep.subr.mxu0 0.0
    %2033 = vmatpush1.msra.mxu0 0.0
    %2034 = vmatprep.subr.mxu0 0.0
    %2035 = vmatpush1.msra.mxu0 0.0
    %2036 = vmatprep.subr.mxu0 0.0
    %2037 = vmatpush1.msra.mxu0 0.0
    %2038 = vmatprep.subr.mxu0 0.0
    %2039 = vmatpush1.msra.mxu0 0.0
    %2040 = vmatprep.subr.mxu0 0.0
    %2041 = vmatpush1.msra.mxu0 0.0
    %2042 = vmatprep.subr.mxu0 0.0
    %2043 = vmatpush1.msra.mxu0 0.0
    %2044 = vmatprep.subr.mxu0 0.0
    %2045 = vmatpush1.msra.mxu0 0.0
    %2046 = vmatprep.subr.mxu0 0.0
    %2047 = vmatpush1.msra.mxu0 0.0
    %2048 = vmatprep.subr.mxu0 0.0
    %2049 = vmatpush1.msra.mxu0 0.0
    %2050 = vmatprep.subr.mxu0 0.0
    %2051 = vmatpush1.msra.mxu0 0.0
    %2052 = vmatprep.subr.mxu0 0.0
    %2053 = vmatpush1.msra.mxu0 0.0
    %2054 = vmatprep.subr.mxu0 0.0
    %2055 = vmatpush1.msra.mxu0 0.0
    %2056 = vmatprep.subr.mxu0 0.0
    %2057 = vmatpush1.msra.mxu0 0.0
    %2058 = vmatprep.subr.mxu0 0.0
    %2059 = vmatpush1.msra.mxu0 0.0
    %2060 = vmatprep.subr.mxu0 0.0
    %2061 = vmatpush1.msra.mxu0 0.0
    %2062 = vmatprep.subr.mxu0 0.0
    %2063 = vmatpush1.msra.mxu0 0.0
    %2064 = vmatprep.subr.mxu0 0.0
    %2065 = vmatpush1.msra.mxu0 0.0
    %2066 = vmatprep.subr.mxu0 0.0
    %2067 = vmatpush1.msra.mxu0 0.0
    %2068 = vmatprep.subr.mxu0 0.0
    %2069 = vmatpush1.msra.mxu0 0.0
    %2070 = vmatprep.subr.mxu0 0.0
    %2071 = vmatpush1.msra.mxu0 0.0
    %2072 = vmatprep.subr.mxu0 0.0
    %2073 = vmatpush1.msra.mxu0 0.0
    %2074 = vmatprep.subr.mxu0 0.0
    %2075 = vmatpush1.msra.mxu0 0.0
    %2076 = vmatprep.subr.mxu0 0.0
    %2077 = vmatpush1.msra.mxu0 0.0
    %2078 = vmatprep.subr.mxu0 0.0
    %2079 = vmatpush1.msra.mxu0 0.0
    %2080 = vmatprep.subr.mxu0 0.0
    %2081 = vmatpush1.msra.mxu0 0.0
    %2082 = vmatprep.mubr.f32.mxu0 0.0
    %2083 = vmatmul.mubr.f32.gmra.mrb[0].mxu0 %v2013
    %v2084 = vpop.f32.mrb[0].mxu0
    %v2085 = vadd.f32 %v2011, %v2084
    %v2086 = vpop.f32.mrb[0].mxu0
    %2087 = vmatprep.mubr.f32.mxu0 0.0
    %2088 = vmatmul.mubr.f32.gmra.mrb[0].mxu0 %v2016
    %v2089 = vpop.f32.mrb[0].mxu0
    %v2090 = vadd.f32 %v2011, %v2089
    %v2091 = vpop.f32.mrb[0].mxu0
    %2092 = vdwg.mxu0
    %v2093 = vlaneseq
    %v2094 = vshrl.u32 %v2093, 7
    %v2095 = vsub.s32 1, %v2094
    %v2096 = vrot.slane %v28, %v2095
    %2097 = vmatprep.subr.mxu0 0.0
    %2098 = vmatpush1.msra.mxu0 %v1961
    %2099 = vmatprep.subr.mxu0 0.0
    %2100 = vmatpush1.msra.mxu0 %v1962
    %2101 = vmatprep.subr.mxu0 0.0
    %2102 = vmatpush1.msra.mxu0 %v1963
    %2103 = vmatprep.subr.mxu0 0.0
    %2104 = vmatpush1.msra.mxu0 %v1964
    %2105 = vmatprep.subr.mxu0 0.0
    %2106 = vmatpush1.msra.mxu0 0.0
    %2107 = vmatprep.subr.mxu0 0.0
    %2108 = vmatpush1.msra.mxu0 0.0
    %2109 = vmatprep.subr.mxu0 0.0
    %2110 = vmatpush1.msra.mxu0 0.0
    %2111 = vmatprep.subr.mxu0 0.0
    %2112 = vmatpush1.msra.mxu0 0.0
    %2113 = vmatprep.subr.mxu0 0.0
    %2114 = vmatpush1.msra.mxu0 0.0
    %2115 = vmatprep.subr.mxu0 0.0
    %2116 = vmatpush1.msra.mxu0 0.0
    %2117 = vmatprep.subr.mxu0 0.0
    %2118 = vmatpush1.msra.mxu0 0.0
    %2119 = vmatprep.subr.mxu0 0.0
    %2120 = vmatpush1.msra.mxu0 0.0
    %2121 = vmatprep.subr.mxu0 0.0
    %2122 = vmatpush1.msra.mxu0 0.0
    %2123 = vmatprep.subr.mxu0 0.0
    %2124 = vmatpush1.msra.mxu0 0.0
    %2125 = vmatprep.subr.mxu0 0.0
    %2126 = vmatpush1.msra.mxu0 0.0
    %2127 = vmatprep.subr.mxu0 0.0
    %2128 = vmatpush1.msra.mxu0 0.0
    %2129 = vmatprep.subr.mxu0 0.0
    %2130 = vmatpush1.msra.mxu0 0.0
    %2131 = vmatprep.subr.mxu0 0.0
    %2132 = vmatpush1.msra.mxu0 0.0
    %2133 = vmatprep.subr.mxu0 0.0
    %2134 = vmatpush1.msra.mxu0 0.0
    %2135 = vmatprep.subr.mxu0 0.0
    %2136 = vmatpush1.msra.mxu0 0.0
    %2137 = vmatprep.subr.mxu0 0.0
    %2138 = vmatpush1.msra.mxu0 0.0
    %2139 = vmatprep.subr.mxu0 0.0
    %2140 = vmatpush1.msra.mxu0 0.0
    %2141 = vmatprep.subr.mxu0 0.0
    %2142 = vmatpush1.msra.mxu0 0.0
    %2143 = vmatprep.subr.mxu0 0.0
    %2144 = vmatpush1.msra.mxu0 0.0
    %2145 = vmatprep.subr.mxu0 0.0
    %2146 = vmatpush1.msra.mxu0 0.0
    %2147 = vmatprep.subr.mxu0 0.0
    %2148 = vmatpush1.msra.mxu0 0.0
    %2149 = vmatprep.subr.mxu0 0.0
    %2150 = vmatpush1.msra.mxu0 0.0
    %2151 = vmatprep.subr.mxu0 0.0
    %2152 = vmatpush1.msra.mxu0 0.0
    %2153 = vmatprep.subr.mxu0 0.0
    %2154 = vmatpush1.msra.mxu0 0.0
    %2155 = vmatprep.subr.mxu0 0.0
    %2156 = vmatpush1.msra.mxu0 0.0
    %2157 = vmatprep.subr.mxu0 0.0
    %2158 = vmatpush1.msra.mxu0 0.0
    %2159 = vmatprep.subr.mxu0 0.0
    %2160 = vmatpush1.msra.mxu0 0.0
    %2161 = vmatprep.mubr.f32.mxu0 0.0
    %2162 = vmatmul.mubr.f32.gmra.mrb[0].mxu0 %v181
    %v2163 = vpop.f32.mrb[0].mxu0
    %v2164 = vadd.f32 %v2096, %v2163
    %v2165 = vpop.f32.mrb[0].mxu0
    %2166 = vmatprep.mubr.f32.mxu0 0.0
    %2167 = vmatmul.mubr.f32.gmra.mrb[0].mxu0 %v184
    %v2168 = vpop.f32.mrb[0].mxu0
    %v2169 = vadd.f32 %v2096, %v2168
    %v2170 = vpop.f32.mrb[0].mxu0
    %2171 = vmatprep.mubr.f32.mxu0 0.0
    %2172 = vmatmul.mubr.f32.gmra.mrb[0].mxu0 %v187
    %v2173 = vpop.f32.mrb[0].mxu0
    %v2174 = vadd.f32 %v2096, %v2173
    %v2175 = vpop.f32.mrb[0].mxu0
    %2176 = vmatprep.mubr.f32.mxu0 0.0
    %2177 = vmatmul.mubr.f32.gmra.mrb[0].mxu0 %v190
    %v2178 = vpop.f32.mrb[0].mxu0
    %v2179 = vadd.f32 %v2096, %v2178
    %v2180 = vpop.f32.mrb[0].mxu0
    %2181 = vdwg.mxu0
    %2184 = vrot.lane.b32.xlu0 %v2085, 120
    %v2185 = vpop.permute.xlu0 %2184
    %2186 = vrot.lane.b32.xlu0 %v2090, 120
    %v2187 = vpop.permute.xlu0 %2186
    %2188 = vrot.lane.b32.xlu0 %v2085, 112
    %v2189 = vpop.permute.xlu0 %2188
    %2190 = vrot.lane.b32.xlu0 %v2090, 112
    %v2191 = vpop.permute.xlu0 %2190
    %2192 = vrot.lane.b32.xlu0 %v2085, 104
    %v2193 = vpop.permute.xlu0 %2192
    %2194 = vrot.lane.b32.xlu0 %v2090, 104
    %v2195 = vpop.permute.xlu0 %2194
    %2200 = vrot.lane.b32.xlu0 %v2164, 120
    %v2201 = vpop.permute.xlu0 %2200
    %2202 = vrot.lane.b32.xlu0 %v2169, 120
    %v2203 = vpop.permute.xlu0 %2202
    %2204 = vrot.lane.b32.xlu0 %v2174, 120
    %v2205 = vpop.permute.xlu0 %2204
    %2206 = vrot.lane.b32.xlu0 %v2179, 120
    %v2207 = vpop.permute.xlu0 %2206
    %2208 = vrot.lane.b32.xlu0 %v2164, 112
    %v2209 = vpop.permute.xlu0 %2208
    %2210 = vrot.lane.b32.xlu0 %v2169, 112
    %v2211 = vpop.permute.xlu0 %2210
    %2212 = vrot.lane.b32.xlu0 %v2174, 112
    %v2213 = vpop.permute.xlu0 %2212
    %2214 = vrot.lane.b32.xlu0 %v2179, 112
    %v2215 = vpop.permute.xlu0 %2214
    %2216 = vrot.lane.b32.xlu0 %v2164, 104
    %v2217 = vpop.permute.xlu0 %2216
    %2218 = vrot.lane.b32.xlu0 %v2169, 104
    %v2219 = vpop.permute.xlu0 %2218
    %2220 = vrot.lane.b32.xlu0 %v2174, 104
    %v2221 = vpop.permute.xlu0 %2220
    %2222 = vrot.lane.b32.xlu0 %v2179, 104
    %v2223 = vpop.permute.xlu0 %2222
    %v2224 = vsel %vm319, %v2085, 0
    %v2226 = vsel %vm319, %v2164, 0
    %v2228 = vsel %vm319, %v2169, 0
    %2230 = vmatprep.subr.mxu0 0.0
    %2231 = vmatpush1.xpose.msra.mxu0 %v2226
    %2232 = vmatprep.subr.mxu0 0.0
    %2233 = vmatpush1.xpose.msra.mxu0 %v2228
    %2234 = vmatprep.subr.mxu0 0.0
    %2235 = vmatpush1.xpose.msra.mxu0 0.0
    %2236 = vmatprep.subr.mxu0 0.0
    %2237 = vmatpush1.xpose.msra.mxu0 0.0
    %2238 = vmatprep.subr.mxu0 0.0
    %2239 = vmatpush1.xpose.msra.mxu0 0.0
    %2240 = vmatprep.subr.mxu0 0.0
    %2241 = vmatpush1.xpose.msra.mxu0 0.0
    %2242 = vmatprep.subr.mxu0 0.0
    %2243 = vmatpush1.xpose.msra.mxu0 0.0
    %2244 = vmatprep.subr.mxu0 0.0
    %2245 = vmatpush1.xpose.msra.mxu0 0.0
    %2246 = vmatprep.subr.mxu0 0.0
    %2247 = vmatpush1.xpose.msra.mxu0 0.0
    %2248 = vmatprep.subr.mxu0 0.0
    %2249 = vmatpush1.xpose.msra.mxu0 0.0
    %2250 = vmatprep.subr.mxu0 0.0
    %2251 = vmatpush1.xpose.msra.mxu0 0.0
    %2252 = vmatprep.subr.mxu0 0.0
    %2253 = vmatpush1.xpose.msra.mxu0 0.0
    %2254 = vmatprep.subr.mxu0 0.0
    %2255 = vmatpush1.xpose.msra.mxu0 0.0
    %2256 = vmatprep.subr.mxu0 0.0
    %2257 = vmatpush1.xpose.msra.mxu0 0.0
    %2258 = vmatprep.subr.mxu0 0.0
    %2259 = vmatpush1.xpose.msra.mxu0 0.0
    %2260 = vmatprep.subr.mxu0 0.0
    %2261 = vmatpush1.xpose.msra.mxu0 0.0
    %2262 = vmatprep.subr.mxu0 0.0
    %2263 = vmatpush1.xpose.msra.mxu0 0.0
    %2264 = vmatprep.subr.mxu0 0.0
    %2265 = vmatpush1.xpose.msra.mxu0 0.0
    %2266 = vmatprep.subr.mxu0 0.0
    %2267 = vmatpush1.xpose.msra.mxu0 0.0
    %2268 = vmatprep.subr.mxu0 0.0
    %2269 = vmatpush1.xpose.msra.mxu0 0.0
    %2270 = vmatprep.subr.mxu0 0.0
    %2271 = vmatpush1.xpose.msra.mxu0 0.0
    %2272 = vmatprep.subr.mxu0 0.0
    %2273 = vmatpush1.xpose.msra.mxu0 0.0
    %2274 = vmatprep.subr.mxu0 0.0
    %2275 = vmatpush1.xpose.msra.mxu0 0.0
    %2276 = vmatprep.subr.mxu0 0.0
    %2277 = vmatpush1.xpose.msra.mxu0 0.0
    %2278 = vmatprep.subr.mxu0 0.0
    %2279 = vmatpush1.xpose.msra.mxu0 0.0
    %2280 = vmatprep.subr.mxu0 0.0
    %2281 = vmatpush1.xpose.msra.mxu0 0.0
    %2282 = vmatprep.subr.mxu0 0.0
    %2283 = vmatpush1.xpose.msra.mxu0 0.0
    %2284 = vmatprep.subr.mxu0 0.0
    %2285 = vmatpush1.xpose.msra.mxu0 0.0
    %2286 = vmatprep.subr.mxu0 0.0
    %2287 = vmatpush1.xpose.msra.mxu0 0.0
    %2288 = vmatprep.subr.mxu0 0.0
    %2289 = vmatpush1.xpose.msra.mxu0 0.0
    %2290 = vmatprep.subr.mxu0 0.0
    %2291 = vmatpush1.xpose.msra.mxu0 0.0
    %2292 = vmatprep.subr.mxu0 0.0
    %2293 = vmatpush1.xpose.msra.mxu0 0.0
    %2294 = vmatprep.mubr.f32.mxu0 0.0
    %2295 = vmatmul.mubr.f32.gmra.mrb[0].mxu0 %v2224
    %v2296 = vpop.f32.mrb[0].mxu0
    %v2297 = vadd.f32 0.0, %v2296
    %v2298 = vpop.f32.mrb[0].mxu0
    %2299 = vdwg.mxu0
    %v2300 = vsel %vm319, %v2185, 0
    %v2302 = vsel %vm319, %v2201, 0
    %v2304 = vsel %vm319, %v2203, 0
    %2306 = vmatprep.subr.mxu0 0.0
    %2307 = vmatpush1.xpose.msra.mxu0 %v2302
    %2308 = vmatprep.subr.mxu0 0.0
    %2309 = vmatpush1.xpose.msra.mxu0 %v2304
    %2310 = vmatprep.subr.mxu0 0.0
    %2311 = vmatpush1.xpose.msra.mxu0 0.0
    %2312 = vmatprep.subr.mxu0 0.0
    %2313 = vmatpush1.xpose.msra.mxu0 0.0
    %2314 = vmatprep.subr.mxu0 0.0
    %2315 = vmatpush1.xpose.msra.mxu0 0.0
    %2316 = vmatprep.subr.mxu0 0.0
    %2317 = vmatpush1.xpose.msra.mxu0 0.0
    %2318 = vmatprep.subr.mxu0 0.0
    %2319 = vmatpush1.xpose.msra.mxu0 0.0
    %2320 = vmatprep.subr.mxu0 0.0
    %2321 = vmatpush1.xpose.msra.mxu0 0.0
    %2322 = vmatprep.subr.mxu0 0.0
    %2323 = vmatpush1.xpose.msra.mxu0 0.0
    %2324 = vmatprep.subr.mxu0 0.0
    %2325 = vmatpush1.xpose.msra.mxu0 0.0
    %2326 = vmatprep.subr.mxu0 0.0
    %2327 = vmatpush1.xpose.msra.mxu0 0.0
    %2328 = vmatprep.subr.mxu0 0.0
    %2329 = vmatpush1.xpose.msra.mxu0 0.0
    %2330 = vmatprep.subr.mxu0 0.0
    %2331 = vmatpush1.xpose.msra.mxu0 0.0
    %2332 = vmatprep.subr.mxu0 0.0
    %2333 = vmatpush1.xpose.msra.mxu0 0.0
    %2334 = vmatprep.subr.mxu0 0.0
    %2335 = vmatpush1.xpose.msra.mxu0 0.0
    %2336 = vmatprep.subr.mxu0 0.0
    %2337 = vmatpush1.xpose.msra.mxu0 0.0
    %2338 = vmatprep.subr.mxu0 0.0
    %2339 = vmatpush1.xpose.msra.mxu0 0.0
    %2340 = vmatprep.subr.mxu0 0.0
    %2341 = vmatpush1.xpose.msra.mxu0 0.0
    %2342 = vmatprep.subr.mxu0 0.0
    %2343 = vmatpush1.xpose.msra.mxu0 0.0
    %2344 = vmatprep.subr.mxu0 0.0
    %2345 = vmatpush1.xpose.msra.mxu0 0.0
    %2346 = vmatprep.subr.mxu0 0.0
    %2347 = vmatpush1.xpose.msra.mxu0 0.0
    %2348 = vmatprep.subr.mxu0 0.0
    %2349 = vmatpush1.xpose.msra.mxu0 0.0
    %2350 = vmatprep.subr.mxu0 0.0
    %2351 = vmatpush1.xpose.msra.mxu0 0.0
    %2352 = vmatprep.subr.mxu0 0.0
    %2353 = vmatpush1.xpose.msra.mxu0 0.0
    %2354 = vmatprep.subr.mxu0 0.0
    %2355 = vmatpush1.xpose.msra.mxu0 0.0
    %2356 = vmatprep.subr.mxu0 0.0
    %2357 = vmatpush1.xpose.msra.mxu0 0.0
    %2358 = vmatprep.subr.mxu0 0.0
    %2359 = vmatpush1.xpose.msra.mxu0 0.0
    %2360 = vmatprep.subr.mxu0 0.0
    %2361 = vmatpush1.xpose.msra.mxu0 0.0
    %2362 = vmatprep.subr.mxu0 0.0
    %2363 = vmatpush1.xpose.msra.mxu0 0.0
    %2364 = vmatprep.subr.mxu0 0.0
    %2365 = vmatpush1.xpose.msra.mxu0 0.0
    %2366 = vmatprep.subr.mxu0 0.0
    %2367 = vmatpush1.xpose.msra.mxu0 0.0
    %2368 = vmatprep.subr.mxu0 0.0
    %2369 = vmatpush1.xpose.msra.mxu0 0.0
    %2370 = vmatprep.mubr.f32.mxu0 0.0
    %2371 = vmatmul.mubr.f32.gmra.mrb[0].mxu0 %v2300
    %v2372 = vpop.f32.mrb[0].mxu0
    %v2373 = vadd.f32 0.0, %v2372
    %v2374 = vpop.f32.mrb[0].mxu0
    %2375 = vdwg.mxu0
    %v2376 = vsel %vm319, %v2189, 0
    %v2378 = vsel %vm319, %v2209, 0
    %v2380 = vsel %vm319, %v2211, 0
    %2382 = vmatprep.subr.mxu0 0.0
    %2383 = vmatpush1.xpose.msra.mxu0 %v2378
    %2384 = vmatprep.subr.mxu0 0.0
    %2385 = vmatpush1.xpose.msra.mxu0 %v2380
    %2386 = vmatprep.subr.mxu0 0.0
    %2387 = vmatpush1.xpose.msra.mxu0 0.0
    %2388 = vmatprep.subr.mxu0 0.0
    %2389 = vmatpush1.xpose.msra.mxu0 0.0
    %2390 = vmatprep.subr.mxu0 0.0
    %2391 = vmatpush1.xpose.msra.mxu0 0.0
    %2392 = vmatprep.subr.mxu0 0.0
    %2393 = vmatpush1.xpose.msra.mxu0 0.0
    %2394 = vmatprep.subr.mxu0 0.0
    %2395 = vmatpush1.xpose.msra.mxu0 0.0
    %2396 = vmatprep.subr.mxu0 0.0
    %2397 = vmatpush1.xpose.msra.mxu0 0.0
    %2398 = vmatprep.subr.mxu0 0.0
    %2399 = vmatpush1.xpose.msra.mxu0 0.0
    %2400 = vmatprep.subr.mxu0 0.0
    %2401 = vmatpush1.xpose.msra.mxu0 0.0
    %2402 = vmatprep.subr.mxu0 0.0
    %2403 = vmatpush1.xpose.msra.mxu0 0.0
    %2404 = vmatprep.subr.mxu0 0.0
    %2405 = vmatpush1.xpose.msra.mxu0 0.0
    %2406 = vmatprep.subr.mxu0 0.0
    %2407 = vmatpush1.xpose.msra.mxu0 0.0
    %2408 = vmatprep.subr.mxu0 0.0
    %2409 = vmatpush1.xpose.msra.mxu0 0.0
    %2410 = vmatprep.subr.mxu0 0.0
    %2411 = vmatpush1.xpose.msra.mxu0 0.0
    %2412 = vmatprep.subr.mxu0 0.0
    %2413 = vmatpush1.xpose.msra.mxu0 0.0
    %2414 = vmatprep.subr.mxu0 0.0
    %2415 = vmatpush1.xpose.msra.mxu0 0.0
    %2416 = vmatprep.subr.mxu0 0.0
    %2417 = vmatpush1.xpose.msra.mxu0 0.0
    %2418 = vmatprep.subr.mxu0 0.0
    %2419 = vmatpush1.xpose.msra.mxu0 0.0
    %2420 = vmatprep.subr.mxu0 0.0
    %2421 = vmatpush1.xpose.msra.mxu0 0.0
    %2422 = vmatprep.subr.mxu0 0.0
    %2423 = vmatpush1.xpose.msra.mxu0 0.0
    %2424 = vmatprep.subr.mxu0 0.0
    %2425 = vmatpush1.xpose.msra.mxu0 0.0
    %2426 = vmatprep.subr.mxu0 0.0
    %2427 = vmatpush1.xpose.msra.mxu0 0.0
    %2428 = vmatprep.subr.mxu0 0.0
    %2429 = vmatpush1.xpose.msra.mxu0 0.0
    %2430 = vmatprep.subr.mxu0 0.0
    %2431 = vmatpush1.xpose.msra.mxu0 0.0
    %2432 = vmatprep.subr.mxu0 0.0
    %2433 = vmatpush1.xpose.msra.mxu0 0.0
    %2434 = vmatprep.subr.mxu0 0.0
    %2435 = vmatpush1.xpose.msra.mxu0 0.0
    %2436 = vmatprep.subr.mxu0 0.0
    %2437 = vmatpush1.xpose.msra.mxu0 0.0
    %2438 = vmatprep.subr.mxu0 0.0
    %2439 = vmatpush1.xpose.msra.mxu0 0.0
    %2440 = vmatprep.subr.mxu0 0.0
    %2441 = vmatpush1.xpose.msra.mxu0 0.0
    %2442 = vmatprep.subr.mxu0 0.0
    %2443 = vmatpush1.xpose.msra.mxu0 0.0
    %2444 = vmatprep.subr.mxu0 0.0
    %2445 = vmatpush1.xpose.msra.mxu0 0.0
    %2446 = vmatprep.mubr.f32.mxu0 0.0
    %2447 = vmatmul.mubr.f32.gmra.mrb[0].mxu0 %v2376
    %v2448 = vpop.f32.mrb[0].mxu0
    %v2449 = vadd.f32 0.0, %v2448
    %v2450 = vpop.f32.mrb[0].mxu0
    %2451 = vdwg.mxu0
    %v2452 = vsel %vm319, %v2193, 0
    %v2454 = vsel %vm319, %v2217, 0
    %v2456 = vsel %vm319, %v2219, 0
    %2458 = vmatprep.subr.mxu0 0.0
    %2459 = vmatpush1.xpose.msra.mxu0 %v2454
    %2460 = vmatprep.subr.mxu0 0.0
    %2461 = vmatpush1.xpose.msra.mxu0 %v2456
    %2462 = vmatprep.subr.mxu0 0.0
    %2463 = vmatpush1.xpose.msra.mxu0 0.0
    %2464 = vmatprep.subr.mxu0 0.0
    %2465 = vmatpush1.xpose.msra.mxu0 0.0
    %2466 = vmatprep.subr.mxu0 0.0
    %2467 = vmatpush1.xpose.msra.mxu0 0.0
    %2468 = vmatprep.subr.mxu0 0.0
    %2469 = vmatpush1.xpose.msra.mxu0 0.0
    %2470 = vmatprep.subr.mxu0 0.0
    %2471 = vmatpush1.xpose.msra.mxu0 0.0
    %2472 = vmatprep.subr.mxu0 0.0
    %2473 = vmatpush1.xpose.msra.mxu0 0.0
    %2474 = vmatprep.subr.mxu0 0.0
    %2475 = vmatpush1.xpose.msra.mxu0 0.0
    %2476 = vmatprep.subr.mxu0 0.0
    %2477 = vmatpush1.xpose.msra.mxu0 0.0
    %2478 = vmatprep.subr.mxu0 0.0
    %2479 = vmatpush1.xpose.msra.mxu0 0.0
    %2480 = vmatprep.subr.mxu0 0.0
    %2481 = vmatpush1.xpose.msra.mxu0 0.0
    %2482 = vmatprep.subr.mxu0 0.0
    %2483 = vmatpush1.xpose.msra.mxu0 0.0
    %2484 = vmatprep.subr.mxu0 0.0
    %2485 = vmatpush1.xpose.msra.mxu0 0.0
    %2486 = vmatprep.subr.mxu0 0.0
    %2487 = vmatpush1.xpose.msra.mxu0 0.0
    %2488 = vmatprep.subr.mxu0 0.0
    %2489 = vmatpush1.xpose.msra.mxu0 0.0
    %2490 = vmatprep.subr.mxu0 0.0
    %2491 = vmatpush1.xpose.msra.mxu0 0.0
    %2492 = vmatprep.subr.mxu0 0.0
    %2493 = vmatpush1.xpose.msra.mxu0 0.0
    %2494 = vmatprep.subr.mxu0 0.0
    %2495 = vmatpush1.xpose.msra.mxu0 0.0
    %2496 = vmatprep.subr.mxu0 0.0
    %2497 = vmatpush1.xpose.msra.mxu0 0.0
    %2498 = vmatprep.subr.mxu0 0.0
    %2499 = vmatpush1.xpose.msra.mxu0 0.0
    %2500 = vmatprep.subr.mxu0 0.0
    %2501 = vmatpush1.xpose.msra.mxu0 0.0
    %2502 = vmatprep.subr.mxu0 0.0
    %2503 = vmatpush1.xpose.msra.mxu0 0.0
    %2504 = vmatprep.subr.mxu0 0.0
    %2505 = vmatpush1.xpose.msra.mxu0 0.0
    %2506 = vmatprep.subr.mxu0 0.0
    %2507 = vmatpush1.xpose.msra.mxu0 0.0
    %2508 = vmatprep.subr.mxu0 0.0
    %2509 = vmatpush1.xpose.msra.mxu0 0.0
    %2510 = vmatprep.subr.mxu0 0.0
    %2511 = vmatpush1.xpose.msra.mxu0 0.0
    %2512 = vmatprep.subr.mxu0 0.0
    %2513 = vmatpush1.xpose.msra.mxu0 0.0
    %2514 = vmatprep.subr.mxu0 0.0
    %2515 = vmatpush1.xpose.msra.mxu0 0.0
    %2516 = vmatprep.subr.mxu0 0.0
    %2517 = vmatpush1.xpose.msra.mxu0 0.0
    %2518 = vmatprep.subr.mxu0 0.0
    %2519 = vmatpush1.xpose.msra.mxu0 0.0
    %2520 = vmatprep.subr.mxu0 0.0
    %2521 = vmatpush1.xpose.msra.mxu0 0.0
    %2522 = vmatprep.mubr.f32.mxu0 0.0
    %2523 = vmatmul.mubr.f32.gmra.mrb[0].mxu0 %v2452
    %v2524 = vpop.f32.mrb[0].mxu0
    %v2525 = vadd.f32 0.0, %v2524
    %v2526 = vpop.f32.mrb[0].mxu0
    %2527 = vdwg.mxu0
    %v2528 = vsel %vm624, %v2297, -inf
    %2529 = vmax.xlane.f32.xlu0 %v2528
    %v2530 = vpop.xlane.xlu0 %2529
    %v2531 = vsel %vm624, %v2373, -inf
    %2532 = vmax.xlane.f32.xlu0 %v2531
    %v2533 = vpop.xlane.xlu0 %2532
    %v2534 = vsel %vm624, %v2449, -inf
    %2535 = vmax.xlane.f32.xlu0 %v2534
    %v2536 = vpop.xlane.xlu0 %2535
    %v2537 = vsel %vm624, %v2525, -inf
    %2538 = vmax.xlane.f32.xlu0 %v2537
    %v2539 = vpop.xlane.xlu0 %2538
    %v2540 = vsub.f32 %v2297, %v2530
    %v2541 = vsub.f32 %v2373, %v2533
    %v2542 = vsub.f32 %v2449, %v2536
    %v2543 = vsub.f32 %v2525, %v2539
    %v2544 = vmul.f32 %v2540, 1.442695
    %v2545 = vpow.pop %v2544
    %v2546 = vmul.f32 %v2541, 1.442695
    %v2547 = vpow.pop %v2546
    %v2548 = vmul.f32 %v2542, 1.442695
    %v2549 = vpow.pop %v2548
    %v2550 = vmul.f32 %v2543, 1.442695
    %v2551 = vpow.pop %v2550
    %v2552 = vsel %vm624, %v2545, 0.0
    %2553 = vadd.xlane.f32.xlu0 %v2552
    %v2554 = vpop.xlane.xlu0 %2553
    %v2555 = vsel %vm624, %v2547, 0.0
    %2556 = vadd.xlane.f32.xlu0 %v2555
    %v2557 = vpop.xlane.xlu0 %2556
    %v2558 = vsel %vm624, %v2549, 0.0
    %2559 = vadd.xlane.f32.xlu0 %v2558
    %v2560 = vpop.xlane.xlu0 %2559
    %v2561 = vsel %vm624, %v2551, 0.0
    %2562 = vadd.xlane.f32.xlu0 %v2561
    %v2563 = vpop.xlane.xlu0 %2562
    %v2564 = vrcp.pop %v2554
    %v2565 = vrcp.pop %v2557
    %v2566 = vrcp.pop %v2560
    %v2567 = vrcp.pop %v2563
    %v2568 = vmul.f32 %v2545, %v2564
    %v2569 = vmul.f32 %v2547, %v2565
    %v2570 = vmul.f32 %v2549, %v2566
    %v2571 = vmul.f32 %v2551, %v2567
    %2572 = vrot.lane.b32.xlu0 %v2164, 96
    %v2573 = vpop.permute.xlu0 %2572
    %2574 = vrot.lane.b32.xlu0 %v2169, 96
    %v2575 = vpop.permute.xlu0 %2574
    %v2579 = vsel %vm624, %v2568, 0
    %2581 = vmatprep.subr.mxu0 0.0
    %2582 = vmatpush1.msra.mxu0 %v2573
    %2583 = vmatprep.subr.mxu0 0.0
    %2584 = vmatpush1.msra.mxu0 %v2575
    %2585 = vmatprep.subr.mxu0 0.0
    %2586 = vmatpush1.msra.mxu0 0.0
    %2587 = vmatprep.subr.mxu0 0.0
    %2588 = vmatpush1.msra.mxu0 0.0
    %2589 = vmatprep.subr.mxu0 0.0
    %2590 = vmatpush1.msra.mxu0 0.0
    %2591 = vmatprep.subr.mxu0 0.0
    %2592 = vmatpush1.msra.mxu0 0.0
    %2593 = vmatprep.subr.mxu0 0.0
    %2594 = vmatpush1.msra.mxu0 0.0
    %2595 = vmatprep.subr.mxu0 0.0
    %2596 = vmatpush1.msra.mxu0 0.0
    %2597 = vmatprep.subr.mxu0 0.0
    %2598 = vmatpush1.msra.mxu0 0.0
    %2599 = vmatprep.subr.mxu0 0.0
    %2600 = vmatpush1.msra.mxu0 0.0
    %2601 = vmatprep.subr.mxu0 0.0
    %2602 = vmatpush1.msra.mxu0 0.0
    %2603 = vmatprep.subr.mxu0 0.0
    %2604 = vmatpush1.msra.mxu0 0.0
    %2605 = vmatprep.subr.mxu0 0.0
    %2606 = vmatpush1.msra.mxu0 0.0
    %2607 = vmatprep.subr.mxu0 0.0
    %2608 = vmatpush1.msra.mxu0 0.0
    %2609 = vmatprep.subr.mxu0 0.0
    %2610 = vmatpush1.msra.mxu0 0.0
    %2611 = vmatprep.subr.mxu0 0.0
    %2612 = vmatpush1.msra.mxu0 0.0
    %2613 = vmatprep.subr.mxu0 0.0
    %2614 = vmatpush1.msra.mxu0 0.0
    %2615 = vmatprep.subr.mxu0 0.0
    %2616 = vmatpush1.msra.mxu0 0.0
    %2617 = vmatprep.subr.mxu0 0.0
    %2618 = vmatpush1.msra.mxu0 0.0
    %2619 = vmatprep.subr.mxu0 0.0
    %2620 = vmatpush1.msra.mxu0 0.0
    %2621 = vmatprep.subr.mxu0 0.0
    %2622 = vmatpush1.msra.mxu0 0.0
    %2623 = vmatprep.subr.mxu0 0.0
    %2624 = vmatpush1.msra.mxu0 0.0
    %2625 = vmatprep.subr.mxu0 0.0
    %2626 = vmatpush1.msra.mxu0 0.0
    %2627 = vmatprep.subr.mxu0 0.0
    %2628 = vmatpush1.msra.mxu0 0.0
    %2629 = vmatprep.subr.mxu0 0.0
    %2630 = vmatpush1.msra.mxu0 0.0
    %2631 = vmatprep.subr.mxu0 0.0
    %2632 = vmatpush1.msra.mxu0 0.0
    %2633 = vmatprep.subr.mxu0 0.0
    %2634 = vmatpush1.msra.mxu0 0.0
    %2635 = vmatprep.subr.mxu0 0.0
    %2636 = vmatpush1.msra.mxu0 0.0
    %2637 = vmatprep.subr.mxu0 0.0
    %2638 = vmatpush1.msra.mxu0 0.0
    %2639 = vmatprep.subr.mxu0 0.0
    %2640 = vmatpush1.msra.mxu0 0.0
    %2641 = vmatprep.subr.mxu0 0.0
    %2642 = vmatpush1.msra.mxu0 0.0
    %2643 = vmatprep.subr.mxu0 0.0
    %2644 = vmatpush1.msra.mxu0 0.0
    %2645 = vmatprep.mubr.f32.mxu0 0.0
    %2646 = vmatmul.mubr.f32.gmra.mrb[0].mxu0 %v2579
    %v2647 = vpop.f32.mrb[0].mxu0
    %v2648 = vadd.f32 0.0, %v2647
    %v2649 = vpop.f32.mrb[0].mxu0
    %2650 = vdwg.mxu0
    %2651 = vrot.lane.b32.xlu0 %v2201, 96
    %v2652 = vpop.permute.xlu0 %2651
    %2653 = vrot.lane.b32.xlu0 %v2203, 96
    %v2654 = vpop.permute.xlu0 %2653
    %v2658 = vsel %vm624, %v2569, 0
    %2660 = vmatprep.subr.mxu0 0.0
    %2661 = vmatpush1.msra.mxu0 %v2652
    %2662 = vmatprep.subr.mxu0 0.0
    %2663 = vmatpush1.msra.mxu0 %v2654
    %2664 = vmatprep.subr.mxu0 0.0
    %2665 = vmatpush1.msra.mxu0 0.0
    %2666 = vmatprep.subr.mxu0 0.0
    %2667 = vmatpush1.msra.mxu0 0.0
    %2668 = vmatprep.subr.mxu0 0.0
    %2669 = vmatpush1.msra.mxu0 0.0
    %2670 = vmatprep.subr.mxu0 0.0
    %2671 = vmatpush1.msra.mxu0 0.0
    %2672 = vmatprep.subr.mxu0 0.0
    %2673 = vmatpush1.msra.mxu0 0.0
    %2674 = vmatprep.subr.mxu0 0.0
    %2675 = vmatpush1.msra.mxu0 0.0
    %2676 = vmatprep.subr.mxu0 0.0
    %2677 = vmatpush1.msra.mxu0 0.0
    %2678 = vmatprep.subr.mxu0 0.0
    %2679 = vmatpush1.msra.mxu0 0.0
    %2680 = vmatprep.subr.mxu0 0.0
    %2681 = vmatpush1.msra.mxu0 0.0
    %2682 = vmatprep.subr.mxu0 0.0
    %2683 = vmatpush1.msra.mxu0 0.0
    %2684 = vmatprep.subr.mxu0 0.0
    %2685 = vmatpush1.msra.mxu0 0.0
    %2686 = vmatprep.subr.mxu0 0.0
    %2687 = vmatpush1.msra.mxu0 0.0
    %2688 = vmatprep.subr.mxu0 0.0
    %2689 = vmatpush1.msra.mxu0 0.0
    %2690 = vmatprep.subr.mxu0 0.0
    %2691 = vmatpush1.msra.mxu0 0.0
    %2692 = vmatprep.subr.mxu0 0.0
    %2693 = vmatpush1.msra.mxu0 0.0
    %2694 = vmatprep.subr.mxu0 0.0
    %2695 = vmatpush1.msra.mxu0 0.0
    %2696 = vmatprep.subr.mxu0 0.0
    %2697 = vmatpush1.msra.mxu0 0.0
    %2698 = vmatprep.subr.mxu0 0.0
    %2699 = vmatpush1.msra.mxu0 0.0
    %2700 = vmatprep.subr.mxu0 0.0
    %2701 = vmatpush1.msra.mxu0 0.0
    %2702 = vmatprep.subr.mxu0 0.0
    %2703 = vmatpush1.msra.mxu0 0.0
    %2704 = vmatprep.subr.mxu0 0.0
    %2705 = vmatpush1.msra.mxu0 0.0
    %2706 = vmatprep.subr.mxu0 0.0
    %2707 = vmatpush1.msra.mxu0 0.0
    %2708 = vmatprep.subr.mxu0 0.0
    %2709 = vmatpush1.msra.mxu0 0.0
    %2710 = vmatprep.subr.mxu0 0.0
    %2711 = vmatpush1.msra.mxu0 0.0
    %2712 = vmatprep.subr.mxu0 0.0
    %2713 = vmatpush1.msra.mxu0 0.0
    %2714 = vmatprep.subr.mxu0 0.0
    %2715 = vmatpush1.msra.mxu0 0.0
    %2716 = vmatprep.subr.mxu0 0.0
    %2717 = vmatpush1.msra.mxu0 0.0
    %2718 = vmatprep.subr.mxu0 0.0
    %2719 = vmatpush1.msra.mxu0 0.0
    %2720 = vmatprep.subr.mxu0 0.0
    %2721 = vmatpush1.msra.mxu0 0.0
    %2722 = vmatprep.subr.mxu0 0.0
    %2723 = vmatpush1.msra.mxu0 0.0
    %2724 = vmatprep.mubr.f32.mxu0 0.0
    %2725 = vmatmul.mubr.f32.gmra.mrb[0].mxu0 %v2658
    %v2726 = vpop.f32.mrb[0].mxu0
    %v2727 = vadd.f32 0.0, %v2726
    %v2728 = vpop.f32.mrb[0].mxu0
    %2729 = vdwg.mxu0
    %2730 = vrot.lane.b32.xlu0 %v2209, 96
    %v2731 = vpop.permute.xlu0 %2730
    %2732 = vrot.lane.b32.xlu0 %v2211, 96
    %v2733 = vpop.permute.xlu0 %2732
    %v2737 = vsel %vm624, %v2570, 0
    %2739 = vmatprep.subr.mxu0 0.0
    %2740 = vmatpush1.msra.mxu0 %v2731
    %2741 = vmatprep.subr.mxu0 0.0
    %2742 = vmatpush1.msra.mxu0 %v2733
    %2743 = vmatprep.subr.mxu0 0.0
    %2744 = vmatpush1.msra.mxu0 0.0
    %2745 = vmatprep.subr.mxu0 0.0
    %2746 = vmatpush1.msra.mxu0 0.0
    %2747 = vmatprep.subr.mxu0 0.0
    %2748 = vmatpush1.msra.mxu0 0.0
    %2749 = vmatprep.subr.mxu0 0.0
    %2750 = vmatpush1.msra.mxu0 0.0
    %2751 = vmatprep.subr.mxu0 0.0
    %2752 = vmatpush1.msra.mxu0 0.0
    %2753 = vmatprep.subr.mxu0 0.0
    %2754 = vmatpush1.msra.mxu0 0.0
    %2755 = vmatprep.subr.mxu0 0.0
    %2756 = vmatpush1.msra.mxu0 0.0
    %2757 = vmatprep.subr.mxu0 0.0
    %2758 = vmatpush1.msra.mxu0 0.0
    %2759 = vmatprep.subr.mxu0 0.0
    %2760 = vmatpush1.msra.mxu0 0.0
    %2761 = vmatprep.subr.mxu0 0.0
    %2762 = vmatpush1.msra.mxu0 0.0
    %2763 = vmatprep.subr.mxu0 0.0
    %2764 = vmatpush1.msra.mxu0 0.0
    %2765 = vmatprep.subr.mxu0 0.0
    %2766 = vmatpush1.msra.mxu0 0.0
    %2767 = vmatprep.subr.mxu0 0.0
    %2768 = vmatpush1.msra.mxu0 0.0
    %2769 = vmatprep.subr.mxu0 0.0
    %2770 = vmatpush1.msra.mxu0 0.0
    %2771 = vmatprep.subr.mxu0 0.0
    %2772 = vmatpush1.msra.mxu0 0.0
    %2773 = vmatprep.subr.mxu0 0.0
    %2774 = vmatpush1.msra.mxu0 0.0
    %2775 = vmatprep.subr.mxu0 0.0
    %2776 = vmatpush1.msra.mxu0 0.0
    %2777 = vmatprep.subr.mxu0 0.0
    %2778 = vmatpush1.msra.mxu0 0.0
    %2779 = vmatprep.subr.mxu0 0.0
    %2780 = vmatpush1.msra.mxu0 0.0
    %2781 = vmatprep.subr.mxu0 0.0
    %2782 = vmatpush1.msra.mxu0 0.0
    %2783 = vmatprep.subr.mxu0 0.0
    %2784 = vmatpush1.msra.mxu0 0.0
    %2785 = vmatprep.subr.mxu0 0.0
    %2786 = vmatpush1.msra.mxu0 0.0
    %2787 = vmatprep.subr.mxu0 0.0
    %2788 = vmatpush1.msra.mxu0 0.0
    %2789 = vmatprep.subr.mxu0 0.0
    %2790 = vmatpush1.msra.mxu0 0.0
    %2791 = vmatprep.subr.mxu0 0.0
    %2792 = vmatpush1.msra.mxu0 0.0
    %2793 = vmatprep.subr.mxu0 0.0
    %2794 = vmatpush1.msra.mxu0 0.0
    %2795 = vmatprep.subr.mxu0 0.0
    %2796 = vmatpush1.msra.mxu0 0.0
    %2797 = vmatprep.subr.mxu0 0.0
    %2798 = vmatpush1.msra.mxu0 0.0
    %2799 = vmatprep.subr.mxu0 0.0
    %2800 = vmatpush1.msra.mxu0 0.0
    %2801 = vmatprep.subr.mxu0 0.0
    %2802 = vmatpush1.msra.mxu0 0.0
    %2803 = vmatprep.mubr.f32.mxu0 0.0
    %2804 = vmatmul.mubr.f32.gmra.mrb[0].mxu0 %v2737
    %v2805 = vpop.f32.mrb[0].mxu0
    %v2806 = vadd.f32 0.0, %v2805
    %v2807 = vpop.f32.mrb[0].mxu0
    %2808 = vdwg.mxu0
    %2809 = vrot.lane.b32.xlu0 %v2217, 96
    %v2810 = vpop.permute.xlu0 %2809
    %2811 = vrot.lane.b32.xlu0 %v2219, 96
    %v2812 = vpop.permute.xlu0 %2811
    %v2816 = vsel %vm624, %v2571, 0
    %2818 = vmatprep.subr.mxu0 0.0
    %2819 = vmatpush1.msra.mxu0 %v2810
    %2820 = vmatprep.subr.mxu0 0.0
    %2821 = vmatpush1.msra.mxu0 %v2812
    %2822 = vmatprep.subr.mxu0 0.0
    %2823 = vmatpush1.msra.mxu0 0.0
    %2824 = vmatprep.subr.mxu0 0.0
    %2825 = vmatpush1.msra.mxu0 0.0
    %2826 = vmatprep.subr.mxu0 0.0
    %2827 = vmatpush1.msra.mxu0 0.0
    %2828 = vmatprep.subr.mxu0 0.0
    %2829 = vmatpush1.msra.mxu0 0.0
    %2830 = vmatprep.subr.mxu0 0.0
    %2831 = vmatpush1.msra.mxu0 0.0
    %2832 = vmatprep.subr.mxu0 0.0
    %2833 = vmatpush1.msra.mxu0 0.0
    %2834 = vmatprep.subr.mxu0 0.0
    %2835 = vmatpush1.msra.mxu0 0.0
    %2836 = vmatprep.subr.mxu0 0.0
    %2837 = vmatpush1.msra.mxu0 0.0
    %2838 = vmatprep.subr.mxu0 0.0
    %2839 = vmatpush1.msra.mxu0 0.0
    %2840 = vmatprep.subr.mxu0 0.0
    %2841 = vmatpush1.msra.mxu0 0.0
    %2842 = vmatprep.subr.mxu0 0.0
    %2843 = vmatpush1.msra.mxu0 0.0
    %2844 = vmatprep.subr.mxu0 0.0
    %2845 = vmatpush1.msra.mxu0 0.0
    %2846 = vmatprep.subr.mxu0 0.0
    %2847 = vmatpush1.msra.mxu0 0.0
    %2848 = vmatprep.subr.mxu0 0.0
    %2849 = vmatpush1.msra.mxu0 0.0
    %2850 = vmatprep.subr.mxu0 0.0
    %2851 = vmatpush1.msra.mxu0 0.0
    %2852 = vmatprep.subr.mxu0 0.0
    %2853 = vmatpush1.msra.mxu0 0.0
    %2854 = vmatprep.subr.mxu0 0.0
    %2855 = vmatpush1.msra.mxu0 0.0
    %2856 = vmatprep.subr.mxu0 0.0
    %2857 = vmatpush1.msra.mxu0 0.0
    %2858 = vmatprep.subr.mxu0 0.0
    %2859 = vmatpush1.msra.mxu0 0.0
    %2860 = vmatprep.subr.mxu0 0.0
    %2861 = vmatpush1.msra.mxu0 0.0
    %2862 = vmatprep.subr.mxu0 0.0
    %2863 = vmatpush1.msra.mxu0 0.0
    %2864 = vmatprep.subr.mxu0 0.0
    %2865 = vmatpush1.msra.mxu0 0.0
    %2866 = vmatprep.subr.mxu0 0.0
    %2867 = vmatpush1.msra.mxu0 0.0
    %2868 = vmatprep.subr.mxu0 0.0
    %2869 = vmatpush1.msra.mxu0 0.0
    %2870 = vmatprep.subr.mxu0 0.0
    %2871 = vmatpush1.msra.mxu0 0.0
    %2872 = vmatprep.subr.mxu0 0.0
    %2873 = vmatpush1.msra.mxu0 0.0
    %2874 = vmatprep.subr.mxu0 0.0
    %2875 = vmatpush1.msra.mxu0 0.0
    %2876 = vmatprep.subr.mxu0 0.0
    %2877 = vmatpush1.msra.mxu0 0.0
    %2878 = vmatprep.subr.mxu0 0.0
    %2879 = vmatpush1.msra.mxu0 0.0
    %2880 = vmatprep.subr.mxu0 0.0
    %2881 = vmatpush1.msra.mxu0 0.0
    %2882 = vmatprep.mubr.f32.mxu0 0.0
    %2883 = vmatmul.mubr.f32.gmra.mrb[0].mxu0 %v2816
    %v2884 = vpop.f32.mrb[0].mxu0
    %v2885 = vadd.f32 0.0, %v2884
    %v2886 = vpop.f32.mrb[0].mxu0
    %2887 = vdwg.mxu0
    %2889 = vrot.lane.b32.xlu0 %v2727, 8
    %v2890 = vpop.permute.xlu0 %2889
    %2893 = vrot.lane.b32.xlu0 %v2806, 16
    %v2894 = vpop.permute.xlu0 %2893
    %2897 = vrot.lane.b32.xlu0 %v2885, 24
    %v2898 = vpop.permute.xlu0 %2897
    %v2900 = vsel %vm319, %v2648, %v2890
    %v2901 = vsel %vm624, %v2900, %v2894
    %v2902 = vsel %vm999, %v2901, %v2898
    %v2903 = vsel %vm319, %v2090, 0
    %v2905 = vsel %vm319, %v2174, 0
    %v2907 = vsel %vm319, %v2179, 0
    %2909 = vmatprep.subr.mxu0 0.0
    %2910 = vmatpush1.xpose.msra.mxu0 %v2905
    %2911 = vmatprep.subr.mxu0 0.0
    %2912 = vmatpush1.xpose.msra.mxu0 %v2907
    %2913 = vmatprep.subr.mxu0 0.0
    %2914 = vmatpush1.xpose.msra.mxu0 0.0
    %2915 = vmatprep.subr.mxu0 0.0
    %2916 = vmatpush1.xpose.msra.mxu0 0.0
    %2917 = vmatprep.subr.mxu0 0.0
    %2918 = vmatpush1.xpose.msra.mxu0 0.0
    %2919 = vmatprep.subr.mxu0 0.0
    %2920 = vmatpush1.xpose.msra.mxu0 0.0
    %2921 = vmatprep.subr.mxu0 0.0
    %2922 = vmatpush1.xpose.msra.mxu0 0.0
    %2923 = vmatprep.subr.mxu0 0.0
    %2924 = vmatpush1.xpose.msra.mxu0 0.0
    %2925 = vmatprep.subr.mxu0 0.0
    %2926 = vmatpush1.xpose.msra.mxu0 0.0
    %2927 = vmatprep.subr.mxu0 0.0
    %2928 = vmatpush1.xpose.msra.mxu0 0.0
    %2929 = vmatprep.subr.mxu0 0.0
    %2930 = vmatpush1.xpose.msra.mxu0 0.0
    %2931 = vmatprep.subr.mxu0 0.0
    %2932 = vmatpush1.xpose.msra.mxu0 0.0
    %2933 = vmatprep.subr.mxu0 0.0
    %2934 = vmatpush1.xpose.msra.mxu0 0.0
    %2935 = vmatprep.subr.mxu0 0.0
    %2936 = vmatpush1.xpose.msra.mxu0 0.0
    %2937 = vmatprep.subr.mxu0 0.0
    %2938 = vmatpush1.xpose.msra.mxu0 0.0
    %2939 = vmatprep.subr.mxu0 0.0
    %2940 = vmatpush1.xpose.msra.mxu0 0.0
    %2941 = vmatprep.subr.mxu0 0.0
    %2942 = vmatpush1.xpose.msra.mxu0 0.0
    %2943 = vmatprep.subr.mxu0 0.0
    %2944 = vmatpush1.xpose.msra.mxu0 0.0
    %2945 = vmatprep.subr.mxu0 0.0
    %2946 = vmatpush1.xpose.msra.mxu0 0.0
    %2947 = vmatprep.subr.mxu0 0.0
    %2948 = vmatpush1.xpose.msra.mxu0 0.0
    %2949 = vmatprep.subr.mxu0 0.0
    %2950 = vmatpush1.xpose.msra.mxu0 0.0
    %2951 = vmatprep.subr.mxu0 0.0
    %2952 = vmatpush1.xpose.msra.mxu0 0.0
    %2953 = vmatprep.subr.mxu0 0.0
    %2954 = vmatpush1.xpose.msra.mxu0 0.0
    %2955 = vmatprep.subr.mxu0 0.0
    %2956 = vmatpush1.xpose.msra.mxu0 0.0
    %2957 = vmatprep.subr.mxu0 0.0
    %2958 = vmatpush1.xpose.msra.mxu0 0.0
    %2959 = vmatprep.subr.mxu0 0.0
    %2960 = vmatpush1.xpose.msra.mxu0 0.0
    %2961 = vmatprep.subr.mxu0 0.0
    %2962 = vmatpush1.xpose.msra.mxu0 0.0
    %2963 = vmatprep.subr.mxu0 0.0
    %2964 = vmatpush1.xpose.msra.mxu0 0.0
    %2965 = vmatprep.subr.mxu0 0.0
    %2966 = vmatpush1.xpose.msra.mxu0 0.0
    %2967 = vmatprep.subr.mxu0 0.0
    %2968 = vmatpush1.xpose.msra.mxu0 0.0
    %2969 = vmatprep.subr.mxu0 0.0
    %2970 = vmatpush1.xpose.msra.mxu0 0.0
    %2971 = vmatprep.subr.mxu0 0.0
    %2972 = vmatpush1.xpose.msra.mxu0 0.0
    %2973 = vmatprep.mubr.f32.mxu0 0.0
    %2974 = vmatmul.mubr.f32.gmra.mrb[0].mxu0 %v2903
    %v2975 = vpop.f32.mrb[0].mxu0
    %v2976 = vadd.f32 0.0, %v2975
    %v2977 = vpop.f32.mrb[0].mxu0
    %2978 = vdwg.mxu0
    %v2979 = vsel %vm319, %v2187, 0
    %v2981 = vsel %vm319, %v2205, 0
    %v2983 = vsel %vm319, %v2207, 0
    %2985 = vmatprep.subr.mxu0 0.0
    %2986 = vmatpush1.xpose.msra.mxu0 %v2981
    %2987 = vmatprep.subr.mxu0 0.0
    %2988 = vmatpush1.xpose.msra.mxu0 %v2983
    %2989 = vmatprep.subr.mxu0 0.0
    %2990 = vmatpush1.xpose.msra.mxu0 0.0
    %2991 = vmatprep.subr.mxu0 0.0
    %2992 = vmatpush1.xpose.msra.mxu0 0.0
    %2993 = vmatprep.subr.mxu0 0.0
    %2994 = vmatpush1.xpose.msra.mxu0 0.0
    %2995 = vmatprep.subr.mxu0 0.0
    %2996 = vmatpush1.xpose.msra.mxu0 0.0
    %2997 = vmatprep.subr.mxu0 0.0
    %2998 = vmatpush1.xpose.msra.mxu0 0.0
    %2999 = vmatprep.subr.mxu0 0.0
    %3000 = vmatpush1.xpose.msra.mxu0 0.0
    %3001 = vmatprep.subr.mxu0 0.0
    %3002 = vmatpush1.xpose.msra.mxu0 0.0
    %3003 = vmatprep.subr.mxu0 0.0
    %3004 = vmatpush1.xpose.msra.mxu0 0.0
    %3005 = vmatprep.subr.mxu0 0.0
    %3006 = vmatpush1.xpose.msra.mxu0 0.0
    %3007 = vmatprep.subr.mxu0 0.0
    %3008 = vmatpush1.xpose.msra.mxu0 0.0
    %3009 = vmatprep.subr.mxu0 0.0
    %3010 = vmatpush1.xpose.msra.mxu0 0.0
    %3011 = vmatprep.subr.mxu0 0.0
    %3012 = vmatpush1.xpose.msra.mxu0 0.0
    %3013 = vmatprep.subr.mxu0 0.0
    %3014 = vmatpush1.xpose.msra.mxu0 0.0
    %3015 = vmatprep.subr.mxu0 0.0
    %3016 = vmatpush1.xpose.msra.mxu0 0.0
    %3017 = vmatprep.subr.mxu0 0.0
    %3018 = vmatpush1.xpose.msra.mxu0 0.0
    %3019 = vmatprep.subr.mxu0 0.0
    %3020 = vmatpush1.xpose.msra.mxu0 0.0
    %3021 = vmatprep.subr.mxu0 0.0
    %3022 = vmatpush1.xpose.msra.mxu0 0.0
    %3023 = vmatprep.subr.mxu0 0.0
    %3024 = vmatpush1.xpose.msra.mxu0 0.0
    %3025 = vmatprep.subr.mxu0 0.0
    %3026 = vmatpush1.xpose.msra.mxu0 0.0
    %3027 = vmatprep.subr.mxu0 0.0
    %3028 = vmatpush1.xpose.msra.mxu0 0.0
    %3029 = vmatprep.subr.mxu0 0.0
    %3030 = vmatpush1.xpose.msra.mxu0 0.0
    %3031 = vmatprep.subr.mxu0 0.0
    %3032 = vmatpush1.xpose.msra.mxu0 0.0
    %3033 = vmatprep.subr.mxu0 0.0
    %3034 = vmatpush1.xpose.msra.mxu0 0.0
    %3035 = vmatprep.subr.mxu0 0.0
    %3036 = vmatpush1.xpose.msra.mxu0 0.0
    %3037 = vmatprep.subr.mxu0 0.0
    %3038 = vmatpush1.xpose.msra.mxu0 0.0
    %3039 = vmatprep.subr.mxu0 0.0
    %3040 = vmatpush1.xpose.msra.mxu0 0.0
    %3041 = vmatprep.subr.mxu0 0.0
    %3042 = vmatpush1.xpose.msra.mxu0 0.0
    %3043 = vmatprep.subr.mxu0 0.0
    %3044 = vmatpush1.xpose.msra.mxu0 0.0
    %3045 = vmatprep.subr.mxu0 0.0
    %3046 = vmatpush1.xpose.msra.mxu0 0.0
    %3047 = vmatprep.subr.mxu0 0.0
    %3048 = vmatpush1.xpose.msra.mxu0 0.0
    %3049 = vmatprep.mubr.f32.mxu0 0.0
    %3050 = vmatmul.mubr.f32.gmra.mrb[0].mxu0 %v2979
    %v3051 = vpop.f32.mrb[0].mxu0
    %v3052 = vadd.f32 0.0, %v3051
    %v3053 = vpop.f32.mrb[0].mxu0
    %3054 = vdwg.mxu0
    %v3055 = vsel %vm319, %v2191, 0
    %v3057 = vsel %vm319, %v2213, 0
    %v3059 = vsel %vm319, %v2215, 0
    %3061 = vmatprep.subr.mxu0 0.0
    %3062 = vmatpush1.xpose.msra.mxu0 %v3057
    %3063 = vmatprep.subr.mxu0 0.0
    %3064 = vmatpush1.xpose.msra.mxu0 %v3059
    %3065 = vmatprep.subr.mxu0 0.0
    %3066 = vmatpush1.xpose.msra.mxu0 0.0
    %3067 = vmatprep.subr.mxu0 0.0
    %3068 = vmatpush1.xpose.msra.mxu0 0.0
    %3069 = vmatprep.subr.mxu0 0.0
    %3070 = vmatpush1.xpose.msra.mxu0 0.0
    %3071 = vmatprep.subr.mxu0 0.0
    %3072 = vmatpush1.xpose.msra.mxu0 0.0
    %3073 = vmatprep.subr.mxu0 0.0
    %3074 = vmatpush1.xpose.msra.mxu0 0.0
    %3075 = vmatprep.subr.mxu0 0.0
    %3076 = vmatpush1.xpose.msra.mxu0 0.0
    %3077 = vmatprep.subr.mxu0 0.0
    %3078 = vmatpush1.xpose.msra.mxu0 0.0
    %3079 = vmatprep.subr.mxu0 0.0
    %3080 = vmatpush1.xpose.msra.mxu0 0.0
    %3081 = vmatprep.subr.mxu0 0.0
    %3082 = vmatpush1.xpose.msra.mxu0 0.0
    %3083 = vmatprep.subr.mxu0 0.0
    %3084 = vmatpush1.xpose.msra.mxu0 0.0
    %3085 = vmatprep.subr.mxu0 0.0
    %3086 = vmatpush1.xpose.msra.mxu0 0.0
    %3087 = vmatprep.subr.mxu0 0.0
    %3088 = vmatpush1.xpose.msra.mxu0 0.0
    %3089 = vmatprep.subr.mxu0 0.0
    %3090 = vmatpush1.xpose.msra.mxu0 0.0
    %3091 = vmatprep.subr.mxu0 0.0
    %3092 = vmatpush1.xpose.msra.mxu0 0.0
    %3093 = vmatprep.subr.mxu0 0.0
    %3094 = vmatpush1.xpose.msra.mxu0 0.0
    %3095 = vmatprep.subr.mxu0 0.0
    %3096 = vmatpush1.xpose.msra.mxu0 0.0
    %3097 = vmatprep.subr.mxu0 0.0
    %3098 = vmatpush1.xpose.msra.mxu0 0.0
    %3099 = vmatprep.subr.mxu0 0.0
    %3100 = vmatpush1.xpose.msra.mxu0 0.0
    %3101 = vmatprep.subr.mxu0 0.0
    %3102 = vmatpush1.xpose.msra.mxu0 0.0
    %3103 = vmatprep.subr.mxu0 0.0
    %3104 = vmatpush1.xpose.msra.mxu0 0.0
    %3105 = vmatprep.subr.mxu0 0.0
    %3106 = vmatpush1.xpose.msra.mxu0 0.0
    %3107 = vmatprep.subr.mxu0 0.0
    %3108 = vmatpush1.xpose.msra.mxu0 0.0
    %3109 = vmatprep.subr.mxu0 0.0
    %3110 = vmatpush1.xpose.msra.mxu0 0.0
    %3111 = vmatprep.subr.mxu0 0.0
    %3112 = vmatpush1.xpose.msra.mxu0 0.0
    %3113 = vmatprep.subr.mxu0 0.0
    %3114 = vmatpush1.xpose.msra.mxu0 0.0
    %3115 = vmatprep.subr.mxu0 0.0
    %3116 = vmatpush1.xpose.msra.mxu0 0.0
    %3117 = vmatprep.subr.mxu0 0.0
    %3118 = vmatpush1.xpose.msra.mxu0 0.0
    %3119 = vmatprep.subr.mxu0 0.0
    %3120 = vmatpush1.xpose.msra.mxu0 0.0
    %3121 = vmatprep.subr.mxu0 0.0
    %3122 = vmatpush1.xpose.msra.mxu0 0.0
    %3123 = vmatprep.subr.mxu0 0.0
    %3124 = vmatpush1.xpose.msra.mxu0 0.0
    %3125 = vmatprep.mubr.f32.mxu0 0.0
    %3126 = vmatmul.mubr.f32.gmra.mrb[0].mxu0 %v3055
    %v3127 = vpop.f32.mrb[0].mxu0
    %v3128 = vadd.f32 0.0, %v3127
    %v3129 = vpop.f32.mrb[0].mxu0
    %3130 = vdwg.mxu0
    %v3131 = vsel %vm319, %v2195, 0
    %v3133 = vsel %vm319, %v2221, 0
    %v3135 = vsel %vm319, %v2223, 0
    %3137 = vmatprep.subr.mxu0 0.0
    %3138 = vmatpush1.xpose.msra.mxu0 %v3133
    %3139 = vmatprep.subr.mxu0 0.0
    %3140 = vmatpush1.xpose.msra.mxu0 %v3135
    %3141 = vmatprep.subr.mxu0 0.0
    %3142 = vmatpush1.xpose.msra.mxu0 0.0
    %3143 = vmatprep.subr.mxu0 0.0
    %3144 = vmatpush1.xpose.msra.mxu0 0.0
    %3145 = vmatprep.subr.mxu0 0.0
    %3146 = vmatpush1.xpose.msra.mxu0 0.0
    %3147 = vmatprep.subr.mxu0 0.0
    %3148 = vmatpush1.xpose.msra.mxu0 0.0
    %3149 = vmatprep.subr.mxu0 0.0
    %3150 = vmatpush1.xpose.msra.mxu0 0.0
    %3151 = vmatprep.subr.mxu0 0.0
    %3152 = vmatpush1.xpose.msra.mxu0 0.0
    %3153 = vmatprep.subr.mxu0 0.0
    %3154 = vmatpush1.xpose.msra.mxu0 0.0
    %3155 = vmatprep.subr.mxu0 0.0
    %3156 = vmatpush1.xpose.msra.mxu0 0.0
    %3157 = vmatprep.subr.mxu0 0.0
    %3158 = vmatpush1.xpose.msra.mxu0 0.0
    %3159 = vmatprep.subr.mxu0 0.0
    %3160 = vmatpush1.xpose.msra.mxu0 0.0
    %3161 = vmatprep.subr.mxu0 0.0
    %3162 = vmatpush1.xpose.msra.mxu0 0.0
    %3163 = vmatprep.subr.mxu0 0.0
    %3164 = vmatpush1.xpose.msra.mxu0 0.0
    %3165 = vmatprep.subr.mxu0 0.0
    %3166 = vmatpush1.xpose.msra.mxu0 0.0
    %3167 = vmatprep.subr.mxu0 0.0
    %3168 = vmatpush1.xpose.msra.mxu0 0.0
    %3169 = vmatprep.subr.mxu0 0.0
    %3170 = vmatpush1.xpose.msra.mxu0 0.0
    %3171 = vmatprep.subr.mxu0 0.0
    %3172 = vmatpush1.xpose.msra.mxu0 0.0
    %3173 = vmatprep.subr.mxu0 0.0
    %3174 = vmatpush1.xpose.msra.mxu0 0.0
    %3175 = vmatprep.subr.mxu0 0.0
    %3176 = vmatpush1.xpose.msra.mxu0 0.0
    %3177 = vmatprep.subr.mxu0 0.0
    %3178 = vmatpush1.xpose.msra.mxu0 0.0
    %3179 = vmatprep.subr.mxu0 0.0
    %3180 = vmatpush1.xpose.msra.mxu0 0.0
    %3181 = vmatprep.subr.mxu0 0.0
    %3182 = vmatpush1.xpose.msra.mxu0 0.0
    %3183 = vmatprep.subr.mxu0 0.0
    %3184 = vmatpush1.xpose.msra.mxu0 0.0
    %3185 = vmatprep.subr.mxu0 0.0
    %3186 = vmatpush1.xpose.msra.mxu0 0.0
    %3187 = vmatprep.subr.mxu0 0.0
    %3188 = vmatpush1.xpose.msra.mxu0 0.0
    %3189 = vmatprep.subr.mxu0 0.0
    %3190 = vmatpush1.xpose.msra.mxu0 0.0
    %3191 = vmatprep.subr.mxu0 0.0
    %3192 = vmatpush1.xpose.msra.mxu0 0.0
    %3193 = vmatprep.subr.mxu0 0.0
    %3194 = vmatpush1.xpose.msra.mxu0 0.0
    %3195 = vmatprep.subr.mxu0 0.0
    %3196 = vmatpush1.xpose.msra.mxu0 0.0
    %3197 = vmatprep.subr.mxu0 0.0
    %3198 = vmatpush1.xpose.msra.mxu0 0.0
    %3199 = vmatprep.subr.mxu0 0.0
    %3200 = vmatpush1.xpose.msra.mxu0 0.0
    %3201 = vmatprep.mubr.f32.mxu0 0.0
    %3202 = vmatmul.mubr.f32.gmra.mrb[0].mxu0 %v3131
    %v3203 = vpop.f32.mrb[0].mxu0
    %v3204 = vadd.f32 0.0, %v3203
    %v3205 = vpop.f32.mrb[0].mxu0
    %3206 = vdwg.mxu0
    %v3207 = vsel %vm624, %v2976, -inf
    %3208 = vmax.xlane.f32.xlu0 %v3207
    %v3209 = vpop.xlane.xlu0 %3208
    %v3210 = vsel %vm624, %v3052, -inf
    %3211 = vmax.xlane.f32.xlu0 %v3210
    %v3212 = vpop.xlane.xlu0 %3211
    %v3213 = vsel %vm624, %v3128, -inf
    %3214 = vmax.xlane.f32.xlu0 %v3213
    %v3215 = vpop.xlane.xlu0 %3214
    %v3216 = vsel %vm624, %v3204, -inf
    %3217 = vmax.xlane.f32.xlu0 %v3216
    %v3218 = vpop.xlane.xlu0 %3217
    %v3219 = vsub.f32 %v2976, %v3209
    %v3220 = vsub.f32 %v3052, %v3212
    %v3221 = vsub.f32 %v3128, %v3215
    %v3222 = vsub.f32 %v3204, %v3218
    %v3223 = vmul.f32 %v3219, 1.442695
    %v3224 = vpow.pop %v3223
    %v3225 = vmul.f32 %v3220, 1.442695
    %v3226 = vpow.pop %v3225
    %v3227 = vmul.f32 %v3221, 1.442695
    %v3228 = vpow.pop %v3227
    %v3229 = vmul.f32 %v3222, 1.442695
    %v3230 = vpow.pop %v3229
    %v3231 = vsel %vm624, %v3224, 0.0
    %3232 = vadd.xlane.f32.xlu0 %v3231
    %v3233 = vpop.xlane.xlu0 %3232
    %v3234 = vsel %vm624, %v3226, 0.0
    %3235 = vadd.xlane.f32.xlu0 %v3234
    %v3236 = vpop.xlane.xlu0 %3235
    %v3237 = vsel %vm624, %v3228, 0.0
    %3238 = vadd.xlane.f32.xlu0 %v3237
    %v3239 = vpop.xlane.xlu0 %3238
    %v3240 = vsel %vm624, %v3230, 0.0
    %3241 = vadd.xlane.f32.xlu0 %v3240
    %v3242 = vpop.xlane.xlu0 %3241
    %v3243 = vrcp.pop %v3233
    %v3244 = vrcp.pop %v3236
    %v3245 = vrcp.pop %v3239
    %v3246 = vrcp.pop %v3242
    %v3247 = vmul.f32 %v3224, %v3243
    %v3248 = vmul.f32 %v3226, %v3244
    %v3249 = vmul.f32 %v3228, %v3245
    %v3250 = vmul.f32 %v3230, %v3246
    %3251 = vrot.lane.b32.xlu0 %v2174, 96
    %v3252 = vpop.permute.xlu0 %3251
    %3253 = vrot.lane.b32.xlu0 %v2179, 96
    %v3254 = vpop.permute.xlu0 %3253
    %v3258 = vsel %vm624, %v3247, 0
    %3260 = vmatprep.subr.mxu0 0.0
    %3261 = vmatpush1.msra.mxu0 %v3252
    %3262 = vmatprep.subr.mxu0 0.0
    %3263 = vmatpush1.msra.mxu0 %v3254
    %3264 = vmatprep.subr.mxu0 0.0
    %3265 = vmatpush1.msra.mxu0 0.0
    %3266 = vmatprep.subr.mxu0 0.0
    %3267 = vmatpush1.msra.mxu0 0.0
    %3268 = vmatprep.subr.mxu0 0.0
    %3269 = vmatpush1.msra.mxu0 0.0
    %3270 = vmatprep.subr.mxu0 0.0
    %3271 = vmatpush1.msra.mxu0 0.0
    %3272 = vmatprep.subr.mxu0 0.0
    %3273 = vmatpush1.msra.mxu0 0.0
    %3274 = vmatprep.subr.mxu0 0.0
    %3275 = vmatpush1.msra.mxu0 0.0
    %3276 = vmatprep.subr.mxu0 0.0
    %3277 = vmatpush1.msra.mxu0 0.0
    %3278 = vmatprep.subr.mxu0 0.0
    %3279 = vmatpush1.msra.mxu0 0.0
    %3280 = vmatprep.subr.mxu0 0.0
    %3281 = vmatpush1.msra.mxu0 0.0
    %3282 = vmatprep.subr.mxu0 0.0
    %3283 = vmatpush1.msra.mxu0 0.0
    %3284 = vmatprep.subr.mxu0 0.0
    %3285 = vmatpush1.msra.mxu0 0.0
    %3286 = vmatprep.subr.mxu0 0.0
    %3287 = vmatpush1.msra.mxu0 0.0
    %3288 = vmatprep.subr.mxu0 0.0
    %3289 = vmatpush1.msra.mxu0 0.0
    %3290 = vmatprep.subr.mxu0 0.0
    %3291 = vmatpush1.msra.mxu0 0.0
    %3292 = vmatprep.subr.mxu0 0.0
    %3293 = vmatpush1.msra.mxu0 0.0
    %3294 = vmatprep.subr.mxu0 0.0
    %3295 = vmatpush1.msra.mxu0 0.0
    %3296 = vmatprep.subr.mxu0 0.0
    %3297 = vmatpush1.msra.mxu0 0.0
    %3298 = vmatprep.subr.mxu0 0.0
    %3299 = vmatpush1.msra.mxu0 0.0
    %3300 = vmatprep.subr.mxu0 0.0
    %3301 = vmatpush1.msra.mxu0 0.0
    %3302 = vmatprep.subr.mxu0 0.0
    %3303 = vmatpush1.msra.mxu0 0.0
    %3304 = vmatprep.subr.mxu0 0.0
    %3305 = vmatpush1.msra.mxu0 0.0
    %3306 = vmatprep.subr.mxu0 0.0
    %3307 = vmatpush1.msra.mxu0 0.0
    %3308 = vmatprep.subr.mxu0 0.0
    %3309 = vmatpush1.msra.mxu0 0.0
    %3310 = vmatprep.subr.mxu0 0.0
    %3311 = vmatpush1.msra.mxu0 0.0
    %3312 = vmatprep.subr.mxu0 0.0
    %3313 = vmatpush1.msra.mxu0 0.0
    %3314 = vmatprep.subr.mxu0 0.0
    %3315 = vmatpush1.msra.mxu0 0.0
    %3316 = vmatprep.subr.mxu0 0.0
    %3317 = vmatpush1.msra.mxu0 0.0
    %3318 = vmatprep.subr.mxu0 0.0
    %3319 = vmatpush1.msra.mxu0 0.0
    %3320 = vmatprep.subr.mxu0 0.0
    %3321 = vmatpush1.msra.mxu0 0.0
    %3322 = vmatprep.subr.mxu0 0.0
    %3323 = vmatpush1.msra.mxu0 0.0
    %3324 = vmatprep.mubr.f32.mxu0 0.0
    %3325 = vmatmul.mubr.f32.gmra.mrb[0].mxu0 %v3258
    %v3326 = vpop.f32.mrb[0].mxu0
    %v3327 = vadd.f32 0.0, %v3326
    %v3328 = vpop.f32.mrb[0].mxu0
    %3329 = vdwg.mxu0
    %3330 = vrot.lane.b32.xlu0 %v2205, 96
    %v3331 = vpop.permute.xlu0 %3330
    %3332 = vrot.lane.b32.xlu0 %v2207, 96
    %v3333 = vpop.permute.xlu0 %3332
    %v3337 = vsel %vm624, %v3248, 0
    %3339 = vmatprep.subr.mxu0 0.0
    %3340 = vmatpush1.msra.mxu0 %v3331
    %3341 = vmatprep.subr.mxu0 0.0
    %3342 = vmatpush1.msra.mxu0 %v3333
    %3343 = vmatprep.subr.mxu0 0.0
    %3344 = vmatpush1.msra.mxu0 0.0
    %3345 = vmatprep.subr.mxu0 0.0
    %3346 = vmatpush1.msra.mxu0 0.0
    %3347 = vmatprep.subr.mxu0 0.0
    %3348 = vmatpush1.msra.mxu0 0.0
    %3349 = vmatprep.subr.mxu0 0.0
    %3350 = vmatpush1.msra.mxu0 0.0
    %3351 = vmatprep.subr.mxu0 0.0
    %3352 = vmatpush1.msra.mxu0 0.0
    %3353 = vmatprep.subr.mxu0 0.0
    %3354 = vmatpush1.msra.mxu0 0.0
    %3355 = vmatprep.subr.mxu0 0.0
    %3356 = vmatpush1.msra.mxu0 0.0
    %3357 = vmatprep.subr.mxu0 0.0
    %3358 = vmatpush1.msra.mxu0 0.0
    %3359 = vmatprep.subr.mxu0 0.0
    %3360 = vmatpush1.msra.mxu0 0.0
    %3361 = vmatprep.subr.mxu0 0.0
    %3362 = vmatpush1.msra.mxu0 0.0
    %3363 = vmatprep.subr.mxu0 0.0
    %3364 = vmatpush1.msra.mxu0 0.0
    %3365 = vmatprep.subr.mxu0 0.0
    %3366 = vmatpush1.msra.mxu0 0.0
    %3367 = vmatprep.subr.mxu0 0.0
    %3368 = vmatpush1.msra.mxu0 0.0
    %3369 = vmatprep.subr.mxu0 0.0
    %3370 = vmatpush1.msra.mxu0 0.0
    %3371 = vmatprep.subr.mxu0 0.0
    %3372 = vmatpush1.msra.mxu0 0.0
    %3373 = vmatprep.subr.mxu0 0.0
    %3374 = vmatpush1.msra.mxu0 0.0
    %3375 = vmatprep.subr.mxu0 0.0
    %3376 = vmatpush1.msra.mxu0 0.0
    %3377 = vmatprep.subr.mxu0 0.0
    %3378 = vmatpush1.msra.mxu0 0.0
    %3379 = vmatprep.subr.mxu0 0.0
    %3380 = vmatpush1.msra.mxu0 0.0
    %3381 = vmatprep.subr.mxu0 0.0
    %3382 = vmatpush1.msra.mxu0 0.0
    %3383 = vmatprep.subr.mxu0 0.0
    %3384 = vmatpush1.msra.mxu0 0.0
    %3385 = vmatprep.subr.mxu0 0.0
    %3386 = vmatpush1.msra.mxu0 0.0
    %3387 = vmatprep.subr.mxu0 0.0
    %3388 = vmatpush1.msra.mxu0 0.0
    %3389 = vmatprep.subr.mxu0 0.0
    %3390 = vmatpush1.msra.mxu0 0.0
    %3391 = vmatprep.subr.mxu0 0.0
    %3392 = vmatpush1.msra.mxu0 0.0
    %3393 = vmatprep.subr.mxu0 0.0
    %3394 = vmatpush1.msra.mxu0 0.0
    %3395 = vmatprep.subr.mxu0 0.0
    %3396 = vmatpush1.msra.mxu0 0.0
    %3397 = vmatprep.subr.mxu0 0.0
    %3398 = vmatpush1.msra.mxu0 0.0
    %3399 = vmatprep.subr.mxu0 0.0
    %3400 = vmatpush1.msra.mxu0 0.0
    %3401 = vmatprep.subr.mxu0 0.0
    %3402 = vmatpush1.msra.mxu0 0.0
    %3403 = vmatprep.mubr.f32.mxu0 0.0
    %3404 = vmatmul.mubr.f32.gmra.mrb[0].mxu0 %v3337
    %v3405 = vpop.f32.mrb[0].mxu0
    %v3406 = vadd.f32 0.0, %v3405
    %v3407 = vpop.f32.mrb[0].mxu0
    %3408 = vdwg.mxu0
    %3409 = vrot.lane.b32.xlu0 %v2213, 96
    %v3410 = vpop.permute.xlu0 %3409
    %3411 = vrot.lane.b32.xlu0 %v2215, 96
    %v3412 = vpop.permute.xlu0 %3411
    %v3416 = vsel %vm624, %v3249, 0
    %3418 = vmatprep.subr.mxu0 0.0
    %3419 = vmatpush1.msra.mxu0 %v3410
    %3420 = vmatprep.subr.mxu0 0.0
    %3421 = vmatpush1.msra.mxu0 %v3412
    %3422 = vmatprep.subr.mxu0 0.0
    %3423 = vmatpush1.msra.mxu0 0.0
    %3424 = vmatprep.subr.mxu0 0.0
    %3425 = vmatpush1.msra.mxu0 0.0
    %3426 = vmatprep.subr.mxu0 0.0
    %3427 = vmatpush1.msra.mxu0 0.0
    %3428 = vmatprep.subr.mxu0 0.0
    %3429 = vmatpush1.msra.mxu0 0.0
    %3430 = vmatprep.subr.mxu0 0.0
    %3431 = vmatpush1.msra.mxu0 0.0
    %3432 = vmatprep.subr.mxu0 0.0
    %3433 = vmatpush1.msra.mxu0 0.0
    %3434 = vmatprep.subr.mxu0 0.0
    %3435 = vmatpush1.msra.mxu0 0.0
    %3436 = vmatprep.subr.mxu0 0.0
    %3437 = vmatpush1.msra.mxu0 0.0
    %3438 = vmatprep.subr.mxu0 0.0
    %3439 = vmatpush1.msra.mxu0 0.0
    %3440 = vmatprep.subr.mxu0 0.0
    %3441 = vmatpush1.msra.mxu0 0.0
    %3442 = vmatprep.subr.mxu0 0.0
    %3443 = vmatpush1.msra.mxu0 0.0
    %3444 = vmatprep.subr.mxu0 0.0
    %3445 = vmatpush1.msra.mxu0 0.0
    %3446 = vmatprep.subr.mxu0 0.0
    %3447 = vmatpush1.msra.mxu0 0.0
    %3448 = vmatprep.subr.mxu0 0.0
    %3449 = vmatpush1.msra.mxu0 0.0
    %3450 = vmatprep.subr.mxu0 0.0
    %3451 = vmatpush1.msra.mxu0 0.0
    %3452 = vmatprep.subr.mxu0 0.0
    %3453 = vmatpush1.msra.mxu0 0.0
    %3454 = vmatprep.subr.mxu0 0.0
    %3455 = vmatpush1.msra.mxu0 0.0
    %3456 = vmatprep.subr.mxu0 0.0
    %3457 = vmatpush1.msra.mxu0 0.0
    %3458 = vmatprep.subr.mxu0 0.0
    %3459 = vmatpush1.msra.mxu0 0.0
    %3460 = vmatprep.subr.mxu0 0.0
    %3461 = vmatpush1.msra.mxu0 0.0
    %3462 = vmatprep.subr.mxu0 0.0
    %3463 = vmatpush1.msra.mxu0 0.0
    %3464 = vmatprep.subr.mxu0 0.0
    %3465 = vmatpush1.msra.mxu0 0.0
    %3466 = vmatprep.subr.mxu0 0.0
    %3467 = vmatpush1.msra.mxu0 0.0
    %3468 = vmatprep.subr.mxu0 0.0
    %3469 = vmatpush1.msra.mxu0 0.0
    %3470 = vmatprep.subr.mxu0 0.0
    %3471 = vmatpush1.msra.mxu0 0.0
    %3472 = vmatprep.subr.mxu0 0.0
    %3473 = vmatpush1.msra.mxu0 0.0
    %3474 = vmatprep.subr.mxu0 0.0
    %3475 = vmatpush1.msra.mxu0 0.0
    %3476 = vmatprep.subr.mxu0 0.0
    %3477 = vmatpush1.msra.mxu0 0.0
    %3478 = vmatprep.subr.mxu0 0.0
    %3479 = vmatpush1.msra.mxu0 0.0
    %3480 = vmatprep.subr.mxu0 0.0
    %3481 = vmatpush1.msra.mxu0 0.0
    %3482 = vmatprep.mubr.f32.mxu0 0.0
    %3483 = vmatmul.mubr.f32.gmra.mrb[0].mxu0 %v3416
    %v3484 = vpop.f32.mrb[0].mxu0
    %v3485 = vadd.f32 0.0, %v3484
    %v3486 = vpop.f32.mrb[0].mxu0
    %3487 = vdwg.mxu0
    %3488 = vrot.lane.b32.xlu0 %v2221, 96
    %v3489 = vpop.permute.xlu0 %3488
    %3490 = vrot.lane.b32.xlu0 %v2223, 96
    %v3491 = vpop.permute.xlu0 %3490
    %v3495 = vsel %vm624, %v3250, 0
    %3497 = vmatprep.subr.mxu0 0.0
    %3498 = vmatpush1.msra.mxu0 %v3489
    %3499 = vmatprep.subr.mxu0 0.0
    %3500 = vmatpush1.msra.mxu0 %v3491
    %3501 = vmatprep.subr.mxu0 0.0
    %3502 = vmatpush1.msra.mxu0 0.0
    %3503 = vmatprep.subr.mxu0 0.0
    %3504 = vmatpush1.msra.mxu0 0.0
    %3505 = vmatprep.subr.mxu0 0.0
    %3506 = vmatpush1.msra.mxu0 0.0
    %3507 = vmatprep.subr.mxu0 0.0
    %3508 = vmatpush1.msra.mxu0 0.0
    %3509 = vmatprep.subr.mxu0 0.0
    %3510 = vmatpush1.msra.mxu0 0.0
    %3511 = vmatprep.subr.mxu0 0.0
    %3512 = vmatpush1.msra.mxu0 0.0
    %3513 = vmatprep.subr.mxu0 0.0
    %3514 = vmatpush1.msra.mxu0 0.0
    %3515 = vmatprep.subr.mxu0 0.0
    %3516 = vmatpush1.msra.mxu0 0.0
    %3517 = vmatprep.subr.mxu0 0.0
    %3518 = vmatpush1.msra.mxu0 0.0
    %3519 = vmatprep.subr.mxu0 0.0
    %3520 = vmatpush1.msra.mxu0 0.0
    %3521 = vmatprep.subr.mxu0 0.0
    %3522 = vmatpush1.msra.mxu0 0.0
    %3523 = vmatprep.subr.mxu0 0.0
    %3524 = vmatpush1.msra.mxu0 0.0
    %3525 = vmatprep.subr.mxu0 0.0
    %3526 = vmatpush1.msra.mxu0 0.0
    %3527 = vmatprep.subr.mxu0 0.0
    %3528 = vmatpush1.msra.mxu0 0.0
    %3529 = vmatprep.subr.mxu0 0.0
    %3530 = vmatpush1.msra.mxu0 0.0
    %3531 = vmatprep.subr.mxu0 0.0
    %3532 = vmatpush1.msra.mxu0 0.0
    %3533 = vmatprep.subr.mxu0 0.0
    %3534 = vmatpush1.msra.mxu0 0.0
    %3535 = vmatprep.subr.mxu0 0.0
    %3536 = vmatpush1.msra.mxu0 0.0
    %3537 = vmatprep.subr.mxu0 0.0
    %3538 = vmatpush1.msra.mxu0 0.0
    %3539 = vmatprep.subr.mxu0 0.0
    %3540 = vmatpush1.msra.mxu0 0.0
    %3541 = vmatprep.subr.mxu0 0.0
    %3542 = vmatpush1.msra.mxu0 0.0
    %3543 = vmatprep.subr.mxu0 0.0
    %3544 = vmatpush1.msra.mxu0 0.0
    %3545 = vmatprep.subr.mxu0 0.0
    %3546 = vmatpush1.msra.mxu0 0.0
    %3547 = vmatprep.subr.mxu0 0.0
    %3548 = vmatpush1.msra.mxu0 0.0
    %3549 = vmatprep.subr.mxu0 0.0
    %3550 = vmatpush1.msra.mxu0 0.0
    %3551 = vmatprep.subr.mxu0 0.0
    %3552 = vmatpush1.msra.mxu0 0.0
    %3553 = vmatprep.subr.mxu0 0.0
    %3554 = vmatpush1.msra.mxu0 0.0
    %3555 = vmatprep.subr.mxu0 0.0
    %3556 = vmatpush1.msra.mxu0 0.0
    %3557 = vmatprep.subr.mxu0 0.0
    %3558 = vmatpush1.msra.mxu0 0.0
    %3559 = vmatprep.subr.mxu0 0.0
    %3560 = vmatpush1.msra.mxu0 0.0
    %3561 = vmatprep.mubr.f32.mxu0 0.0
    %3562 = vmatmul.mubr.f32.gmra.mrb[0].mxu0 %v3495
    %v3563 = vpop.f32.mrb[0].mxu0
    %v3564 = vadd.f32 0.0, %v3563
    %v3565 = vpop.f32.mrb[0].mxu0
    %3566 = vdwg.mxu0
    %3568 = vrot.lane.b32.xlu0 %v3406, 8
    %v3569 = vpop.permute.xlu0 %3568
    %3572 = vrot.lane.b32.xlu0 %v3485, 16
    %v3573 = vpop.permute.xlu0 %3572
    %3576 = vrot.lane.b32.xlu0 %v3564, 24
    %v3577 = vpop.permute.xlu0 %3576
    %v3579 = vsel %vm319, %v3327, %v3569
    %v3580 = vsel %vm624, %v3579, %v3573
    %v3581 = vsel %vm999, %v3580, %v3577
    %v3582 = vadd.f32 %v2902, %v1945
    %v3583 = vadd.f32 %v3581, %v1946
    %v3584 = vsel %vm51, %v3582, 0.0
    %3585 = vadd.xlane.f32.xlu0 %v3584
    %v3586 = vpop.xlane.xlu0 %3585
    %v3587 = vsel %vm51, %v3583, 0.0
    %3588 = vadd.xlane.f32.xlu0 %v3587
    %v3589 = vpop.xlane.xlu0 %3588
    %v3590 = vmul.f32 %v3586, %v58
    %v3591 = vmul.f32 %v3589, %v58
    %v3592 = vsub.f32 %v3582, %v3590
    %v3593 = vsub.f32 %v3583, %v3591
    %v3594 = vmul.f32 %v3592, %v3592
    %v3595 = vmul.f32 %v3593, %v3593
    %v3596 = vsel %vm51, %v3594, 0.0
    %3597 = vadd.xlane.f32.xlu0 %v3596
    %v3598 = vpop.xlane.xlu0 %3597
    %v3599 = vsel %vm51, %v3595, 0.0
    %3600 = vadd.xlane.f32.xlu0 %v3599
    %v3601 = vpop.xlane.xlu0 %3600
    %v3602 = vmul.f32 %v3598, %v58
    %v3603 = vmul.f32 %v3601, %v58
    %v3604 = vadd.f32 %v3602, 1e-06
    %v3605 = vadd.f32 %v3603, 1e-06
    %v3606 = vrsqrt.pop %v3604
    %v3607 = vrsqrt.pop %v3605
    %v3608 = vmul.f32 %v3592, %v3606
    %v3609 = vmul.f32 %v3593, %v3607
    %v3610 = vlaneseq
    %v3611 = vshrl.u32 %v3610, 7
    %v3612 = vsub.s32 6, %v3611
    %v3613 = vrot.slane %v28, %v3612
    %v3614 = vmul.f32 %v3608, %v3613
    %v3615 = vmul.f32 %v3609, %v3613
    %v3616 = vlaneseq
    %v3617 = vshrl.u32 %v3616, 7
    %v3618 = vsub.s32 7, %v3617
    %v3619 = vrot.slane %v28, %v3618
    %v3620 = vadd.f32 %v3614, %v3619
    %v3621 = vadd.f32 %v3615, %v3619
    %v3622 = vlaneseq
    %v3623 = vshrl.u32 %v3622, 7
    %v3624 = vsub.s32 2, %v3623
    %v3625 = vrot.slane %v28, %v3624
    %v3627 = vsel %vm51, %v3620, 0
    %v3630 = vsel %vm51, %v3621, 0
    %3632 = vmatprep.subr.mxu0 0.0
    %3633 = vmatpush1.msra.mxu0 %v1966
    %3634 = vmatprep.subr.mxu0 0.0
    %3635 = vmatpush1.msra.mxu0 %v1967
    %3636 = vmatprep.subr.mxu0 0.0
    %3637 = vmatpush1.msra.mxu0 %v1968
    %3638 = vmatprep.subr.mxu0 0.0
    %3639 = vmatpush1.msra.mxu0 %v1969
    %3640 = vmatprep.subr.mxu0 0.0
    %3641 = vmatpush1.msra.mxu0 0.0
    %3642 = vmatprep.subr.mxu0 0.0
    %3643 = vmatpush1.msra.mxu0 0.0
    %3644 = vmatprep.subr.mxu0 0.0
    %3645 = vmatpush1.msra.mxu0 0.0
    %3646 = vmatprep.subr.mxu0 0.0
    %3647 = vmatpush1.msra.mxu0 0.0
    %3648 = vmatprep.subr.mxu0 0.0
    %3649 = vmatpush1.msra.mxu0 0.0
    %3650 = vmatprep.subr.mxu0 0.0
    %3651 = vmatpush1.msra.mxu0 0.0
    %3652 = vmatprep.subr.mxu0 0.0
    %3653 = vmatpush1.msra.mxu0 0.0
    %3654 = vmatprep.subr.mxu0 0.0
    %3655 = vmatpush1.msra.mxu0 0.0
    %3656 = vmatprep.subr.mxu0 0.0
    %3657 = vmatpush1.msra.mxu0 0.0
    %3658 = vmatprep.subr.mxu0 0.0
    %3659 = vmatpush1.msra.mxu0 0.0
    %3660 = vmatprep.subr.mxu0 0.0
    %3661 = vmatpush1.msra.mxu0 0.0
    %3662 = vmatprep.subr.mxu0 0.0
    %3663 = vmatpush1.msra.mxu0 0.0
    %3664 = vmatprep.subr.mxu0 0.0
    %3665 = vmatpush1.msra.mxu0 0.0
    %3666 = vmatprep.subr.mxu0 0.0
    %3667 = vmatpush1.msra.mxu0 0.0
    %3668 = vmatprep.subr.mxu0 0.0
    %3669 = vmatpush1.msra.mxu0 0.0
    %3670 = vmatprep.subr.mxu0 0.0
    %3671 = vmatpush1.msra.mxu0 0.0
    %3672 = vmatprep.subr.mxu0 0.0
    %3673 = vmatpush1.msra.mxu0 0.0
    %3674 = vmatprep.subr.mxu0 0.0
    %3675 = vmatpush1.msra.mxu0 0.0
    %3676 = vmatprep.subr.mxu0 0.0
    %3677 = vmatpush1.msra.mxu0 0.0
    %3678 = vmatprep.subr.mxu0 0.0
    %3679 = vmatpush1.msra.mxu0 0.0
    %3680 = vmatprep.subr.mxu0 0.0
    %3681 = vmatpush1.msra.mxu0 0.0
    %3682 = vmatprep.subr.mxu0 0.0
    %3683 = vmatpush1.msra.mxu0 0.0
    %3684 = vmatprep.subr.mxu0 0.0
    %3685 = vmatpush1.msra.mxu0 0.0
    %3686 = vmatprep.subr.mxu0 0.0
    %3687 = vmatpush1.msra.mxu0 0.0
    %3688 = vmatprep.subr.mxu0 0.0
    %3689 = vmatpush1.msra.mxu0 0.0
    %3690 = vmatprep.subr.mxu0 0.0
    %3691 = vmatpush1.msra.mxu0 0.0
    %3692 = vmatprep.subr.mxu0 0.0
    %3693 = vmatpush1.msra.mxu0 0.0
    %3694 = vmatprep.subr.mxu0 0.0
    %3695 = vmatpush1.msra.mxu0 0.0
    %3696 = vmatprep.mubr.f32.mxu0 0.0
    %3697 = vmatmul.mubr.f32.gmra.mrb[0].mxu0 %v3627
    %v3698 = vpop.f32.mrb[0].mxu0
    %v3699 = vadd.f32 %v3625, %v3698
    %v3700 = vpop.f32.mrb[0].mxu0
    %3701 = vmatprep.mubr.f32.mxu0 0.0
    %3702 = vmatmul.mubr.f32.gmra.mrb[0].mxu0 %v3630
    %v3703 = vpop.f32.mrb[0].mxu0
    %v3704 = vadd.f32 %v3625, %v3703
    %v3705 = vpop.f32.mrb[0].mxu0
    %3706 = vdwg.mxu0
    %v3707 = vmul.f32 %v3699, 0.5
    %v3708 = vmul.f32 %v3704, 0.5
    %v3709 = vmul.f32 %v3699, 0.70710677
    %v3710 = vmul.f32 %v3704, 0.70710677
    %vm3711 = vcmp.ge.f32.partialorder %v3709, 0.0
    %vm3712 = vcmp.ge.f32.partialorder %v3710, 0.0
    %v3713 = vsel %vm3711, 1.0, -1.0
    %v3714 = vsel %vm3712, 1.0, -1.0
    %v3715 = vand.u32 2147483647, %v3709
    %v3716 = vand.u32 2147483647, %v3710
    %v3717 = vmul.f32 %v3715, 0.3275911
    %v3718 = vmul.f32 %v3716, 0.3275911
    %v3719 = vadd.f32 %v3717, 1.0
    %v3720 = vadd.f32 %v3718, 1.0
    %v3721 = vrcp.pop %v3719
    %v3722 = vmul.f32 1.0, %v3721
    %v3723 = vrcp.pop %v3720
    %v3724 = vmul.f32 1.0, %v3723
    %v3725 = vmul.f32 %v3722, 1.0614054
    %v3726 = vmul.f32 %v3724, 1.0614054
    %v3727 = vadd.f32 %v3725, -1.4531521
    %v3728 = vadd.f32 %v3726, -1.4531521
    %v3729 = vmul.f32 %v3727, %v3722
    %v3730 = vmul.f32 %v3728, %v3724
    %v3731 = vadd.f32 %v3729, 1.4214138
    %v3732 = vadd.f32 %v3730, 1.4214138
    %v3733 = vmul.f32 %v3731, %v3722
    %v3734 = vmul.f32 %v3732, %v3724
    %v3735 = vadd.f32 %v3733, -0.28449672
    %v3736 = vadd.f32 %v3734, -0.28449672
    %v3737 = vmul.f32 %v3735, %v3722
    %v3738 = vmul.f32 %v3736, %v3724
    %v3739 = vadd.f32 %v3737, 0.2548296
    %v3740 = vadd.f32 %v3738, 0.2548296
    %v3741 = vmul.f32 %v3739, %v3722
    %v3742 = vmul.f32 %v3740, %v3724
    %v3743 = vsub.f32 0.0, %v3715
    %v3744 = vsub.f32 0.0, %v3716
    %v3745 = vmul.f32 %v3743, %v3715
    %v3746 = vmul.f32 %v3744, %v3716
    %v3747 = vmul.f32 %v3745, 1.442695
    %v3748 = vpow.pop %v3747
    %v3749 = vmul.f32 %v3746, 1.442695
    %v3750 = vpow.pop %v3749
    %v3751 = vmul.f32 %v3741, %v3748
    %v3752 = vmul.f32 %v3742, %v3750
    %v3753 = vsub.f32 1.0, %v3751
    %v3754 = vsub.f32 1.0, %v3752
    %v3755 = vmul.f32 %v3713, %v3753
    %v3756 = vmul.f32 %v3714, %v3754
    %v3757 = vadd.f32 %v3755, 1.0
    %v3758 = vadd.f32 %v3756, 1.0
    %v3759 = vmul.f32 %v3707, %v3757
    %v3760 = vmul.f32 %v3708, %v3758
    %v3761 = vlaneseq
    %v3762 = vshrl.u32 %v3761, 7
    %v3763 = vsub.s32 3, %v3762
    %v3764 = vrot.slane %v28, %v3763
    %v3766 = vsel %vm1863, %v3759, 0
    %v3769 = vsel %vm1863, %v3760, 0
    %3771 = vmatprep.subr.mxu0 0.0
    %3772 = vmatpush1.msra.mxu0 %v1952
    %3773 = vmatprep.subr.mxu0 0.0
    %3774 = vmatpush1.msra.mxu0 %v1953
    %3775 = vmatprep.subr.mxu0 0.0
    %3776 = vmatpush1.msra.mxu0 %v1954
    %3777 = vmatprep.subr.mxu0 0.0
    %3778 = vmatpush1.msra.mxu0 %v1955
    %3779 = vmatprep.subr.mxu0 0.0
    %3780 = vmatpush1.msra.mxu0 %v1956
    %3781 = vmatprep.subr.mxu0 0.0
    %3782 = vmatpush1.msra.mxu0 %v1957
    %3783 = vmatprep.subr.mxu0 0.0
    %3784 = vmatpush1.msra.mxu0 %v1958
    %3785 = vmatprep.subr.mxu0 0.0
    %3786 = vmatpush1.msra.mxu0 %v1959
    %3787 = vmatprep.subr.mxu0 0.0
    %3788 = vmatpush1.msra.mxu0 0.0
    %3789 = vmatprep.subr.mxu0 0.0
    %3790 = vmatpush1.msra.mxu0 0.0
    %3791 = vmatprep.subr.mxu0 0.0
    %3792 = vmatpush1.msra.mxu0 0.0
    %3793 = vmatprep.subr.mxu0 0.0
    %3794 = vmatpush1.msra.mxu0 0.0
    %3795 = vmatprep.subr.mxu0 0.0
    %3796 = vmatpush1.msra.mxu0 0.0
    %3797 = vmatprep.subr.mxu0 0.0
    %3798 = vmatpush1.msra.mxu0 0.0
    %3799 = vmatprep.subr.mxu0 0.0
    %3800 = vmatpush1.msra.mxu0 0.0
    %3801 = vmatprep.subr.mxu0 0.0
    %3802 = vmatpush1.msra.mxu0 0.0
    %3803 = vmatprep.subr.mxu0 0.0
    %3804 = vmatpush1.msra.mxu0 0.0
    %3805 = vmatprep.subr.mxu0 0.0
    %3806 = vmatpush1.msra.mxu0 0.0
    %3807 = vmatprep.subr.mxu0 0.0
    %3808 = vmatpush1.msra.mxu0 0.0
    %3809 = vmatprep.subr.mxu0 0.0
    %3810 = vmatpush1.msra.mxu0 0.0
    %3811 = vmatprep.subr.mxu0 0.0
    %3812 = vmatpush1.msra.mxu0 0.0
    %3813 = vmatprep.subr.mxu0 0.0
    %3814 = vmatpush1.msra.mxu0 0.0
    %3815 = vmatprep.subr.mxu0 0.0
    %3816 = vmatpush1.msra.mxu0 0.0
    %3817 = vmatprep.subr.mxu0 0.0
    %3818 = vmatpush1.msra.mxu0 0.0
    %3819 = vmatprep.subr.mxu0 0.0
    %3820 = vmatpush1.msra.mxu0 0.0
    %3821 = vmatprep.subr.mxu0 0.0
    %3822 = vmatpush1.msra.mxu0 0.0
    %3823 = vmatprep.subr.mxu0 0.0
    %3824 = vmatpush1.msra.mxu0 0.0
    %3825 = vmatprep.subr.mxu0 0.0
    %3826 = vmatpush1.msra.mxu0 0.0
    %3827 = vmatprep.subr.mxu0 0.0
    %3828 = vmatpush1.msra.mxu0 0.0
    %3829 = vmatprep.subr.mxu0 0.0
    %3830 = vmatpush1.msra.mxu0 0.0
    %3831 = vmatprep.subr.mxu0 0.0
    %3832 = vmatpush1.msra.mxu0 0.0
    %3833 = vmatprep.subr.mxu0 0.0
    %3834 = vmatpush1.msra.mxu0 0.0
    %3835 = vmatprep.mubr.f32.mxu0 0.0
    %3836 = vmatmul.mubr.f32.gmra.mrb[0].mxu0 %v3766
    %v3837 = vpop.f32.mrb[0].mxu0
    %v3838 = vadd.f32 %v3764, %v3837
    %v3839 = vpop.f32.mrb[0].mxu0
    %3840 = vmatprep.mubr.f32.mxu0 0.0
    %3841 = vmatmul.mubr.f32.gmra.mrb[0].mxu0 %v3769
    %v3842 = vpop.f32.mrb[0].mxu0
    %v3843 = vadd.f32 %v3764, %v3842
    %v3844 = vpop.f32.mrb[0].mxu0
    %3845 = vdwg.mxu0
    %v3846 = vadd.f32 %v3838, %v3582
    %v3847 = vadd.f32 %v3843, %v3583
    %v3848 = vsel %vm51, %v3846, 0.0
    %3849 = vadd.xlane.f32.xlu0 %v3848
    %v3850 = vpop.xlane.xlu0 %3849
    %v3851 = vsel %vm51, %v3847, 0.0
    %3852 = vadd.xlane.f32.xlu0 %v3851
    %v3853 = vpop.xlane.xlu0 %3852
    %v3854 = vmul.f32 %v3850, %v58
    %v3855 = vmul.f32 %v3853, %v58
    %v3856 = vsub.f32 %v3846, %v3854
    %v3857 = vsub.f32 %v3847, %v3855
    %v3858 = vmul.f32 %v3856, %v3856
    %v3859 = vmul.f32 %v3857, %v3857
    %v3860 = vsel %vm51, %v3858, 0.0
    %3861 = vadd.xlane.f32.xlu0 %v3860
    %v3862 = vpop.xlane.xlu0 %3861
    %v3863 = vsel %vm51, %v3859, 0.0
    %3864 = vadd.xlane.f32.xlu0 %v3863
    %v3865 = vpop.xlane.xlu0 %3864
    %v3866 = vmul.f32 %v3862, %v58
    %v3867 = vmul.f32 %v3865, %v58
    %v3868 = vadd.f32 %v3866, 1e-06
    %v3869 = vadd.f32 %v3867, 1e-06
    %v3870 = vrsqrt.pop %v3868
    %v3871 = vrsqrt.pop %v3869
    %v3872 = vmul.f32 %v3856, %v3870
    %v3873 = vmul.f32 %v3857, %v3871
    %v3874 = vlaneseq
    %v3875 = vshrl.u32 %v3874, 7
    %v3876 = vsub.s32 0, %v3875
    %v3877 = vrot.slane %v29, %v3876
    %v3878 = vmul.f32 %v3872, %v3877
    %v3879 = vmul.f32 %v3873, %v3877
    %v3880 = vlaneseq
    %v3881 = vshrl.u32 %v3880, 7
    %v3882 = vsub.s32 1, %v3881
    %v3883 = vrot.slane %v29, %v3882
    %v3884 = vadd.f32 %v3878, %v3883
    %v3885 = vadd.f32 %v3879, %v3883
    %3886 = vst.msk [vmem:[#allocation2] sm:$0xff] %vm51, %v3884
    %3887 = vst.msk [vmem:[#allocation2 + $0x8] sm:$0xff] %vm51, %v3885
    // Predicated region
    $region22: #{decoder_forward.1} parent=1 // pred_check
      _
    $region23: #{decoder_forward.1} parent=1 // pred_check_branch
      %3889 = sbr.rel (0) target = $region25
    $region24: #{decoder_forward.1} parent=1 // pred_region
      %s3891 = ssub.s32 256, 256
      %3892 = vsyncadd [#allocation3], %s3891
      %s3893 = sshll.u32 [#allocation2], 4
      %s3894 = int_to_ptr.vmem [resolvable:$true] %s3893
      %3899 = dma.vmem_to_hbm [thread:$0]  %s3894, 256, %s5, [#allocation3], 128, 128, 8
    $region25: #{decoder_forward.1} parent=1 // pred_fallthru
      _
    // Predicated region
    $region26: #{decoder_forward.1} parent=1 // pred_check
      _
    $region27: #{decoder_forward.1} parent=1 // pred_check_branch
      %3901 = sbr.rel (0) target = $region29
    $region28: #{decoder_forward.1} parent=1 // pred_region
      %3902 = dma.done [#allocation3], 256
    $region29: #{decoder_forward.1} parent=1 // pred_fallthru
      _
    %3903 = vsyncpa [#allocation3], 1

</llo_original>
